<compile_context>
chip_gen: v6e
topology: v6e:2x2x1
jax: 0.10.0
libtpu: 0.0.40
codegen_flags: <defaults>
</compile_context>

<pallas_src>
import jax
import jax.numpy as jnp
import numpy as np
from jax.experimental import pallas as pl
from jax.experimental.pallas import tpu as pltpu

NUM_FILTERS = 600   # nn.Conv2d(1, 600, ...)
FP = 640            # filters lane-padded to a multiple of 128
U_LANE = 128        # output lane-padding granularity
NEG = -1.0e30       # additive mask: ReLU(anything + NEG) == 0


def _fusion_kernel(x_ref, pe_ref, w_ref, bias_ref, wl_ref, wl4_ref, bl_ref, o_ref):
    f32 = jnp.float32
    BtL, _ = x_ref.shape            # (Bt*L, 3*E)
    L, C = bias_ref.shape           # (L, 3*FP)
    Bt = BtL // L

    # One im2col MXU matmul covers all three conv branches and all taps.
    acts = jnp.dot(x_ref[...], w_ref[...], preferred_element_type=f32)   # (Bt*L, 3*FP)
    acts = acts.reshape(Bt, L, C)

    # bias_ref carries the conv biases AND a -1e30 term on length rows outside each
    # branch's valid window, so bias, ReLU and validity masking are one add + max(.,0).
    r = jnp.maximum(acts + bias_ref[...][None], 0.0)                      # (Bt, L, 3*FP)
    feats = jnp.max(r, axis=1)                                            # (Bt, 3*FP)

    # Final linear: conv-feature dot + product-embedding dot + bias.
    out = (jnp.dot(feats.astype(wl_ref.dtype), wl_ref[...], preferred_element_type=f32)
           + jnp.dot(pe_ref[...], wl4_ref[...], preferred_element_type=f32)
           + bl_ref[...])                                                 # (Bt, U_pad)
    o_ref[...] = out.astype(o_ref.dtype)


def decision_embedding_fusion(x, products, params, *, block_b=32,
                              compute_dtype=jnp.bfloat16):
    """x: (B, L, E) f32, products: (B,) int32 -> (B, user_num) f32 (eval-mode forward)."""
    B, L, E = x.shape
    U = params["bl"].shape[-1]
    assert L >= 3, "conv3 requires at least 3 ngram positions"
    assert block_b % 8 == 0

    U_pad = max(U_LANE, ((U + U_LANE - 1) // U_LANE) * U_LANE)
    pad_c = FP - NUM_FILTERS
    f32 = jnp.float32

    # ---- one-time parameter fusion / lane padding (plain JAX glue, not in-kernel) ----
    def pad_panel(w):     # (E, 600) -> (E, FP)
        return jnp.pad(w, ((0, 0), (0, pad_c)))

    zeros_p = jnp.zeros((E, FP), f32)
    # im2col weight matrix: rows are [tap0 ; tap1 ; tap2] of the LHS,
    # columns are [conv1 | conv2 | conv3] (each FP wide).
    w_row0 = jnp.concatenate([pad_panel(params["w1t"]),
                              pad_panel(params["w2t"][0]),
                              pad_panel(params["w3t"][0])], axis=-1)
    w_row1 = jnp.concatenate([zeros_p,
                              pad_panel(params["w2t"][1]),
                              pad_panel(params["w3t"][1])], axis=-1)
    w_row2 = jnp.concatenate([zeros_p, zeros_p,
                              pad_panel(params["w3t"][2])], axis=-1)
    w_im2col = jnp.concatenate([w_row0, w_row1, w_row2], axis=0)          # (3*E, 3*FP)

    def pad_bias(b):      # (1, 600) -> (1, FP)
        return jnp.pad(b.reshape(1, NUM_FILTERS), ((0, 0), (0, pad_c)))

    l_idx = jnp.arange(L)[:, None]
    b1 = jnp.broadcast_to(pad_bias(params["b1"]), (L, FP))
    b2 = jnp.where(l_idx <= L - 2, pad_bias(params["b2"]), NEG)           # mask row L-1
    b3 = jnp.where(l_idx <= L - 3, pad_bias(params["b3"]), NEG)           # mask rows L-2, L-1
    bias_all = jnp.concatenate([b1, b2, b3], axis=-1).astype(f32)         # (L, 3*FP)

    def pad_wl(w):        # (600, U) -> (FP, U_pad); zero pad rows/cols contribute nothing
        return jnp.pad(w, ((0, pad_c), (0, U_pad - U)))

    wl_cat = jnp.concatenate(
        [pad_wl(params["wl1"]), pad_wl(params["wl2"]), pad_wl(params["wl3"])],
        axis=0)                                                           # (3*FP, U_pad)
    wl4 = jnp.pad(params["wl4"], ((0, 0), (0, U_pad - U)))                # (E, U_pad)
    bl = jnp.pad(params["bl"].reshape(1, U), ((0, 0), (0, U_pad - U))).astype(f32)

    # ---- data prep: embedding gather (glue), batch padding, im2col LHS, dtype cast ----
    pe = params["emb"][products]                                          # (B, E)
    # Single-block fallback (Bt == B == B_pad) relies on the "block == full array dim"
    # exemption for the leading dims, so non-multiple-of-8 batches are fine there.
    Bt = B if B <= block_b else block_b
    B_pad = pl.cdiv(B, Bt) * Bt

    xp = jnp.pad(x, ((0, B_pad - B), (0, 0), (0, 0)))
    x0 = xp.reshape(B_pad * L, E)
    # Rolls along the flattened (batch*length) axis: rows that pick up the next batch
    # item (or wrap) are exactly the rows masked by the -1e30 bias, so no leakage.
    x1 = jnp.roll(x0, -1, axis=0)
    x2 = jnp.roll(x0, -2, axis=0)
    lhs = jnp.concatenate([x0, x1, x2], axis=-1).astype(compute_dtype)    # (B_pad*L, 3*E)

    pep = jnp.pad(pe, ((0, B_pad - B), (0, 0))).astype(compute_dtype)
    w_im2col = w_im2col.astype(compute_dtype)
    wl_cat = wl_cat.astype(compute_dtype)
    wl4 = wl4.astype(compute_dtype)

    def const_spec(shape):   # weights resident across grid steps (constant block index)
        return pl.BlockSpec(shape, lambda b: (0, 0))

    out = pl.pallas_call(
        _fusion_kernel,
        out_shape=jax.ShapeDtypeStruct((B_pad, U_pad), jnp.float32),
        grid=(B_pad // Bt,),
        in_specs=[
            pl.BlockSpec((Bt * L, 3 * E), lambda b: (b, 0)),   # im2col LHS tile
            pl.BlockSpec((Bt, E), lambda b: (b, 0)),           # product embeds
            const_spec((3 * E, 3 * FP)),                       # fused conv weights
            const_spec((L, 3 * FP)),                           # conv bias + validity mask
            const_spec((3 * FP, U_pad)),                       # fused linear (conv feats)
            const_spec((E, U_pad)),                            # linear (product embed)
            const_spec((1, U_pad)),                            # linear bias
        ],
        out_specs=pl.BlockSpec((Bt, U_pad), lambda b: (b, 0)),
        compiler_params=pltpu.CompilerParams(
            dimension_semantics=("parallel",)),
    )(lhs, pep, w_im2col, bias_all, wl_cat, wl4, bl)
    return out[:B, :U]


def ref_forward(x, products, params):
    """Pure-JAX reference matching the PyTorch forward (eval mode)."""
    pe = params["emb"][products]                  # (B, E)
    L = x.shape[1]

    def conv_feat(panels, b):
        k = len(panels)
        s = sum(jnp.einsum("ble,ec->blc", x[:, i:L - k + 1 + i, :], panels[i])
                for i in range(k)) + b
        return jnp.max(jax.nn.relu(s), axis=1)    # (B, 600)

    f1 = conv_feat([params["w1t"]], params["b1"])
    f2 = conv_feat([params["w2t"][0], params["w2t"][1]], params["b2"])
    f3 = conv_feat([params["w3t"][0], params["w3t"][1], params["w3t"][2]], params["b3"])
    return (f1 @ params["wl1"] + f2 @ params["wl2"] + f3 @ params["wl3"]
            + pe @ params["wl4"] + params["bl"])


if __name__ == "__main__":
    # Small, module-consistent shapes.  B=20 with block_b=16 exercises the batched tile,
    # the multi-block grid, and the batch-padding path; the default call exercises the
    # bf16 single-block path.
    embedding_dim, user_num, product_num = 32, 16, 10
    B, L = 20, 8

    key = jax.random.PRNGKey(0)
    ks = jax.random.split(key, 12)

    def rn(k, shape, scale):
        return jax.random.normal(k, shape, jnp.float32) * scale

    params = {
        "emb": rn(ks[0], (product_num, embedding_dim), 0.1),
        # conv weights stored pre-transposed as (k, E, 600) panels
        "w1t": rn(ks[1], (embedding_dim, NUM_FILTERS), 0.05),
        "b1":  rn(ks[2], (1, NUM_FILTERS), 0.05),
        "w2t": rn(ks[3], (2, embedding_dim, NUM_FILTERS), 0.05),
        "b2":  rn(ks[4], (1, NUM_FILTERS), 0.05),
        "w3t": rn(ks[5], (3, embedding_dim, NUM_FILTERS), 0.05),
        "b3":  rn(ks[6], (1, NUM_FILTERS), 0.05),
    }
    wl = rn(ks[7], (3 * NUM_FILTERS + embedding_dim, user_num), 0.02)
    params["wl1"] = wl[:NUM_FILTERS]
    params["wl2"] = wl[NUM_FILTERS:2 * NUM_FILTERS]
    params["wl3"] = wl[2 * NUM_FILTERS:3 * NUM_FILTERS]
    params["wl4"] = wl[3 * NUM_FILTERS:]
    params["bl"] = rn(ks[8], (1, user_num), 0.02)

    x = rn(ks[9], (B, L, embedding_dim), 1.0)
    products = jax.random.randint(ks[10], (B,), 0, product_num, dtype=jnp.int32)

    ref = jax.block_until_ready(ref_forward(x, products, params))

    # f32 MXU path, multi-block grid: tight check against the f32 reference.
    out_f32 = jax.block_until_ready(
        decision_embedding_fusion(x, products, params, block_b=16,
                                  compute_dtype=jnp.float32))
    np.testing.assert_allclose(np.asarray(out_f32), np.asarray(ref), rtol=1e-4, atol=1e-4)

    # Default path (bf16 MXU operands, f32 accumulation): looser tolerance.
    out_bf16 = jax.block_until_ready(decision_embedding_fusion(x, products, params))
    np.testing.assert_allclose(np.asarray(out_bf16), np.asarray(ref), rtol=5e-2, atol=5e-2)

    assert out_f32.shape == (B, user_num)
    assert out_bf16.shape == (B, user_num)
    print("KERNEL_OK")
</pallas_src>

<mosaic_0001>
module attributes {stable_mosaic.version = 11 : i64} {
  func.func @_fusion_kernel(%arg0: i32, %arg1: memref<128x96xf32, #tpu.memory_space<vmem>>, %arg2: memref<16x32xf32, #tpu.memory_space<vmem>>, %arg3: memref<96x1920xf32, #tpu.memory_space<vmem>>, %arg4: memref<8x1920xf32, #tpu.memory_space<vmem>>, %arg5: memref<1920x128xf32, #tpu.memory_space<vmem>>, %arg6: memref<32x128xf32, #tpu.memory_space<vmem>>, %arg7: memref<1x128xf32, #tpu.memory_space<vmem>>, %arg8: memref<16x128xf32, #tpu.memory_space<vmem>>) attributes {dimension_semantics = [#tpu.dimension_semantics<parallel>], iteration_bounds = array<i64: 2>, scalar_prefetch = 0 : i64, scratch_operands = 0 : i64, tpu.core_type = #tpu.core_type<tc>, window_params = [{transform_indices = @transform_0, window_bounds = array<i64: 128, 96>}, {transform_indices = @transform_1, window_bounds = array<i64: 16, 32>}, {pipeline_mode = #tpu.pipeline_mode<synchronous>, transform_indices = @transform_2, window_bounds = array<i64: 96, 1920>}, {pipeline_mode = #tpu.pipeline_mode<synchronous>, transform_indices = @transform_3, window_bounds = array<i64: 8, 1920>}, {pipeline_mode = #tpu.pipeline_mode<synchronous>, transform_indices = @transform_4, window_bounds = array<i64: 1920, 128>}, {pipeline_mode = #tpu.pipeline_mode<synchronous>, transform_indices = @transform_5, window_bounds = array<i64: 32, 128>}, {pipeline_mode = #tpu.pipeline_mode<synchronous>, transform_indices = @transform_6, window_bounds = array<i64: 1, 128>}, {transform_indices = @transform_7, window_bounds = array<i64: 16, 128>}]} {
    %c0 = arith.constant 0 : index
    %c0_0 = arith.constant 0 : index
    %0 = vector.load %arg1[%c0, %c0_0] : memref<128x96xf32, #tpu.memory_space<vmem>>, vector<128x96xf32>
    %c0_1 = arith.constant 0 : index
    %c0_2 = arith.constant 0 : index
    %1 = vector.load %arg3[%c0_1, %c0_2] : memref<96x1920xf32, #tpu.memory_space<vmem>>, vector<96x1920xf32>
    %cst = arith.constant dense<0.000000e+00> : vector<128x1920xf32>
    %2 = tpu.matmul %0, %1, %cst {dimension_numbers = #tpu.dot_dimension_numbers<[1], [0], [0], [1], [0, 0, 1, 1], [], []>} : vector<128x96xf32>, vector<96x1920xf32>, vector<128x1920xf32> -> vector<128x1920xf32>
    %3 = vector.shape_cast %2 : vector<128x1920xf32> to vector<16x8x1920xf32>
    %c0_3 = arith.constant 0 : index
    %c0_4 = arith.constant 0 : index
    %4 = vector.load %arg4[%c0_3, %c0_4] : memref<8x1920xf32, #tpu.memory_space<vmem>>, vector<8x1920xf32>
    %5 = vector.shape_cast %4 : vector<8x1920xf32> to vector<1x8x1920xf32>
    %6 = vector.broadcast %5 : vector<1x8x1920xf32> to vector<16x8x1920xf32>
    %7 = arith.addf %3, %6 : vector<16x8x1920xf32>
    %cst_5 = arith.constant 0.000000e+00 : f32
    %8 = vector.broadcast %cst_5 : f32 to vector<16x8x1920xf32>
    %9 = arith.maximumf %7, %8 : vector<16x8x1920xf32>
    %cst_6 = arith.constant dense<0xFF800000> : vector<16x1920xf32>
    %10 = vector.multi_reduction <maximumf>, %9, %cst_6 [1] : vector<16x8x1920xf32> to vector<16x1920xf32>
    %c0_7 = arith.constant 0 : index
    %c0_8 = arith.constant 0 : index
    %11 = vector.load %arg5[%c0_7, %c0_8] : memref<1920x128xf32, #tpu.memory_space<vmem>>, vector<1920x128xf32>
    %cst_9 = arith.constant dense<0.000000e+00> : vector<16x128xf32>
    %12 = tpu.matmul %10, %11, %cst_9 {dimension_numbers = #tpu.dot_dimension_numbers<[1], [0], [0], [1], [0, 0, 1, 1], [], []>} : vector<16x1920xf32>, vector<1920x128xf32>, vector<16x128xf32> -> vector<16x128xf32>
    %c0_10 = arith.constant 0 : index
    %c0_11 = arith.constant 0 : index
    %13 = vector.load %arg2[%c0_10, %c0_11] : memref<16x32xf32, #tpu.memory_space<vmem>>, vector<16x32xf32>
    %c0_12 = arith.constant 0 : index
    %c0_13 = arith.constant 0 : index
    %14 = vector.load %arg6[%c0_12, %c0_13] : memref<32x128xf32, #tpu.memory_space<vmem>>, vector<32x128xf32>
    %cst_14 = arith.constant dense<0.000000e+00> : vector<16x128xf32>
    %15 = tpu.matmul %13, %14, %cst_14 {dimension_numbers = #tpu.dot_dimension_numbers<[1], [0], [0], [1], [0, 0, 1, 1], [], []>} : vector<16x32xf32>, vector<32x128xf32>, vector<16x128xf32> -> vector<16x128xf32>
    %16 = arith.addf %12, %15 : vector<16x128xf32>
    %c0_15 = arith.constant 0 : index
    %c0_16 = arith.constant 0 : index
    %17 = vector.load %arg7[%c0_15, %c0_16] : memref<1x128xf32, #tpu.memory_space<vmem>>, vector<1x128xf32>
    %18 = vector.broadcast %17 : vector<1x128xf32> to vector<16x128xf32>
    %19 = arith.addf %16, %18 : vector<16x128xf32>
    %c0_17 = arith.constant 0 : index
    %c0_18 = arith.constant 0 : index
    %20 = vector.load %arg8[%c0_17, %c0_18] : memref<16x128xf32, #tpu.memory_space<vmem>>, vector<16x128xf32>
    tpu.vector_store %arg8[%c0_17, %c0_18], %19 {strides = array<i32>} : memref<16x128xf32, #tpu.memory_space<vmem>>, vector<16x128xf32>,
    return
  }
  func.func @transform_0(%arg0: i32) -> (i32, i32) {
    %c0_i32 = arith.constant 0 : i32
    %c0_i32_0 = arith.constant 0 : i32
    return %arg0, %c0_i32 : i32, i32
  }
  func.func @transform_1(%arg0: i32) -> (i32, i32) {
    %c0_i32 = arith.constant 0 : i32
    %c0_i32_0 = arith.constant 0 : i32
    return %arg0, %c0_i32 : i32, i32
  }
  func.func @transform_2(%arg0: i32) -> (i32, i32) {
    %c0_i32 = arith.constant 0 : i32
    %c0_i32_0 = arith.constant 0 : i32
    %c0_i32_1 = arith.constant 0 : i32
    return %c0_i32, %c0_i32_0 : i32, i32
  }
  func.func @transform_3(%arg0: i32) -> (i32, i32) {
    %c0_i32 = arith.constant 0 : i32
    %c0_i32_0 = arith.constant 0 : i32
    %c0_i32_1 = arith.constant 0 : i32
    return %c0_i32, %c0_i32_0 : i32, i32
  }
  func.func @transform_4(%arg0: i32) -> (i32, i32) {
    %c0_i32 = arith.constant 0 : i32
    %c0_i32_0 = arith.constant 0 : i32
    %c0_i32_1 = arith.constant 0 : i32
    return %c0_i32, %c0_i32_0 : i32, i32
  }
  func.func @transform_5(%arg0: i32) -> (i32, i32) {
    %c0_i32 = arith.constant 0 : i32
    %c0_i32_0 = arith.constant 0 : i32
    %c0_i32_1 = arith.constant 0 : i32
    return %c0_i32, %c0_i32_0 : i32, i32
  }
  func.func @transform_6(%arg0: i32) -> (i32, i32) {
    %c0_i32 = arith.constant 0 : i32
    %c0_i32_0 = arith.constant 0 : i32
    %c0_i32_1 = arith.constant 0 : i32
    return %c0_i32, %c0_i32_0 : i32, i32
  }
  func.func @transform_7(%arg0: i32) -> (i32, i32) {
    %c0_i32 = arith.constant 0 : i32
    %c0_i32_0 = arith.constant 0 : i32
    return %arg0, %c0_i32 : i32, i32
  }
}

</mosaic_0001>

<llo_original>
// kernel: tpu_custom_call.1
$region0: #{tpu_custom_call.1}
  #allocation0 [shape = 'u32[]', space=smem, size = 0x4, offset = 0x4, fixed_abs, tag = 'smem constant byte address 0x4 - core index']
  #allocation1 [shape = 'u32[144,128]{1,0:T(1,128)}', space=vmem, size = 0x12000, scoped, tag = 'internal scratch']
  %s0 = inlined_call_operand.vmem [shape: f32[256,96], index: 0, kind: input, shape index: {}]
  %s1 = inlined_call_operand.vmem [shape: f32[32,32], index: 1, kind: input, shape index: {}]
  %s2 = inlined_call_operand.hbm [shape: f32[96,1920], index: 2, kind: input, shape index: {}]
  %s3 = inlined_call_operand.vmem [shape: f32[8,1920], index: 3, kind: input, shape index: {}]
  %s4 = inlined_call_operand.hbm [shape: f32[1920,128], index: 4, kind: input, shape index: {}]
  %s5 = inlined_call_operand.vmem [shape: f32[32,128], index: 5, kind: input, shape index: {}]
  %s6 = inlined_call_operand.vmem [shape: f32[1,128], index: 6, kind: input, shape index: {}]
  %s7 = inlined_call_operand.hbm [shape: f32[32,128], index: 7, kind: output, shape index: {}]
  %s8 = sld [smem:[#allocation0]]
  $region69: #{tpu_custom_call.1} parent=0
    _
  %s10 = ssub.s32 1, %s8
  %s11 = scalar_select 0, %s10, %s8
  $region1: #{tpu_custom_call.1} parent=0
    #allocation2 [shape = 'u8[737280]{0}', space=vmem, size = 0xb4000, scoped, tag = 'input window, operand 2, single buffered']
    #allocation3 [shape = 's32[2]{0}', space=sflag, size = 0x8, scoped, tag = 'scoped memory for tpu_custom_call.1']
    #allocation4 [shape = 's32[2]{0}', space=sflag, size = 0x8, scoped, tag = 'scoped memory for tpu_custom_call.1']
    #allocation5 [shape = 'u8[983040]{0}', space=vmem, size = 0xf0000, scoped, tag = 'input window, operand 4, single buffered']
    #allocation6 [shape = 's32[1]{0}', space=sflag, size = 0x4, scoped, tag = 'scoped memory for tpu_custom_call.1']
    #allocation7 [shape = 'u8[16384]{0}', space=vmem, size = 0x4000, scoped, tag = 'output window, operand 0']
    %12 = vsyncpa [#allocation3], 0
    %13 = vsyncpa [#allocation6], 0
    %14 = vsyncpa [#allocation4], 0
    %s15 = scalar_lea.sflag [#allocation4], 1
    %16 = vsyncpa %s15, 0
    loop: start=0, step=1, limit=4
    $region2: #{tpu_custom_call.1} parent=1 // loop_pre_header
      _
    $region3: #{tpu_custom_call.1} parent=1 // loop_header
      %s18 = sphi 0, %s22
      %p19 = scmp.ge.s32.totalorder %s18, 4
      %s28 = sphi 0, %s30
      %s31 = sphi 0, %s28
      %s32 = sphi 0, %s31
      %s48 = sphi 0, %s32
      %s54 = sphi 0, %s56
      %s57 = sphi 0, %s54
      %s58 = sphi 0, %s57
      %s74 = sphi 0, %s58
      %s78 = sphi 0, %s78
      %s80 = sphi 0, %s78
      %s81 = sphi 0, %s80
      %s95 = sphi 0, %s81
      %s99 = sphi 0, %s99
      %s101 = sphi 0, %s99
      %s102 = sphi 0, %s101
      %s116 = sphi 0, %s102
      %s120 = sphi 0, %s120
      %s122 = sphi 0, %s120
      %s123 = sphi 0, %s122
      %s137 = sphi 0, %s123
      %s141 = sphi 0, %s141
      %s143 = sphi 0, %s141
      %s144 = sphi 0, %s143
      %s158 = sphi 0, %s144
      %s162 = sphi 0, %s162
      %s164 = sphi 0, %s162
      %s165 = sphi 0, %s164
      %s179 = sphi 0, %s165
      %s185 = sphi 0, %s187
      %s188 = sphi 0, %s185
      %s189 = sphi 0, %s188
      %s205 = sphi 0, %s189
    $region4: #{tpu_custom_call.1} parent=1 // loop_header_branch
      %21 = sbr.rel (%p19) target = $region8
    $region5: #{tpu_custom_call.1} parent=1 // loop_body
      %s23 = ssub.s32 %s18, 1
      %s24 = ssub.s32 %s18, 2
      %s25 = sadd.s32 %s18, 1
      %s26 = ssub.s32 %s18, %s25
      %p27 = scmp.eq.s32.totalorder %s26, 0
      %s29 = sadd.s32 %s28, 1
      %s30 = scalar_select %p27, %s28, %s29
      %p33 = pneg %p27
      %p34 = scmp.eq.s32.totalorder %s18, 1
      %p35 = por %p33, %p34
      %p36 = scmp.ne.s32.totalorder %s28, %s31
      %p37 = scmp.eq.s32.totalorder %s18, 0
      %p38 = por %p36, %p37
      %p39 = scmp.ne.s32.totalorder %s28, %s31
      %p40 = scmp.eq.s32.totalorder %s23, 1
      %p41 = por %p39, %p40
      %p42 = scmp.ne.s32.totalorder %s31, %s32
      %p43 = scmp.eq.s32.totalorder %s23, 0
      %p44 = por %p42, %p43
      %p45 = scmp.ne.s32.totalorder %s31, %s32
      %p46 = scmp.eq.s32.totalorder %s24, 1
      %p47 = por %p45, %p46
      %p49 = scmp.ne.s32.totalorder %s32, %s48
      %p50 = scmp.eq.s32.totalorder %s24, 0
      %p51 = por %p49, %p50
      %s52 = ssub.s32 %s18, %s25
      %p53 = scmp.eq.s32.totalorder %s52, 0
      %s55 = sadd.s32 %s54, 1
      %s56 = scalar_select %p53, %s54, %s55
      %p59 = pneg %p53
      %p60 = scmp.eq.s32.totalorder %s18, 1
      %p61 = por %p59, %p60
      %p62 = scmp.ne.s32.totalorder %s54, %s57
      %p63 = scmp.eq.s32.totalorder %s18, 0
      %p64 = por %p62, %p63
      %p65 = scmp.ne.s32.totalorder %s54, %s57
      %p66 = scmp.eq.s32.totalorder %s23, 1
      %p67 = por %p65, %p66
      %p68 = scmp.ne.s32.totalorder %s57, %s58
      %p69 = scmp.eq.s32.totalorder %s23, 0
      %p70 = por %p68, %p69
      %p71 = scmp.ne.s32.totalorder %s57, %s58
      %p72 = scmp.eq.s32.totalorder %s24, 1
      %p73 = por %p71, %p72
      %p75 = scmp.ne.s32.totalorder %s58, %s74
      %p76 = scmp.eq.s32.totalorder %s24, 0
      %p77 = por %p75, %p76
      %s79 = sadd.s32 %s78, 1
      %p82 = scmp.eq.s32.totalorder %s18, 1
      %p83 = scmp.ne.s32.totalorder %s78, %s80
      %p84 = scmp.eq.s32.totalorder %s18, 0
      %p85 = por %p83, %p84
      %p86 = scmp.ne.s32.totalorder %s78, %s80
      %p87 = scmp.eq.s32.totalorder %s23, 1
      %p88 = por %p86, %p87
      %p89 = scmp.ne.s32.totalorder %s80, %s81
      %p90 = scmp.eq.s32.totalorder %s23, 0
      %p91 = por %p89, %p90
      %p92 = scmp.ne.s32.totalorder %s80, %s81
      %p93 = scmp.eq.s32.totalorder %s24, 1
      %p94 = por %p92, %p93
      %p96 = scmp.ne.s32.totalorder %s81, %s95
      %p97 = scmp.eq.s32.totalorder %s24, 0
      %p98 = por %p96, %p97
      %s100 = sadd.s32 %s99, 1
      %p103 = scmp.eq.s32.totalorder %s18, 1
      %p104 = scmp.ne.s32.totalorder %s99, %s101
      %p105 = scmp.eq.s32.totalorder %s18, 0
      %p106 = por %p104, %p105
      %p107 = scmp.ne.s32.totalorder %s99, %s101
      %p108 = scmp.eq.s32.totalorder %s23, 1
      %p109 = por %p107, %p108
      %p110 = scmp.ne.s32.totalorder %s101, %s102
      %p111 = scmp.eq.s32.totalorder %s23, 0
      %p112 = por %p110, %p111
      %p113 = scmp.ne.s32.totalorder %s101, %s102
      %p114 = scmp.eq.s32.totalorder %s24, 1
      %p115 = por %p113, %p114
      %p117 = scmp.ne.s32.totalorder %s102, %s116
      %p118 = scmp.eq.s32.totalorder %s24, 0
      %p119 = por %p117, %p118
      %s121 = sadd.s32 %s120, 1
      %p124 = scmp.eq.s32.totalorder %s18, 1
      %p125 = scmp.ne.s32.totalorder %s120, %s122
      %p126 = scmp.eq.s32.totalorder %s18, 0
      %p127 = por %p125, %p126
      %p128 = scmp.ne.s32.totalorder %s120, %s122
      %p129 = scmp.eq.s32.totalorder %s23, 1
      %p130 = por %p128, %p129
      %p131 = scmp.ne.s32.totalorder %s122, %s123
      %p132 = scmp.eq.s32.totalorder %s23, 0
      %p133 = por %p131, %p132
      %p134 = scmp.ne.s32.totalorder %s122, %s123
      %p135 = scmp.eq.s32.totalorder %s24, 1
      %p136 = por %p134, %p135
      %p138 = scmp.ne.s32.totalorder %s123, %s137
      %p139 = scmp.eq.s32.totalorder %s24, 0
      %p140 = por %p138, %p139
      %s142 = sadd.s32 %s141, 1
      %p145 = scmp.eq.s32.totalorder %s18, 1
      %p146 = scmp.ne.s32.totalorder %s141, %s143
      %p147 = scmp.eq.s32.totalorder %s18, 0
      %p148 = por %p146, %p147
      %p149 = scmp.ne.s32.totalorder %s141, %s143
      %p150 = scmp.eq.s32.totalorder %s23, 1
      %p151 = por %p149, %p150
      %p152 = scmp.ne.s32.totalorder %s143, %s144
      %p153 = scmp.eq.s32.totalorder %s23, 0
      %p154 = por %p152, %p153
      %p155 = scmp.ne.s32.totalorder %s143, %s144
      %p156 = scmp.eq.s32.totalorder %s24, 1
      %p157 = por %p155, %p156
      %p159 = scmp.ne.s32.totalorder %s144, %s158
      %p160 = scmp.eq.s32.totalorder %s24, 0
      %p161 = por %p159, %p160
      %s163 = sadd.s32 %s162, 1
      %p166 = scmp.eq.s32.totalorder %s18, 1
      %p167 = scmp.ne.s32.totalorder %s162, %s164
      %p168 = scmp.eq.s32.totalorder %s18, 0
      %p169 = por %p167, %p168
      %p170 = scmp.ne.s32.totalorder %s162, %s164
      %p171 = scmp.eq.s32.totalorder %s23, 1
      %p172 = por %p170, %p171
      %p173 = scmp.ne.s32.totalorder %s164, %s165
      %p174 = scmp.eq.s32.totalorder %s23, 0
      %p175 = por %p173, %p174
      %p176 = scmp.ne.s32.totalorder %s164, %s165
      %p177 = scmp.eq.s32.totalorder %s24, 1
      %p178 = por %p176, %p177
      %p180 = scmp.ne.s32.totalorder %s165, %s179
      %p181 = scmp.eq.s32.totalorder %s24, 0
      %p182 = por %p180, %p181
      %s183 = ssub.s32 %s18, %s25
      %p184 = scmp.eq.s32.totalorder %s183, 0
      %s186 = sadd.s32 %s185, 1
      %s187 = scalar_select %p184, %s185, %s186
      %p190 = pneg %p184
      %p191 = scmp.eq.s32.totalorder %s18, 1
      %p192 = por %p190, %p191
      %p193 = scmp.ne.s32.totalorder %s185, %s188
      %p194 = scmp.eq.s32.totalorder %s18, 0
      %p195 = por %p193, %p194
      %p196 = scmp.ne.s32.totalorder %s185, %s188
      %p197 = scmp.eq.s32.totalorder %s23, 1
      %p198 = por %p196, %p197
      %p199 = scmp.ne.s32.totalorder %s188, %s189
      %p200 = scmp.eq.s32.totalorder %s23, 0
      %p201 = por %p199, %p200
      %p202 = scmp.ne.s32.totalorder %s188, %s189
      %p203 = scmp.eq.s32.totalorder %s24, 1
      %p204 = por %p202, %p203
      %p206 = scmp.ne.s32.totalorder %s189, %s205
      %p207 = scmp.eq.s32.totalorder %s24, 0
      %p208 = por %p206, %p207
      %p209 = scmp.le.s32.totalorder 1, %s18
      %p210 = scmp.lt.s32.totalorder %s18, 3
      %p211 = pnand %p209, %p210
      %p212 = pneg %p211
      // Predicated region
      $region9: #{tpu_custom_call.1} parent=5 // pred_check
        _
      $region10: #{tpu_custom_call.1} parent=5 // pred_check_branch
        %214 = sbr.rel (%p211) target = $region12
      $region11: #{tpu_custom_call.1} parent=5 // pred_region
        %s215 = ssub.s32 %s18, 1
        // Predicated region
        $region13: #{tpu_custom_call.1} parent=11 // pred_check
          %p216 = pneg %p91
        $region14: #{tpu_custom_call.1} parent=11 // pred_check_branch
          %218 = sbr.rel (%p216) target = $region16
        $region15: #{tpu_custom_call.1} parent=11 // pred_region
          %s220 = ssub.s32 23040, 23040
          %221 = vsyncadd [#allocation3], %s220
          %s222 = sshll.u32 [#allocation2], 4
          %s223 = int_to_ptr.vmem [resolvable:$true] %s222
          %228 = dma.hbm_to_vmem [thread:$0]  %s2, 23040, %s223, [#allocation3], 1920, 1920, 120
        $region16: #{tpu_custom_call.1} parent=11 // pred_fallthru
          _
        // Predicated region
        $region17: #{tpu_custom_call.1} parent=11 // pred_check
          %p229 = pneg %p112
        $region18: #{tpu_custom_call.1} parent=11 // pred_check_branch
          %231 = sbr.rel (%p229) target = $region20
        $region19: #{tpu_custom_call.1} parent=11 // pred_region
          _
        $region20: #{tpu_custom_call.1} parent=11 // pred_fallthru
          _
        // Predicated region
        $region21: #{tpu_custom_call.1} parent=11 // pred_check
          %p232 = pneg %p133
        $region22: #{tpu_custom_call.1} parent=11 // pred_check_branch
          %234 = sbr.rel (%p232) target = $region24
        $region23: #{tpu_custom_call.1} parent=11 // pred_region
          %s236 = ssub.s32 30720, 30720
          %237 = vsyncadd [#allocation6], %s236
          %s238 = sshll.u32 [#allocation5], 4
          %s239 = int_to_ptr.vmem [resolvable:$true] %s238
          %244 = dma.hbm_to_vmem [thread:$0]  %s4, 30720, %s239, [#allocation6], 128, 128, 8
        $region24: #{tpu_custom_call.1} parent=11 // pred_fallthru
          _
        // Predicated region
        $region25: #{tpu_custom_call.1} parent=11 // pred_check
          %p245 = pneg %p154
        $region26: #{tpu_custom_call.1} parent=11 // pred_check_branch
          %247 = sbr.rel (%p245) target = $region28
        $region27: #{tpu_custom_call.1} parent=11 // pred_region
          _
        $region28: #{tpu_custom_call.1} parent=11 // pred_fallthru
          _
        // Predicated region
        $region29: #{tpu_custom_call.1} parent=11 // pred_check
          %p248 = pneg %p175
        $region30: #{tpu_custom_call.1} parent=11 // pred_check_branch
          %250 = sbr.rel (%p248) target = $region32
        $region31: #{tpu_custom_call.1} parent=11 // pred_region
          _
        $region32: #{tpu_custom_call.1} parent=11 // pred_fallthru
          _
      $region12: #{tpu_custom_call.1} parent=5 // pred_fallthru
        _
      %p251 = scmp.lt.s32.totalorder %s18, 2
      // Predicated region
      $region33: #{tpu_custom_call.1} parent=5 // pred_check
        %p252 = pneg %p251
      $region34: #{tpu_custom_call.1} parent=5 // pred_check_branch
        %254 = sbr.rel (%p252) target = $region36
      $region35: #{tpu_custom_call.1} parent=5 // pred_region
        // Predicated region
        $region37: #{tpu_custom_call.1} parent=35 // pred_check
          %p255 = pneg %p38
        $region38: #{tpu_custom_call.1} parent=35 // pred_check_branch
          %257 = sbr.rel (%p255) target = $region40
        $region39: #{tpu_custom_call.1} parent=35 // pred_region
          %s258 = smul.u32 16, %s18
          %p259 = scmp.lt.s32.totalorder %s258, 31
          %s260 = scalar_select %p259, %s258, 31
          %s261 = smul.addr %s260, 8
          %s262 = scalar_lea.vmem %s0, %s261
          %s263 = smul.u32 16, %s18
        $region40: #{tpu_custom_call.1} parent=35 // pred_fallthru
          _
        // Predicated region
        $region41: #{tpu_custom_call.1} parent=35 // pred_check
          %p264 = pneg %p64
        $region42: #{tpu_custom_call.1} parent=35 // pred_check_branch
          %266 = sbr.rel (%p264) target = $region44
        $region43: #{tpu_custom_call.1} parent=35 // pred_region
          %s267 = smul.u32 2, %s18
          %p268 = scmp.lt.s32.totalorder %s267, 3
          %s269 = scalar_select %p268, %s267, 3
          %s270 = smul.addr %s269, 8
          %s271 = scalar_lea.vmem %s1, %s270
          %s272 = smul.u32 2, %s18
        $region44: #{tpu_custom_call.1} parent=35 // pred_fallthru
          _
      $region36: #{tpu_custom_call.1} parent=5 // pred_fallthru
        _
      %p273 = scmp.le.s32.totalorder 1, %s18
      %p274 = scmp.lt.s32.totalorder %s18, 3
      %p275 = pnand %p273, %p274
      %p276 = pneg %p275
      // Predicated region
      $region45: #{tpu_custom_call.1} parent=5 // pred_check
        _
      $region46: #{tpu_custom_call.1} parent=5 // pred_check_branch
        %278 = sbr.rel (%p275) target = $region48
      $region47: #{tpu_custom_call.1} parent=5 // pred_region
        %s279 = ssub.s32 %s18, 1
        // Predicated region
        $region49: #{tpu_custom_call.1} parent=47 // pred_check
          %p280 = pneg %p91
        $region50: #{tpu_custom_call.1} parent=47 // pred_check_branch
          %282 = sbr.rel (%p280) target = $region52
        $region51: #{tpu_custom_call.1} parent=47 // pred_region
          %283 = dma.done [#allocation3], 23040
        $region52: #{tpu_custom_call.1} parent=47 // pred_fallthru
          _
        // Predicated region
        $region53: #{tpu_custom_call.1} parent=47 // pred_check
          %p284 = pneg %p133
        $region54: #{tpu_custom_call.1} parent=47 // pred_check_branch
          %286 = sbr.rel (%p284) target = $region56
        $region55: #{tpu_custom_call.1} parent=47 // pred_region
          %287 = dma.done [#allocation6], 30720
        $region56: #{tpu_custom_call.1} parent=47 // pred_fallthru
          _
        %s288 = smul.u32 16, %s23
        %p289 = scmp.lt.s32.totalorder %s288, 31
        %s290 = scalar_select %p289, %s288, 31
        %s291 = smul.addr %s290, 8
        %s292 = scalar_lea.vmem %s0, %s291
        %p293 = pneg %p44
        %p294 = pneg %p41
        %s295 = smul.u32 2, %s23
        %p296 = scmp.lt.s32.totalorder %s295, 3
        %s297 = scalar_select %p296, %s295, 3
        %s298 = smul.addr %s297, 8
        %s299 = scalar_lea.vmem %s1, %s298
        %p300 = pneg %p70
        %p301 = pneg %p67
        %p302 = pneg %p91
        %p303 = pneg %p88
        %p304 = pneg %p112
        %p305 = pneg %p109
        %p306 = pneg %p133
        %p307 = pneg %p130
        %p308 = pneg %p154
        %p309 = pneg %p151
        %p310 = pneg %p175
        %p311 = pneg %p172
        %p312 = pneg %p201
        %p313 = pneg %p198
        %s314 = sand.u32 %s188, 1
        %s315 = scalar_lea.sflag [#allocation4], %s314
        %s316 = sand.u32 %s188, 1
        %s317 = smul.addr %s316, 16
        %s318 = scalar_lea.vmem [#allocation7], %s317
        %s319 = smul.u32 16, %s23
        %p320 = scmp.lt.s32.totalorder %s319, 31
        %s321 = scalar_select %p320, %s319, 31
        %s322 = smul.addr %s321, 8
        %s323 = scalar_lea.vmem %s0, %s322
        %s324 = smul.u32 16, %s23
        %s325 = smul.u32 2, %s23
        %p326 = scmp.lt.s32.totalorder %s325, 3
        %s327 = scalar_select %p326, %s325, 3
        %s328 = smul.addr %s327, 8
        %s329 = scalar_lea.vmem %s1, %s328
        %s330 = smul.u32 2, %s23
        %s331 = smul.u32 2, %s23
        %v332 = vld [vmem:[%s323] sm:$0xff]
        %v333 = vld [vmem:[%s323 + $0x8] sm:$0xff]
        %v334 = vld [vmem:[%s323 + $0x10] sm:$0xff]
        %v335 = vld [vmem:[%s323 + $0x18] sm:$0xff]
        %v336 = vld [vmem:[%s323 + $0x20] sm:$0xff]
        %v337 = vld [vmem:[%s323 + $0x28] sm:$0xff]
        %v338 = vld [vmem:[%s323 + $0x30] sm:$0xff]
        %v339 = vld [vmem:[%s323 + $0x38] sm:$0xff]
        %v340 = vld [vmem:[%s323 + $0x40] sm:$0xff]
        %v341 = vld [vmem:[%s323 + $0x48] sm:$0xff]
        %v342 = vld [vmem:[%s323 + $0x50] sm:$0xff]
        %v343 = vld [vmem:[%s323 + $0x58] sm:$0xff]
        %v344 = vld [vmem:[%s323 + $0x60] sm:$0xff]
        %v345 = vld [vmem:[%s323 + $0x68] sm:$0xff]
        %v346 = vld [vmem:[%s323 + $0x70] sm:$0xff]
        %v347 = vld [vmem:[%s323 + $0x78] sm:$0xff]
        %v348 = vld [vmem:[#allocation2] sm:$0xff]
        %v349 = vld [vmem:[#allocation2 + $0x8] sm:$0xff]
        %v350 = vld [vmem:[#allocation2 + $0x10] sm:$0xff]
        %v351 = vld [vmem:[#allocation2 + $0x18] sm:$0xff]
        %v352 = vld [vmem:[#allocation2 + $0x20] sm:$0xff]
        %v353 = vld [vmem:[#allocation2 + $0x28] sm:$0xff]
        %v354 = vld [vmem:[#allocation2 + $0x30] sm:$0xff]
        %v355 = vld [vmem:[#allocation2 + $0x38] sm:$0xff]
        %v356 = vld [vmem:[#allocation2 + $0x40] sm:$0xff]
        %v357 = vld [vmem:[#allocation2 + $0x48] sm:$0xff]
        %v358 = vld [vmem:[#allocation2 + $0x50] sm:$0xff]
        %v359 = vld [vmem:[#allocation2 + $0x58] sm:$0xff]
        %v360 = vld [vmem:[#allocation2 + $0x60] sm:$0xff]
        %v361 = vld [vmem:[#allocation2 + $0x68] sm:$0xff]
        %v362 = vld [vmem:[#allocation2 + $0x70] sm:$0xff]
        %v363 = vld [vmem:[#allocation2 + $0x78] sm:$0xff]
        %v364 = vld [vmem:[#allocation2 + $0x80] sm:$0xff]
        %v365 = vld [vmem:[#allocation2 + $0x88] sm:$0xff]
        %v366 = vld [vmem:[#allocation2 + $0x90] sm:$0xff]
        %v367 = vld [vmem:[#allocation2 + $0x98] sm:$0xff]
        %v368 = vld [vmem:[#allocation2 + $0xa0] sm:$0xff]
        %v369 = vld [vmem:[#allocation2 + $0xa8] sm:$0xff]
        %v370 = vld [vmem:[#allocation2 + $0xb0] sm:$0xff]
        %v371 = vld [vmem:[#allocation2 + $0xb8] sm:$0xff]
        %v372 = vld [vmem:[#allocation2 + $0xc0] sm:$0xff]
        %v373 = vld [vmem:[#allocation2 + $0xc8] sm:$0xff]
        %v374 = vld [vmem:[#allocation2 + $0xd0] sm:$0xff]
        %v375 = vld [vmem:[#allocation2 + $0xd8] sm:$0xff]
        %v376 = vld [vmem:[#allocation2 + $0xe0] sm:$0xff]
        %v377 = vld [vmem:[#allocation2 + $0xe8] sm:$0xff]
        %v378 = vld [vmem:[#allocation2 + $0xf0] sm:$0xff]
        %v379 = vld [vmem:[#allocation2 + $0xf8] sm:$0xff]
        %v380 = vld [vmem:[#allocation2 + $0x100] sm:$0xff]
        %v381 = vld [vmem:[#allocation2 + $0x108] sm:$0xff]
        %v382 = vld [vmem:[#allocation2 + $0x110] sm:$0xff]
        %v383 = vld [vmem:[#allocation2 + $0x118] sm:$0xff]
        %v384 = vld [vmem:[#allocation2 + $0x120] sm:$0xff]
        %v385 = vld [vmem:[#allocation2 + $0x128] sm:$0xff]
        %v386 = vld [vmem:[#allocation2 + $0x130] sm:$0xff]
        %v387 = vld [vmem:[#allocation2 + $0x138] sm:$0xff]
        %v388 = vld [vmem:[#allocation2 + $0x140] sm:$0xff]
        %v389 = vld [vmem:[#allocation2 + $0x148] sm:$0xff]
        %v390 = vld [vmem:[#allocation2 + $0x150] sm:$0xff]
        %v391 = vld [vmem:[#allocation2 + $0x158] sm:$0xff]
        %v392 = vld [vmem:[#allocation2 + $0x160] sm:$0xff]
        %v393 = vld [vmem:[#allocation2 + $0x168] sm:$0xff]
        %v394 = vld [vmem:[#allocation2 + $0x170] sm:$0xff]
        %v395 = vld [vmem:[#allocation2 + $0x178] sm:$0xff]
        %v396 = vld [vmem:[#allocation2 + $0x180] sm:$0xff]
        %v397 = vld [vmem:[#allocation2 + $0x188] sm:$0xff]
        %v398 = vld [vmem:[#allocation2 + $0x190] sm:$0xff]
        %v399 = vld [vmem:[#allocation2 + $0x198] sm:$0xff]
        %v400 = vld [vmem:[#allocation2 + $0x1a0] sm:$0xff]
        %v401 = vld [vmem:[#allocation2 + $0x1a8] sm:$0xff]
        %v402 = vld [vmem:[#allocation2 + $0x1b0] sm:$0xff]
        %v403 = vld [vmem:[#allocation2 + $0x1b8] sm:$0xff]
        %v404 = vld [vmem:[#allocation2 + $0x1c0] sm:$0xff]
        %v405 = vld [vmem:[#allocation2 + $0x1c8] sm:$0xff]
        %v406 = vld [vmem:[#allocation2 + $0x1d0] sm:$0xff]
        %v407 = vld [vmem:[#allocation2 + $0x1d8] sm:$0xff]
        %v408 = vld [vmem:[#allocation2 + $0x1e0] sm:$0xff]
        %v409 = vld [vmem:[#allocation2 + $0x1e8] sm:$0xff]
        %v410 = vld [vmem:[#allocation2 + $0x1f0] sm:$0xff]
        %v411 = vld [vmem:[#allocation2 + $0x1f8] sm:$0xff]
        %v412 = vld [vmem:[#allocation2 + $0x200] sm:$0xff]
        %v413 = vld [vmem:[#allocation2 + $0x208] sm:$0xff]
        %v414 = vld [vmem:[#allocation2 + $0x210] sm:$0xff]
        %v415 = vld [vmem:[#allocation2 + $0x218] sm:$0xff]
        %v416 = vld [vmem:[#allocation2 + $0x220] sm:$0xff]
        %v417 = vld [vmem:[#allocation2 + $0x228] sm:$0xff]
        %v418 = vld [vmem:[#allocation2 + $0x230] sm:$0xff]
        %v419 = vld [vmem:[#allocation2 + $0x238] sm:$0xff]
        %v420 = vld [vmem:[#allocation2 + $0x240] sm:$0xff]
        %v421 = vld [vmem:[#allocation2 + $0x248] sm:$0xff]
        %v422 = vld [vmem:[#allocation2 + $0x250] sm:$0xff]
        %v423 = vld [vmem:[#allocation2 + $0x258] sm:$0xff]
        %v424 = vld [vmem:[#allocation2 + $0x260] sm:$0xff]
        %v425 = vld [vmem:[#allocation2 + $0x268] sm:$0xff]
        %v426 = vld [vmem:[#allocation2 + $0x270] sm:$0xff]
        %v427 = vld [vmem:[#allocation2 + $0x278] sm:$0xff]
        %v428 = vld [vmem:[#allocation2 + $0x280] sm:$0xff]
        %v429 = vld [vmem:[#allocation2 + $0x288] sm:$0xff]
        %v430 = vld [vmem:[#allocation2 + $0x290] sm:$0xff]
        %v431 = vld [vmem:[#allocation2 + $0x298] sm:$0xff]
        %v432 = vld [vmem:[#allocation2 + $0x2a0] sm:$0xff]
        %v433 = vld [vmem:[#allocation2 + $0x2a8] sm:$0xff]
        %v434 = vld [vmem:[#allocation2 + $0x2b0] sm:$0xff]
        %v435 = vld [vmem:[#allocation2 + $0x2b8] sm:$0xff]
        %v436 = vld [vmem:[#allocation2 + $0x2c0] sm:$0xff]
        %v437 = vld [vmem:[#allocation2 + $0x2c8] sm:$0xff]
        %v438 = vld [vmem:[#allocation2 + $0x2d0] sm:$0xff]
        %v439 = vld [vmem:[#allocation2 + $0x2d8] sm:$0xff]
        %v440 = vld [vmem:[#allocation2 + $0x2e0] sm:$0xff]
        %v441 = vld [vmem:[#allocation2 + $0x2e8] sm:$0xff]
        %v442 = vld [vmem:[#allocation2 + $0x2f0] sm:$0xff]
        %v443 = vld [vmem:[#allocation2 + $0x2f8] sm:$0xff]
        %v444 = vld [vmem:[#allocation2 + $0x300] sm:$0xff]
        %v445 = vld [vmem:[#allocation2 + $0x308] sm:$0xff]
        %v446 = vld [vmem:[#allocation2 + $0x310] sm:$0xff]
        %v447 = vld [vmem:[#allocation2 + $0x318] sm:$0xff]
        %v448 = vld [vmem:[#allocation2 + $0x320] sm:$0xff]
        %v449 = vld [vmem:[#allocation2 + $0x328] sm:$0xff]
        %v450 = vld [vmem:[#allocation2 + $0x330] sm:$0xff]
        %v451 = vld [vmem:[#allocation2 + $0x338] sm:$0xff]
        %v452 = vld [vmem:[#allocation2 + $0x340] sm:$0xff]
        %v453 = vld [vmem:[#allocation2 + $0x348] sm:$0xff]
        %v454 = vld [vmem:[#allocation2 + $0x350] sm:$0xff]
        %v455 = vld [vmem:[#allocation2 + $0x358] sm:$0xff]
        %v456 = vld [vmem:[#allocation2 + $0x360] sm:$0xff]
        %v457 = vld [vmem:[#allocation2 + $0x368] sm:$0xff]
        %v458 = vld [vmem:[#allocation2 + $0x370] sm:$0xff]
        %v459 = vld [vmem:[#allocation2 + $0x378] sm:$0xff]
        %v460 = vld [vmem:[#allocation2 + $0x380] sm:$0xff]
        %v461 = vld [vmem:[#allocation2 + $0x388] sm:$0xff]
        %v462 = vld [vmem:[#allocation2 + $0x390] sm:$0xff]
        %v463 = vld [vmem:[#allocation2 + $0x398] sm:$0xff]
        %v464 = vld [vmem:[#allocation2 + $0x3a0] sm:$0xff]
        %v465 = vld [vmem:[#allocation2 + $0x3a8] sm:$0xff]
        %v466 = vld [vmem:[#allocation2 + $0x3b0] sm:$0xff]
        %v467 = vld [vmem:[#allocation2 + $0x3b8] sm:$0xff]
        %v468 = vld [vmem:[#allocation2 + $0x3c0] sm:$0xff]
        %v469 = vld [vmem:[#allocation2 + $0x3c8] sm:$0xff]
        %v470 = vld [vmem:[#allocation2 + $0x3d0] sm:$0xff]
        %v471 = vld [vmem:[#allocation2 + $0x3d8] sm:$0xff]
        %v472 = vld [vmem:[#allocation2 + $0x3e0] sm:$0xff]
        %v473 = vld [vmem:[#allocation2 + $0x3e8] sm:$0xff]
        %v474 = vld [vmem:[#allocation2 + $0x3f0] sm:$0xff]
        %v475 = vld [vmem:[#allocation2 + $0x3f8] sm:$0xff]
        %v476 = vld [vmem:[#allocation2 + $0x400] sm:$0xff]
        %v477 = vld [vmem:[#allocation2 + $0x408] sm:$0xff]
        %v478 = vld [vmem:[#allocation2 + $0x410] sm:$0xff]
        %v479 = vld [vmem:[#allocation2 + $0x418] sm:$0xff]
        %v480 = vld [vmem:[#allocation2 + $0x420] sm:$0xff]
        %v481 = vld [vmem:[#allocation2 + $0x428] sm:$0xff]
        %v482 = vld [vmem:[#allocation2 + $0x430] sm:$0xff]
        %v483 = vld [vmem:[#allocation2 + $0x438] sm:$0xff]
        %v484 = vld [vmem:[#allocation2 + $0x440] sm:$0xff]
        %v485 = vld [vmem:[#allocation2 + $0x448] sm:$0xff]
        %v486 = vld [vmem:[#allocation2 + $0x450] sm:$0xff]
        %v487 = vld [vmem:[#allocation2 + $0x458] sm:$0xff]
        %v488 = vld [vmem:[#allocation2 + $0x460] sm:$0xff]
        %v489 = vld [vmem:[#allocation2 + $0x468] sm:$0xff]
        %v490 = vld [vmem:[#allocation2 + $0x470] sm:$0xff]
        %v491 = vld [vmem:[#allocation2 + $0x478] sm:$0xff]
        %v492 = vld [vmem:[#allocation2 + $0x480] sm:$0xff]
        %v493 = vld [vmem:[#allocation2 + $0x488] sm:$0xff]
        %v494 = vld [vmem:[#allocation2 + $0x490] sm:$0xff]
        %v495 = vld [vmem:[#allocation2 + $0x498] sm:$0xff]
        %v496 = vld [vmem:[#allocation2 + $0x4a0] sm:$0xff]
        %v497 = vld [vmem:[#allocation2 + $0x4a8] sm:$0xff]
        %v498 = vld [vmem:[#allocation2 + $0x4b0] sm:$0xff]
        %v499 = vld [vmem:[#allocation2 + $0x4b8] sm:$0xff]
        %v500 = vld [vmem:[#allocation2 + $0x4c0] sm:$0xff]
        %v501 = vld [vmem:[#allocation2 + $0x4c8] sm:$0xff]
        %v502 = vld [vmem:[#allocation2 + $0x4d0] sm:$0xff]
        %v503 = vld [vmem:[#allocation2 + $0x4d8] sm:$0xff]
        %v504 = vld [vmem:[#allocation2 + $0x4e0] sm:$0xff]
        %v505 = vld [vmem:[#allocation2 + $0x4e8] sm:$0xff]
        %v506 = vld [vmem:[#allocation2 + $0x4f0] sm:$0xff]
        %v507 = vld [vmem:[#allocation2 + $0x4f8] sm:$0xff]
        %v508 = vld [vmem:[#allocation2 + $0x500] sm:$0xff]
        %v509 = vld [vmem:[#allocation2 + $0x508] sm:$0xff]
        %v510 = vld [vmem:[#allocation2 + $0x510] sm:$0xff]
        %v511 = vld [vmem:[#allocation2 + $0x518] sm:$0xff]
        %v512 = vld [vmem:[#allocation2 + $0x520] sm:$0xff]
        %v513 = vld [vmem:[#allocation2 + $0x528] sm:$0xff]
        %v514 = vld [vmem:[#allocation2 + $0x530] sm:$0xff]
        %v515 = vld [vmem:[#allocation2 + $0x538] sm:$0xff]
        %v516 = vld [vmem:[#allocation2 + $0x540] sm:$0xff]
        %v517 = vld [vmem:[#allocation2 + $0x548] sm:$0xff]
        %v518 = vld [vmem:[#allocation2 + $0x550] sm:$0xff]
        %v519 = vld [vmem:[#allocation2 + $0x558] sm:$0xff]
        %v520 = vld [vmem:[#allocation2 + $0x560] sm:$0xff]
        %v521 = vld [vmem:[#allocation2 + $0x568] sm:$0xff]
        %v522 = vld [vmem:[#allocation2 + $0x570] sm:$0xff]
        %v523 = vld [vmem:[#allocation2 + $0x578] sm:$0xff]
        %v524 = vld [vmem:[#allocation2 + $0x580] sm:$0xff]
        %v525 = vld [vmem:[#allocation2 + $0x588] sm:$0xff]
        %v526 = vld [vmem:[#allocation2 + $0x590] sm:$0xff]
        %v527 = vld [vmem:[#allocation2 + $0x598] sm:$0xff]
        %vm528 = vcmask 785408
        %v530 = vsel %vm528, %v332, 0
        %v533 = vsel %vm528, %v333, 0
        %v536 = vsel %vm528, %v334, 0
        %v539 = vsel %vm528, %v335, 0
        %v542 = vsel %vm528, %v336, 0
        %v545 = vsel %vm528, %v337, 0
        %v548 = vsel %vm528, %v338, 0
        %v551 = vsel %vm528, %v339, 0
        %v554 = vsel %vm528, %v340, 0
        %v557 = vsel %vm528, %v341, 0
        %v560 = vsel %vm528, %v342, 0
        %v563 = vsel %vm528, %v343, 0
        %v566 = vsel %vm528, %v344, 0
        %v569 = vsel %vm528, %v345, 0
        %v572 = vsel %vm528, %v346, 0
        %v575 = vsel %vm528, %v347, 0
        %577 = vmatprep.subr.mxu0 0.0
        %578 = vmatpush1.msra.mxu0 0.0
        %579 = vmatprep.subr.mxu0 0.0
        %580 = vmatpush1.msra.mxu0 0.0
        %581 = vmatprep.subr.mxu0 0.0
        %582 = vmatpush1.msra.mxu0 0.0
        %583 = vmatprep.subr.mxu0 0.0
        %584 = vmatpush1.msra.mxu0 0.0
        %585 = vmatprep.subr.mxu0 %v514
        %586 = vmatpush1.msra.mxu0 %v513
        %587 = vmatprep.subr.mxu0 %v499
        %588 = vmatpush1.msra.mxu0 %v498
        %589 = vmatprep.subr.mxu0 %v484
        %590 = vmatpush1.msra.mxu0 %v483
        %591 = vmatprep.subr.mxu0 %v469
        %592 = vmatpush1.msra.mxu0 %v468
        %593 = vmatprep.subr.mxu0 %v454
        %594 = vmatpush1.msra.mxu0 %v453
        %595 = vmatprep.subr.mxu0 %v439
        %596 = vmatpush1.msra.mxu0 %v438
        %597 = vmatprep.subr.mxu0 %v424
        %598 = vmatpush1.msra.mxu0 %v423
        %599 = vmatprep.subr.mxu0 %v409
        %600 = vmatpush1.msra.mxu0 %v408
        %601 = vmatprep.subr.mxu0 %v394
        %602 = vmatpush1.msra.mxu0 %v393
        %603 = vmatprep.subr.mxu0 %v379
        %604 = vmatpush1.msra.mxu0 %v378
        %605 = vmatprep.subr.mxu0 %v364
        %606 = vmatpush1.msra.mxu0 %v363
        %607 = vmatprep.subr.mxu0 %v349
        %608 = vmatpush1.msra.mxu0 %v348
        %609 = vmatprep.subr.mxu0 0.0
        %610 = vmatpush2.msra.mxu0 0.0
        %611 = vmatprep.subr.mxu0 0.0
        %612 = vmatpush2.msra.mxu0 0.0
        %613 = vmatprep.subr.mxu0 0.0
        %614 = vmatpush2.msra.mxu0 0.0
        %615 = vmatprep.subr.mxu0 0.0
        %616 = vmatpush2.msra.mxu0 0.0
        %617 = vmatprep.subr.mxu0 0.0
        %618 = vmatpush2.msra.mxu0 0.0
        %619 = vmatprep.subr.mxu0 0.0
        %620 = vmatpush2.msra.mxu0 0.0
        %621 = vmatprep.subr.mxu0 0.0
        %622 = vmatpush2.msra.mxu0 0.0
        %623 = vmatprep.subr.mxu0 0.0
        %624 = vmatpush2.msra.mxu0 0.0
        %625 = vmatprep.subr.mxu0 0.0
        %626 = vmatpush2.msra.mxu0 0.0
        %627 = vmatprep.subr.mxu0 0.0
        %628 = vmatpush2.msra.mxu0 0.0
        %629 = vmatprep.subr.mxu0 0.0
        %630 = vmatpush2.msra.mxu0 0.0
        %631 = vmatprep.subr.mxu0 0.0
        %632 = vmatpush2.msra.mxu0 0.0
        %633 = vmatprep.subr.mxu0 0.0
        %634 = vmatpush2.msra.mxu0 0.0
        %635 = vmatprep.subr.mxu0 0.0
        %636 = vmatpush2.msra.mxu0 0.0
        %637 = vmatprep.subr.mxu0 0.0
        %638 = vmatpush2.msra.mxu0 0.0
        %639 = vmatprep.subr.mxu0 0.0
        %640 = vmatpush2.msra.mxu0 0.0
        %641 = vmatprep.mubr.f32.mxu0 0.0
        %642 = vmatmul.mubr.f32.gmra.mxu0 %v530
        %v643 = vpop.f32.mrf.mxu0
        %v644 = vadd.f32 0.0, %v643
        %v645 = vpop.f32.mrf.mxu0
        %v646 = vadd.f32 0.0, %v645
        %647 = vmatprep.mubr.f32.mxu0 0.0
        %648 = vmatmul.mubr.f32.gmra.mxu0 %v533
        %v649 = vpop.f32.mrf.mxu0
        %v650 = vadd.f32 0.0, %v649
        %v651 = vpop.f32.mrf.mxu0
        %v652 = vadd.f32 0.0, %v651
        %653 = vmatprep.mubr.f32.mxu0 0.0
        %654 = vmatmul.mubr.f32.gmra.mxu0 %v536
        %v655 = vpop.f32.mrf.mxu0
        %v656 = vadd.f32 0.0, %v655
        %v657 = vpop.f32.mrf.mxu0
        %v658 = vadd.f32 0.0, %v657
        %659 = vmatprep.mubr.f32.mxu0 0.0
        %660 = vmatmul.mubr.f32.gmra.mxu0 %v539
        %v661 = vpop.f32.mrf.mxu0
        %v662 = vadd.f32 0.0, %v661
        %v663 = vpop.f32.mrf.mxu0
        %v664 = vadd.f32 0.0, %v663
        %665 = vmatprep.mubr.f32.mxu0 0.0
        %666 = vmatmul.mubr.f32.gmra.mxu0 %v542
        %v667 = vpop.f32.mrf.mxu0
        %v668 = vadd.f32 0.0, %v667
        %v669 = vpop.f32.mrf.mxu0
        %v670 = vadd.f32 0.0, %v669
        %671 = vmatprep.mubr.f32.mxu0 0.0
        %672 = vmatmul.mubr.f32.gmra.mxu0 %v545
        %v673 = vpop.f32.mrf.mxu0
        %v674 = vadd.f32 0.0, %v673
        %v675 = vpop.f32.mrf.mxu0
        %v676 = vadd.f32 0.0, %v675
        %677 = vmatprep.mubr.f32.mxu0 0.0
        %678 = vmatmul.mubr.f32.gmra.mxu0 %v548
        %v679 = vpop.f32.mrf.mxu0
        %v680 = vadd.f32 0.0, %v679
        %v681 = vpop.f32.mrf.mxu0
        %v682 = vadd.f32 0.0, %v681
        %683 = vmatprep.mubr.f32.mxu0 0.0
        %684 = vmatmul.mubr.f32.gmra.mxu0 %v551
        %v685 = vpop.f32.mrf.mxu0
        %v686 = vadd.f32 0.0, %v685
        %v687 = vpop.f32.mrf.mxu0
        %v688 = vadd.f32 0.0, %v687
        %689 = vmatprep.mubr.f32.mxu0 0.0
        %690 = vmatmul.mubr.f32.gmra.mxu0 %v554
        %v691 = vpop.f32.mrf.mxu0
        %v692 = vadd.f32 0.0, %v691
        %v693 = vpop.f32.mrf.mxu0
        %v694 = vadd.f32 0.0, %v693
        %695 = vmatprep.mubr.f32.mxu0 0.0
        %696 = vmatmul.mubr.f32.gmra.mxu0 %v557
        %v697 = vpop.f32.mrf.mxu0
        %v698 = vadd.f32 0.0, %v697
        %v699 = vpop.f32.mrf.mxu0
        %v700 = vadd.f32 0.0, %v699
        %701 = vmatprep.mubr.f32.mxu0 0.0
        %702 = vmatmul.mubr.f32.gmra.mxu0 %v560
        %v703 = vpop.f32.mrf.mxu0
        %v704 = vadd.f32 0.0, %v703
        %v705 = vpop.f32.mrf.mxu0
        %v706 = vadd.f32 0.0, %v705
        %707 = vmatprep.mubr.f32.mxu0 0.0
        %708 = vmatmul.mubr.f32.gmra.mxu0 %v563
        %v709 = vpop.f32.mrf.mxu0
        %v710 = vadd.f32 0.0, %v709
        %v711 = vpop.f32.mrf.mxu0
        %v712 = vadd.f32 0.0, %v711
        %713 = vmatprep.mubr.f32.mxu0 0.0
        %714 = vmatmul.mubr.f32.gmra.mxu0 %v566
        %v715 = vpop.f32.mrf.mxu0
        %v716 = vadd.f32 0.0, %v715
        %v717 = vpop.f32.mrf.mxu0
        %v718 = vadd.f32 0.0, %v717
        %719 = vmatprep.mubr.f32.mxu0 0.0
        %720 = vmatmul.mubr.f32.gmra.mxu0 %v569
        %v721 = vpop.f32.mrf.mxu0
        %v722 = vadd.f32 0.0, %v721
        %v723 = vpop.f32.mrf.mxu0
        %v724 = vadd.f32 0.0, %v723
        %725 = vmatprep.mubr.f32.mxu0 0.0
        %726 = vmatmul.mubr.f32.gmra.mxu0 %v572
        %v727 = vpop.f32.mrf.mxu0
        %v728 = vadd.f32 0.0, %v727
        %v729 = vpop.f32.mrf.mxu0
        %v730 = vadd.f32 0.0, %v729
        %731 = vmatprep.mubr.f32.mxu0 0.0
        %732 = vmatmul.mubr.f32.gmra.mxu0 %v575
        %v733 = vpop.f32.mrf.mxu0
        %v734 = vadd.f32 0.0, %v733
        %v735 = vpop.f32.mrf.mxu0
        %v736 = vadd.f32 0.0, %v735
        %737 = vdwg.mxu0
        %738 = vmatprep.subr.mxu0 0.0
        %739 = vmatpush1.msra.mxu0 0.0
        %740 = vmatprep.subr.mxu0 0.0
        %741 = vmatpush1.msra.mxu0 0.0
        %742 = vmatprep.subr.mxu0 0.0
        %743 = vmatpush1.msra.mxu0 0.0
        %744 = vmatprep.subr.mxu0 0.0
        %745 = vmatpush1.msra.mxu0 0.0
        %746 = vmatprep.subr.mxu0 %v516
        %747 = vmatpush1.msra.mxu0 %v515
        %748 = vmatprep.subr.mxu0 %v501
        %749 = vmatpush1.msra.mxu0 %v500
        %750 = vmatprep.subr.mxu0 %v486
        %751 = vmatpush1.msra.mxu0 %v485
        %752 = vmatprep.subr.mxu0 %v471
        %753 = vmatpush1.msra.mxu0 %v470
        %754 = vmatprep.subr.mxu0 %v456
        %755 = vmatpush1.msra.mxu0 %v455
        %756 = vmatprep.subr.mxu0 %v441
        %757 = vmatpush1.msra.mxu0 %v440
        %758 = vmatprep.subr.mxu0 %v426
        %759 = vmatpush1.msra.mxu0 %v425
        %760 = vmatprep.subr.mxu0 %v411
        %761 = vmatpush1.msra.mxu0 %v410
        %762 = vmatprep.subr.mxu0 %v396
        %763 = vmatpush1.msra.mxu0 %v395
        %764 = vmatprep.subr.mxu0 %v381
        %765 = vmatpush1.msra.mxu0 %v380
        %766 = vmatprep.subr.mxu0 %v366
        %767 = vmatpush1.msra.mxu0 %v365
        %768 = vmatprep.subr.mxu0 %v351
        %769 = vmatpush1.msra.mxu0 %v350
        %770 = vmatprep.subr.mxu0 0.0
        %771 = vmatpush2.msra.mxu0 0.0
        %772 = vmatprep.subr.mxu0 0.0
        %773 = vmatpush2.msra.mxu0 0.0
        %774 = vmatprep.subr.mxu0 0.0
        %775 = vmatpush2.msra.mxu0 0.0
        %776 = vmatprep.subr.mxu0 0.0
        %777 = vmatpush2.msra.mxu0 0.0
        %778 = vmatprep.subr.mxu0 0.0
        %779 = vmatpush2.msra.mxu0 0.0
        %780 = vmatprep.subr.mxu0 0.0
        %781 = vmatpush2.msra.mxu0 0.0
        %782 = vmatprep.subr.mxu0 0.0
        %783 = vmatpush2.msra.mxu0 0.0
        %784 = vmatprep.subr.mxu0 0.0
        %785 = vmatpush2.msra.mxu0 0.0
        %786 = vmatprep.subr.mxu0 0.0
        %787 = vmatpush2.msra.mxu0 0.0
        %788 = vmatprep.subr.mxu0 0.0
        %789 = vmatpush2.msra.mxu0 0.0
        %790 = vmatprep.subr.mxu0 0.0
        %791 = vmatpush2.msra.mxu0 0.0
        %792 = vmatprep.subr.mxu0 0.0
        %793 = vmatpush2.msra.mxu0 0.0
        %794 = vmatprep.subr.mxu0 0.0
        %795 = vmatpush2.msra.mxu0 0.0
        %796 = vmatprep.subr.mxu0 0.0
        %797 = vmatpush2.msra.mxu0 0.0
        %798 = vmatprep.subr.mxu0 0.0
        %799 = vmatpush2.msra.mxu0 0.0
        %800 = vmatprep.subr.mxu0 0.0
        %801 = vmatpush2.msra.mxu0 0.0
        %802 = vmatprep.mubr.f32.mxu0 0.0
        %803 = vmatmul.mubr.f32.gmra.mxu0 %v530
        %v804 = vpop.f32.mrf.mxu0
        %v805 = vadd.f32 0.0, %v804
        %v806 = vpop.f32.mrf.mxu0
        %v807 = vadd.f32 0.0, %v806
        %808 = vmatprep.mubr.f32.mxu0 0.0
        %809 = vmatmul.mubr.f32.gmra.mxu0 %v533
        %v810 = vpop.f32.mrf.mxu0
        %v811 = vadd.f32 0.0, %v810
        %v812 = vpop.f32.mrf.mxu0
        %v813 = vadd.f32 0.0, %v812
        %814 = vmatprep.mubr.f32.mxu0 0.0
        %815 = vmatmul.mubr.f32.gmra.mxu0 %v536
        %v816 = vpop.f32.mrf.mxu0
        %v817 = vadd.f32 0.0, %v816
        %v818 = vpop.f32.mrf.mxu0
        %v819 = vadd.f32 0.0, %v818
        %820 = vmatprep.mubr.f32.mxu0 0.0
        %821 = vmatmul.mubr.f32.gmra.mxu0 %v539
        %v822 = vpop.f32.mrf.mxu0
        %v823 = vadd.f32 0.0, %v822
        %v824 = vpop.f32.mrf.mxu0
        %v825 = vadd.f32 0.0, %v824
        %826 = vmatprep.mubr.f32.mxu0 0.0
        %827 = vmatmul.mubr.f32.gmra.mxu0 %v542
        %v828 = vpop.f32.mrf.mxu0
        %v829 = vadd.f32 0.0, %v828
        %v830 = vpop.f32.mrf.mxu0
        %v831 = vadd.f32 0.0, %v830
        %832 = vmatprep.mubr.f32.mxu0 0.0
        %833 = vmatmul.mubr.f32.gmra.mxu0 %v545
        %v834 = vpop.f32.mrf.mxu0
        %v835 = vadd.f32 0.0, %v834
        %v836 = vpop.f32.mrf.mxu0
        %v837 = vadd.f32 0.0, %v836
        %838 = vmatprep.mubr.f32.mxu0 0.0
        %839 = vmatmul.mubr.f32.gmra.mxu0 %v548
        %v840 = vpop.f32.mrf.mxu0
        %v841 = vadd.f32 0.0, %v840
        %v842 = vpop.f32.mrf.mxu0
        %v843 = vadd.f32 0.0, %v842
        %844 = vmatprep.mubr.f32.mxu0 0.0
        %845 = vmatmul.mubr.f32.gmra.mxu0 %v551
        %v846 = vpop.f32.mrf.mxu0
        %v847 = vadd.f32 0.0, %v846
        %v848 = vpop.f32.mrf.mxu0
        %v849 = vadd.f32 0.0, %v848
        %850 = vmatprep.mubr.f32.mxu0 0.0
        %851 = vmatmul.mubr.f32.gmra.mxu0 %v554
        %v852 = vpop.f32.mrf.mxu0
        %v853 = vadd.f32 0.0, %v852
        %v854 = vpop.f32.mrf.mxu0
        %v855 = vadd.f32 0.0, %v854
        %856 = vmatprep.mubr.f32.mxu0 0.0
        %857 = vmatmul.mubr.f32.gmra.mxu0 %v557
        %v858 = vpop.f32.mrf.mxu0
        %v859 = vadd.f32 0.0, %v858
        %v860 = vpop.f32.mrf.mxu0
        %v861 = vadd.f32 0.0, %v860
        %862 = vmatprep.mubr.f32.mxu0 0.0
        %863 = vmatmul.mubr.f32.gmra.mxu0 %v560
        %v864 = vpop.f32.mrf.mxu0
        %v865 = vadd.f32 0.0, %v864
        %v866 = vpop.f32.mrf.mxu0
        %v867 = vadd.f32 0.0, %v866
        %868 = vmatprep.mubr.f32.mxu0 0.0
        %869 = vmatmul.mubr.f32.gmra.mxu0 %v563
        %v870 = vpop.f32.mrf.mxu0
        %v871 = vadd.f32 0.0, %v870
        %v872 = vpop.f32.mrf.mxu0
        %v873 = vadd.f32 0.0, %v872
        %874 = vmatprep.mubr.f32.mxu0 0.0
        %875 = vmatmul.mubr.f32.gmra.mxu0 %v566
        %v876 = vpop.f32.mrf.mxu0
        %v877 = vadd.f32 0.0, %v876
        %v878 = vpop.f32.mrf.mxu0
        %v879 = vadd.f32 0.0, %v878
        %880 = vmatprep.mubr.f32.mxu0 0.0
        %881 = vmatmul.mubr.f32.gmra.mxu0 %v569
        %v882 = vpop.f32.mrf.mxu0
        %v883 = vadd.f32 0.0, %v882
        %v884 = vpop.f32.mrf.mxu0
        %v885 = vadd.f32 0.0, %v884
        %886 = vmatprep.mubr.f32.mxu0 0.0
        %887 = vmatmul.mubr.f32.gmra.mxu0 %v572
        %v888 = vpop.f32.mrf.mxu0
        %v889 = vadd.f32 0.0, %v888
        %v890 = vpop.f32.mrf.mxu0
        %v891 = vadd.f32 0.0, %v890
        %892 = vmatprep.mubr.f32.mxu0 0.0
        %893 = vmatmul.mubr.f32.gmra.mxu0 %v575
        %v894 = vpop.f32.mrf.mxu0
        %v895 = vadd.f32 0.0, %v894
        %v896 = vpop.f32.mrf.mxu0
        %v897 = vadd.f32 0.0, %v896
        %898 = vdwg.mxu0
        %899 = vmatprep.subr.mxu0 0.0
        %900 = vmatpush1.msra.mxu0 0.0
        %901 = vmatprep.subr.mxu0 0.0
        %902 = vmatpush1.msra.mxu0 0.0
        %903 = vmatprep.subr.mxu0 0.0
        %904 = vmatpush1.msra.mxu0 0.0
        %905 = vmatprep.subr.mxu0 0.0
        %906 = vmatpush1.msra.mxu0 0.0
        %907 = vmatprep.subr.mxu0 %v518
        %908 = vmatpush1.msra.mxu0 %v517
        %909 = vmatprep.subr.mxu0 %v503
        %910 = vmatpush1.msra.mxu0 %v502
        %911 = vmatprep.subr.mxu0 %v488
        %912 = vmatpush1.msra.mxu0 %v487
        %913 = vmatprep.subr.mxu0 %v473
        %914 = vmatpush1.msra.mxu0 %v472
        %915 = vmatprep.subr.mxu0 %v458
        %916 = vmatpush1.msra.mxu0 %v457
        %917 = vmatprep.subr.mxu0 %v443
        %918 = vmatpush1.msra.mxu0 %v442
        %919 = vmatprep.subr.mxu0 %v428
        %920 = vmatpush1.msra.mxu0 %v427
        %921 = vmatprep.subr.mxu0 %v413
        %922 = vmatpush1.msra.mxu0 %v412
        %923 = vmatprep.subr.mxu0 %v398
        %924 = vmatpush1.msra.mxu0 %v397
        %925 = vmatprep.subr.mxu0 %v383
        %926 = vmatpush1.msra.mxu0 %v382
        %927 = vmatprep.subr.mxu0 %v368
        %928 = vmatpush1.msra.mxu0 %v367
        %929 = vmatprep.subr.mxu0 %v353
        %930 = vmatpush1.msra.mxu0 %v352
        %931 = vmatprep.subr.mxu0 0.0
        %932 = vmatpush2.msra.mxu0 0.0
        %933 = vmatprep.subr.mxu0 0.0
        %934 = vmatpush2.msra.mxu0 0.0
        %935 = vmatprep.subr.mxu0 0.0
        %936 = vmatpush2.msra.mxu0 0.0
        %937 = vmatprep.subr.mxu0 0.0
        %938 = vmatpush2.msra.mxu0 0.0
        %939 = vmatprep.subr.mxu0 0.0
        %940 = vmatpush2.msra.mxu0 0.0
        %941 = vmatprep.subr.mxu0 0.0
        %942 = vmatpush2.msra.mxu0 0.0
        %943 = vmatprep.subr.mxu0 0.0
        %944 = vmatpush2.msra.mxu0 0.0
        %945 = vmatprep.subr.mxu0 0.0
        %946 = vmatpush2.msra.mxu0 0.0
        %947 = vmatprep.subr.mxu0 0.0
        %948 = vmatpush2.msra.mxu0 0.0
        %949 = vmatprep.subr.mxu0 0.0
        %950 = vmatpush2.msra.mxu0 0.0
        %951 = vmatprep.subr.mxu0 0.0
        %952 = vmatpush2.msra.mxu0 0.0
        %953 = vmatprep.subr.mxu0 0.0
        %954 = vmatpush2.msra.mxu0 0.0
        %955 = vmatprep.subr.mxu0 0.0
        %956 = vmatpush2.msra.mxu0 0.0
        %957 = vmatprep.subr.mxu0 0.0
        %958 = vmatpush2.msra.mxu0 0.0
        %959 = vmatprep.subr.mxu0 0.0
        %960 = vmatpush2.msra.mxu0 0.0
        %961 = vmatprep.subr.mxu0 0.0
        %962 = vmatpush2.msra.mxu0 0.0
        %963 = vmatprep.mubr.f32.mxu0 0.0
        %964 = vmatmul.mubr.f32.gmra.mxu0 %v530
        %v965 = vpop.f32.mrf.mxu0
        %v966 = vadd.f32 0.0, %v965
        %v967 = vpop.f32.mrf.mxu0
        %v968 = vadd.f32 0.0, %v967
        %969 = vmatprep.mubr.f32.mxu0 0.0
        %970 = vmatmul.mubr.f32.gmra.mxu0 %v533
        %v971 = vpop.f32.mrf.mxu0
        %v972 = vadd.f32 0.0, %v971
        %v973 = vpop.f32.mrf.mxu0
        %v974 = vadd.f32 0.0, %v973
        %975 = vmatprep.mubr.f32.mxu0 0.0
        %976 = vmatmul.mubr.f32.gmra.mxu0 %v536
        %v977 = vpop.f32.mrf.mxu0
        %v978 = vadd.f32 0.0, %v977
        %v979 = vpop.f32.mrf.mxu0
        %v980 = vadd.f32 0.0, %v979
        %981 = vmatprep.mubr.f32.mxu0 0.0
        %982 = vmatmul.mubr.f32.gmra.mxu0 %v539
        %v983 = vpop.f32.mrf.mxu0
        %v984 = vadd.f32 0.0, %v983
        %v985 = vpop.f32.mrf.mxu0
        %v986 = vadd.f32 0.0, %v985
        %987 = vmatprep.mubr.f32.mxu0 0.0
        %988 = vmatmul.mubr.f32.gmra.mxu0 %v542
        %v989 = vpop.f32.mrf.mxu0
        %v990 = vadd.f32 0.0, %v989
        %v991 = vpop.f32.mrf.mxu0
        %v992 = vadd.f32 0.0, %v991
        %993 = vmatprep.mubr.f32.mxu0 0.0
        %994 = vmatmul.mubr.f32.gmra.mxu0 %v545
        %v995 = vpop.f32.mrf.mxu0
        %v996 = vadd.f32 0.0, %v995
        %v997 = vpop.f32.mrf.mxu0
        %v998 = vadd.f32 0.0, %v997
        %999 = vmatprep.mubr.f32.mxu0 0.0
        %1000 = vmatmul.mubr.f32.gmra.mxu0 %v548
        %v1001 = vpop.f32.mrf.mxu0
        %v1002 = vadd.f32 0.0, %v1001
        %v1003 = vpop.f32.mrf.mxu0
        %v1004 = vadd.f32 0.0, %v1003
        %1005 = vmatprep.mubr.f32.mxu0 0.0
        %1006 = vmatmul.mubr.f32.gmra.mxu0 %v551
        %v1007 = vpop.f32.mrf.mxu0
        %v1008 = vadd.f32 0.0, %v1007
        %v1009 = vpop.f32.mrf.mxu0
        %v1010 = vadd.f32 0.0, %v1009
        %1011 = vmatprep.mubr.f32.mxu0 0.0
        %1012 = vmatmul.mubr.f32.gmra.mxu0 %v554
        %v1013 = vpop.f32.mrf.mxu0
        %v1014 = vadd.f32 0.0, %v1013
        %v1015 = vpop.f32.mrf.mxu0
        %v1016 = vadd.f32 0.0, %v1015
        %1017 = vmatprep.mubr.f32.mxu0 0.0
        %1018 = vmatmul.mubr.f32.gmra.mxu0 %v557
        %v1019 = vpop.f32.mrf.mxu0
        %v1020 = vadd.f32 0.0, %v1019
        %v1021 = vpop.f32.mrf.mxu0
        %v1022 = vadd.f32 0.0, %v1021
        %1023 = vmatprep.mubr.f32.mxu0 0.0
        %1024 = vmatmul.mubr.f32.gmra.mxu0 %v560
        %v1025 = vpop.f32.mrf.mxu0
        %v1026 = vadd.f32 0.0, %v1025
        %v1027 = vpop.f32.mrf.mxu0
        %v1028 = vadd.f32 0.0, %v1027
        %1029 = vmatprep.mubr.f32.mxu0 0.0
        %1030 = vmatmul.mubr.f32.gmra.mxu0 %v563
        %v1031 = vpop.f32.mrf.mxu0
        %v1032 = vadd.f32 0.0, %v1031
        %v1033 = vpop.f32.mrf.mxu0
        %v1034 = vadd.f32 0.0, %v1033
        %1035 = vmatprep.mubr.f32.mxu0 0.0
        %1036 = vmatmul.mubr.f32.gmra.mxu0 %v566
        %v1037 = vpop.f32.mrf.mxu0
        %v1038 = vadd.f32 0.0, %v1037
        %v1039 = vpop.f32.mrf.mxu0
        %v1040 = vadd.f32 0.0, %v1039
        %1041 = vmatprep.mubr.f32.mxu0 0.0
        %1042 = vmatmul.mubr.f32.gmra.mxu0 %v569
        %v1043 = vpop.f32.mrf.mxu0
        %v1044 = vadd.f32 0.0, %v1043
        %v1045 = vpop.f32.mrf.mxu0
        %v1046 = vadd.f32 0.0, %v1045
        %1047 = vmatprep.mubr.f32.mxu0 0.0
        %1048 = vmatmul.mubr.f32.gmra.mxu0 %v572
        %v1049 = vpop.f32.mrf.mxu0
        %v1050 = vadd.f32 0.0, %v1049
        %v1051 = vpop.f32.mrf.mxu0
        %v1052 = vadd.f32 0.0, %v1051
        %1053 = vmatprep.mubr.f32.mxu0 0.0
        %1054 = vmatmul.mubr.f32.gmra.mxu0 %v575
        %v1055 = vpop.f32.mrf.mxu0
        %v1056 = vadd.f32 0.0, %v1055
        %v1057 = vpop.f32.mrf.mxu0
        %v1058 = vadd.f32 0.0, %v1057
        %1059 = vdwg.mxu0
        %1060 = vmatprep.subr.mxu0 0.0
        %1061 = vmatpush1.msra.mxu0 0.0
        %1062 = vmatprep.subr.mxu0 0.0
        %1063 = vmatpush1.msra.mxu0 0.0
        %1064 = vmatprep.subr.mxu0 0.0
        %1065 = vmatpush1.msra.mxu0 0.0
        %1066 = vmatprep.subr.mxu0 0.0
        %1067 = vmatpush1.msra.mxu0 0.0
        %1068 = vmatprep.subr.mxu0 %v520
        %1069 = vmatpush1.msra.mxu0 %v519
        %1070 = vmatprep.subr.mxu0 %v505
        %1071 = vmatpush1.msra.mxu0 %v504
        %1072 = vmatprep.subr.mxu0 %v490
        %1073 = vmatpush1.msra.mxu0 %v489
        %1074 = vmatprep.subr.mxu0 %v475
        %1075 = vmatpush1.msra.mxu0 %v474
        %1076 = vmatprep.subr.mxu0 %v460
        %1077 = vmatpush1.msra.mxu0 %v459
        %1078 = vmatprep.subr.mxu0 %v445
        %1079 = vmatpush1.msra.mxu0 %v444
        %1080 = vmatprep.subr.mxu0 %v430
        %1081 = vmatpush1.msra.mxu0 %v429
        %1082 = vmatprep.subr.mxu0 %v415
        %1083 = vmatpush1.msra.mxu0 %v414
        %1084 = vmatprep.subr.mxu0 %v400
        %1085 = vmatpush1.msra.mxu0 %v399
        %1086 = vmatprep.subr.mxu0 %v385
        %1087 = vmatpush1.msra.mxu0 %v384
        %1088 = vmatprep.subr.mxu0 %v370
        %1089 = vmatpush1.msra.mxu0 %v369
        %1090 = vmatprep.subr.mxu0 %v355
        %1091 = vmatpush1.msra.mxu0 %v354
        %1092 = vmatprep.subr.mxu0 0.0
        %1093 = vmatpush2.msra.mxu0 0.0
        %1094 = vmatprep.subr.mxu0 0.0
        %1095 = vmatpush2.msra.mxu0 0.0
        %1096 = vmatprep.subr.mxu0 0.0
        %1097 = vmatpush2.msra.mxu0 0.0
        %1098 = vmatprep.subr.mxu0 0.0
        %1099 = vmatpush2.msra.mxu0 0.0
        %1100 = vmatprep.subr.mxu0 0.0
        %1101 = vmatpush2.msra.mxu0 0.0
        %1102 = vmatprep.subr.mxu0 0.0
        %1103 = vmatpush2.msra.mxu0 0.0
        %1104 = vmatprep.subr.mxu0 0.0
        %1105 = vmatpush2.msra.mxu0 0.0
        %1106 = vmatprep.subr.mxu0 0.0
        %1107 = vmatpush2.msra.mxu0 0.0
        %1108 = vmatprep.subr.mxu0 0.0
        %1109 = vmatpush2.msra.mxu0 0.0
        %1110 = vmatprep.subr.mxu0 0.0
        %1111 = vmatpush2.msra.mxu0 0.0
        %1112 = vmatprep.subr.mxu0 0.0
        %1113 = vmatpush2.msra.mxu0 0.0
        %1114 = vmatprep.subr.mxu0 0.0
        %1115 = vmatpush2.msra.mxu0 0.0
        %1116 = vmatprep.subr.mxu0 0.0
        %1117 = vmatpush2.msra.mxu0 0.0
        %1118 = vmatprep.subr.mxu0 0.0
        %1119 = vmatpush2.msra.mxu0 0.0
        %1120 = vmatprep.subr.mxu0 0.0
        %1121 = vmatpush2.msra.mxu0 0.0
        %1122 = vmatprep.subr.mxu0 0.0
        %1123 = vmatpush2.msra.mxu0 0.0
        %1124 = vmatprep.mubr.f32.mxu0 0.0
        %1125 = vmatmul.mubr.f32.gmra.mxu0 %v530
        %v1126 = vpop.f32.mrf.mxu0
        %v1127 = vadd.f32 0.0, %v1126
        %v1128 = vpop.f32.mrf.mxu0
        %v1129 = vadd.f32 0.0, %v1128
        %1130 = vmatprep.mubr.f32.mxu0 0.0
        %1131 = vmatmul.mubr.f32.gmra.mxu0 %v533
        %v1132 = vpop.f32.mrf.mxu0
        %v1133 = vadd.f32 0.0, %v1132
        %v1134 = vpop.f32.mrf.mxu0
        %v1135 = vadd.f32 0.0, %v1134
        %1136 = vmatprep.mubr.f32.mxu0 0.0
        %1137 = vmatmul.mubr.f32.gmra.mxu0 %v536
        %v1138 = vpop.f32.mrf.mxu0
        %v1139 = vadd.f32 0.0, %v1138
        %v1140 = vpop.f32.mrf.mxu0
        %v1141 = vadd.f32 0.0, %v1140
        %1142 = vmatprep.mubr.f32.mxu0 0.0
        %1143 = vmatmul.mubr.f32.gmra.mxu0 %v539
        %v1144 = vpop.f32.mrf.mxu0
        %v1145 = vadd.f32 0.0, %v1144
        %v1146 = vpop.f32.mrf.mxu0
        %v1147 = vadd.f32 0.0, %v1146
        %1148 = vmatprep.mubr.f32.mxu0 0.0
        %1149 = vmatmul.mubr.f32.gmra.mxu0 %v542
        %v1150 = vpop.f32.mrf.mxu0
        %v1151 = vadd.f32 0.0, %v1150
        %v1152 = vpop.f32.mrf.mxu0
        %v1153 = vadd.f32 0.0, %v1152
        %1154 = vmatprep.mubr.f32.mxu0 0.0
        %1155 = vmatmul.mubr.f32.gmra.mxu0 %v545
        %v1156 = vpop.f32.mrf.mxu0
        %v1157 = vadd.f32 0.0, %v1156
        %v1158 = vpop.f32.mrf.mxu0
        %v1159 = vadd.f32 0.0, %v1158
        %1160 = vmatprep.mubr.f32.mxu0 0.0
        %1161 = vmatmul.mubr.f32.gmra.mxu0 %v548
        %v1162 = vpop.f32.mrf.mxu0
        %v1163 = vadd.f32 0.0, %v1162
        %v1164 = vpop.f32.mrf.mxu0
        %v1165 = vadd.f32 0.0, %v1164
        %1166 = vmatprep.mubr.f32.mxu0 0.0
        %1167 = vmatmul.mubr.f32.gmra.mxu0 %v551
        %v1168 = vpop.f32.mrf.mxu0
        %v1169 = vadd.f32 0.0, %v1168
        %v1170 = vpop.f32.mrf.mxu0
        %v1171 = vadd.f32 0.0, %v1170
        %1172 = vmatprep.mubr.f32.mxu0 0.0
        %1173 = vmatmul.mubr.f32.gmra.mxu0 %v554
        %v1174 = vpop.f32.mrf.mxu0
        %v1175 = vadd.f32 0.0, %v1174
        %v1176 = vpop.f32.mrf.mxu0
        %v1177 = vadd.f32 0.0, %v1176
        %1178 = vmatprep.mubr.f32.mxu0 0.0
        %1179 = vmatmul.mubr.f32.gmra.mxu0 %v557
        %v1180 = vpop.f32.mrf.mxu0
        %v1181 = vadd.f32 0.0, %v1180
        %v1182 = vpop.f32.mrf.mxu0
        %v1183 = vadd.f32 0.0, %v1182
        %1184 = vmatprep.mubr.f32.mxu0 0.0
        %1185 = vmatmul.mubr.f32.gmra.mxu0 %v560
        %v1186 = vpop.f32.mrf.mxu0
        %v1187 = vadd.f32 0.0, %v1186
        %v1188 = vpop.f32.mrf.mxu0
        %v1189 = vadd.f32 0.0, %v1188
        %1190 = vmatprep.mubr.f32.mxu0 0.0
        %1191 = vmatmul.mubr.f32.gmra.mxu0 %v563
        %v1192 = vpop.f32.mrf.mxu0
        %v1193 = vadd.f32 0.0, %v1192
        %v1194 = vpop.f32.mrf.mxu0
        %v1195 = vadd.f32 0.0, %v1194
        %1196 = vmatprep.mubr.f32.mxu0 0.0
        %1197 = vmatmul.mubr.f32.gmra.mxu0 %v566
        %v1198 = vpop.f32.mrf.mxu0
        %v1199 = vadd.f32 0.0, %v1198
        %v1200 = vpop.f32.mrf.mxu0
        %v1201 = vadd.f32 0.0, %v1200
        %1202 = vmatprep.mubr.f32.mxu0 0.0
        %1203 = vmatmul.mubr.f32.gmra.mxu0 %v569
        %v1204 = vpop.f32.mrf.mxu0
        %v1205 = vadd.f32 0.0, %v1204
        %v1206 = vpop.f32.mrf.mxu0
        %v1207 = vadd.f32 0.0, %v1206
        %1208 = vmatprep.mubr.f32.mxu0 0.0
        %1209 = vmatmul.mubr.f32.gmra.mxu0 %v572
        %v1210 = vpop.f32.mrf.mxu0
        %v1211 = vadd.f32 0.0, %v1210
        %v1212 = vpop.f32.mrf.mxu0
        %v1213 = vadd.f32 0.0, %v1212
        %1214 = vmatprep.mubr.f32.mxu0 0.0
        %1215 = vmatmul.mubr.f32.gmra.mxu0 %v575
        %v1216 = vpop.f32.mrf.mxu0
        %v1217 = vadd.f32 0.0, %v1216
        %v1218 = vpop.f32.mrf.mxu0
        %v1219 = vadd.f32 0.0, %v1218
        %1220 = vdwg.mxu0
        %1221 = vmatprep.subr.mxu0 0.0
        %1222 = vmatpush1.msra.mxu0 0.0
        %1223 = vmatprep.subr.mxu0 0.0
        %1224 = vmatpush1.msra.mxu0 0.0
        %1225 = vmatprep.subr.mxu0 0.0
        %1226 = vmatpush1.msra.mxu0 0.0
        %1227 = vmatprep.subr.mxu0 0.0
        %1228 = vmatpush1.msra.mxu0 0.0
        %1229 = vmatprep.subr.mxu0 %v522
        %1230 = vmatpush1.msra.mxu0 %v521
        %1231 = vmatprep.subr.mxu0 %v507
        %1232 = vmatpush1.msra.mxu0 %v506
        %1233 = vmatprep.subr.mxu0 %v492
        %1234 = vmatpush1.msra.mxu0 %v491
        %1235 = vmatprep.subr.mxu0 %v477
        %1236 = vmatpush1.msra.mxu0 %v476
        %1237 = vmatprep.subr.mxu0 %v462
        %1238 = vmatpush1.msra.mxu0 %v461
        %1239 = vmatprep.subr.mxu0 %v447
        %1240 = vmatpush1.msra.mxu0 %v446
        %1241 = vmatprep.subr.mxu0 %v432
        %1242 = vmatpush1.msra.mxu0 %v431
        %1243 = vmatprep.subr.mxu0 %v417
        %1244 = vmatpush1.msra.mxu0 %v416
        %1245 = vmatprep.subr.mxu0 %v402
        %1246 = vmatpush1.msra.mxu0 %v401
        %1247 = vmatprep.subr.mxu0 %v387
        %1248 = vmatpush1.msra.mxu0 %v386
        %1249 = vmatprep.subr.mxu0 %v372
        %1250 = vmatpush1.msra.mxu0 %v371
        %1251 = vmatprep.subr.mxu0 %v357
        %1252 = vmatpush1.msra.mxu0 %v356
        %1253 = vmatprep.subr.mxu0 0.0
        %1254 = vmatpush2.msra.mxu0 0.0
        %1255 = vmatprep.subr.mxu0 0.0
        %1256 = vmatpush2.msra.mxu0 0.0
        %1257 = vmatprep.subr.mxu0 0.0
        %1258 = vmatpush2.msra.mxu0 0.0
        %1259 = vmatprep.subr.mxu0 0.0
        %1260 = vmatpush2.msra.mxu0 0.0
        %1261 = vmatprep.subr.mxu0 0.0
        %1262 = vmatpush2.msra.mxu0 0.0
        %1263 = vmatprep.subr.mxu0 0.0
        %1264 = vmatpush2.msra.mxu0 0.0
        %1265 = vmatprep.subr.mxu0 0.0
        %1266 = vmatpush2.msra.mxu0 0.0
        %1267 = vmatprep.subr.mxu0 0.0
        %1268 = vmatpush2.msra.mxu0 0.0
        %1269 = vmatprep.subr.mxu0 0.0
        %1270 = vmatpush2.msra.mxu0 0.0
        %1271 = vmatprep.subr.mxu0 0.0
        %1272 = vmatpush2.msra.mxu0 0.0
        %1273 = vmatprep.subr.mxu0 0.0
        %1274 = vmatpush2.msra.mxu0 0.0
        %1275 = vmatprep.subr.mxu0 0.0
        %1276 = vmatpush2.msra.mxu0 0.0
        %1277 = vmatprep.subr.mxu0 0.0
        %1278 = vmatpush2.msra.mxu0 0.0
        %1279 = vmatprep.subr.mxu0 0.0
        %1280 = vmatpush2.msra.mxu0 0.0
        %1281 = vmatprep.subr.mxu0 0.0
        %1282 = vmatpush2.msra.mxu0 0.0
        %1283 = vmatprep.subr.mxu0 0.0
        %1284 = vmatpush2.msra.mxu0 0.0
        %1285 = vmatprep.mubr.f32.mxu0 0.0
        %1286 = vmatmul.mubr.f32.gmra.mxu0 %v530
        %v1287 = vpop.f32.mrf.mxu0
        %v1288 = vadd.f32 0.0, %v1287
        %v1289 = vpop.f32.mrf.mxu0
        %v1290 = vadd.f32 0.0, %v1289
        %1291 = vmatprep.mubr.f32.mxu0 0.0
        %1292 = vmatmul.mubr.f32.gmra.mxu0 %v533
        %v1293 = vpop.f32.mrf.mxu0
        %v1294 = vadd.f32 0.0, %v1293
        %v1295 = vpop.f32.mrf.mxu0
        %v1296 = vadd.f32 0.0, %v1295
        %1297 = vmatprep.mubr.f32.mxu0 0.0
        %1298 = vmatmul.mubr.f32.gmra.mxu0 %v536
        %v1299 = vpop.f32.mrf.mxu0
        %v1300 = vadd.f32 0.0, %v1299
        %v1301 = vpop.f32.mrf.mxu0
        %v1302 = vadd.f32 0.0, %v1301
        %1303 = vmatprep.mubr.f32.mxu0 0.0
        %1304 = vmatmul.mubr.f32.gmra.mxu0 %v539
        %v1305 = vpop.f32.mrf.mxu0
        %v1306 = vadd.f32 0.0, %v1305
        %v1307 = vpop.f32.mrf.mxu0
        %v1308 = vadd.f32 0.0, %v1307
        %1309 = vmatprep.mubr.f32.mxu0 0.0
        %1310 = vmatmul.mubr.f32.gmra.mxu0 %v542
        %v1311 = vpop.f32.mrf.mxu0
        %v1312 = vadd.f32 0.0, %v1311
        %v1313 = vpop.f32.mrf.mxu0
        %v1314 = vadd.f32 0.0, %v1313
        %1315 = vmatprep.mubr.f32.mxu0 0.0
        %1316 = vmatmul.mubr.f32.gmra.mxu0 %v545
        %v1317 = vpop.f32.mrf.mxu0
        %v1318 = vadd.f32 0.0, %v1317
        %v1319 = vpop.f32.mrf.mxu0
        %v1320 = vadd.f32 0.0, %v1319
        %1321 = vmatprep.mubr.f32.mxu0 0.0
        %1322 = vmatmul.mubr.f32.gmra.mxu0 %v548
        %v1323 = vpop.f32.mrf.mxu0
        %v1324 = vadd.f32 0.0, %v1323
        %v1325 = vpop.f32.mrf.mxu0
        %v1326 = vadd.f32 0.0, %v1325
        %1327 = vmatprep.mubr.f32.mxu0 0.0
        %1328 = vmatmul.mubr.f32.gmra.mxu0 %v551
        %v1329 = vpop.f32.mrf.mxu0
        %v1330 = vadd.f32 0.0, %v1329
        %v1331 = vpop.f32.mrf.mxu0
        %v1332 = vadd.f32 0.0, %v1331
        %1333 = vmatprep.mubr.f32.mxu0 0.0
        %1334 = vmatmul.mubr.f32.gmra.mxu0 %v554
        %v1335 = vpop.f32.mrf.mxu0
        %v1336 = vadd.f32 0.0, %v1335
        %v1337 = vpop.f32.mrf.mxu0
        %v1338 = vadd.f32 0.0, %v1337
        %1339 = vmatprep.mubr.f32.mxu0 0.0
        %1340 = vmatmul.mubr.f32.gmra.mxu0 %v557
        %v1341 = vpop.f32.mrf.mxu0
        %v1342 = vadd.f32 0.0, %v1341
        %v1343 = vpop.f32.mrf.mxu0
        %v1344 = vadd.f32 0.0, %v1343
        %1345 = vmatprep.mubr.f32.mxu0 0.0
        %1346 = vmatmul.mubr.f32.gmra.mxu0 %v560
        %v1347 = vpop.f32.mrf.mxu0
        %v1348 = vadd.f32 0.0, %v1347
        %v1349 = vpop.f32.mrf.mxu0
        %v1350 = vadd.f32 0.0, %v1349
        %1351 = vmatprep.mubr.f32.mxu0 0.0
        %1352 = vmatmul.mubr.f32.gmra.mxu0 %v563
        %v1353 = vpop.f32.mrf.mxu0
        %v1354 = vadd.f32 0.0, %v1353
        %v1355 = vpop.f32.mrf.mxu0
        %v1356 = vadd.f32 0.0, %v1355
        %1357 = vmatprep.mubr.f32.mxu0 0.0
        %1358 = vmatmul.mubr.f32.gmra.mxu0 %v566
        %v1359 = vpop.f32.mrf.mxu0
        %v1360 = vadd.f32 0.0, %v1359
        %v1361 = vpop.f32.mrf.mxu0
        %v1362 = vadd.f32 0.0, %v1361
        %1363 = vmatprep.mubr.f32.mxu0 0.0
        %1364 = vmatmul.mubr.f32.gmra.mxu0 %v569
        %v1365 = vpop.f32.mrf.mxu0
        %v1366 = vadd.f32 0.0, %v1365
        %v1367 = vpop.f32.mrf.mxu0
        %v1368 = vadd.f32 0.0, %v1367
        %1369 = vmatprep.mubr.f32.mxu0 0.0
        %1370 = vmatmul.mubr.f32.gmra.mxu0 %v572
        %v1371 = vpop.f32.mrf.mxu0
        %v1372 = vadd.f32 0.0, %v1371
        %v1373 = vpop.f32.mrf.mxu0
        %v1374 = vadd.f32 0.0, %v1373
        %1375 = vmatprep.mubr.f32.mxu0 0.0
        %1376 = vmatmul.mubr.f32.gmra.mxu0 %v575
        %v1377 = vpop.f32.mrf.mxu0
        %v1378 = vadd.f32 0.0, %v1377
        %v1379 = vpop.f32.mrf.mxu0
        %v1380 = vadd.f32 0.0, %v1379
        %1381 = vdwg.mxu0
        %1382 = vmatprep.subr.mxu0 0.0
        %1383 = vmatpush1.msra.mxu0 0.0
        %1384 = vmatprep.subr.mxu0 0.0
        %1385 = vmatpush1.msra.mxu0 0.0
        %1386 = vmatprep.subr.mxu0 0.0
        %1387 = vmatpush1.msra.mxu0 0.0
        %1388 = vmatprep.subr.mxu0 0.0
        %1389 = vmatpush1.msra.mxu0 0.0
        %1390 = vmatprep.subr.mxu0 %v524
        %1391 = vmatpush1.msra.mxu0 %v523
        %1392 = vmatprep.subr.mxu0 %v509
        %1393 = vmatpush1.msra.mxu0 %v508
        %1394 = vmatprep.subr.mxu0 %v494
        %1395 = vmatpush1.msra.mxu0 %v493
        %1396 = vmatprep.subr.mxu0 %v479
        %1397 = vmatpush1.msra.mxu0 %v478
        %1398 = vmatprep.subr.mxu0 %v464
        %1399 = vmatpush1.msra.mxu0 %v463
        %1400 = vmatprep.subr.mxu0 %v449
        %1401 = vmatpush1.msra.mxu0 %v448
        %1402 = vmatprep.subr.mxu0 %v434
        %1403 = vmatpush1.msra.mxu0 %v433
        %1404 = vmatprep.subr.mxu0 %v419
        %1405 = vmatpush1.msra.mxu0 %v418
        %1406 = vmatprep.subr.mxu0 %v404
        %1407 = vmatpush1.msra.mxu0 %v403
        %1408 = vmatprep.subr.mxu0 %v389
        %1409 = vmatpush1.msra.mxu0 %v388
        %1410 = vmatprep.subr.mxu0 %v374
        %1411 = vmatpush1.msra.mxu0 %v373
        %1412 = vmatprep.subr.mxu0 %v359
        %1413 = vmatpush1.msra.mxu0 %v358
        %1414 = vmatprep.subr.mxu0 0.0
        %1415 = vmatpush2.msra.mxu0 0.0
        %1416 = vmatprep.subr.mxu0 0.0
        %1417 = vmatpush2.msra.mxu0 0.0
        %1418 = vmatprep.subr.mxu0 0.0
        %1419 = vmatpush2.msra.mxu0 0.0
        %1420 = vmatprep.subr.mxu0 0.0
        %1421 = vmatpush2.msra.mxu0 0.0
        %1422 = vmatprep.subr.mxu0 0.0
        %1423 = vmatpush2.msra.mxu0 0.0
        %1424 = vmatprep.subr.mxu0 0.0
        %1425 = vmatpush2.msra.mxu0 0.0
        %1426 = vmatprep.subr.mxu0 0.0
        %1427 = vmatpush2.msra.mxu0 0.0
        %1428 = vmatprep.subr.mxu0 0.0
        %1429 = vmatpush2.msra.mxu0 0.0
        %1430 = vmatprep.subr.mxu0 0.0
        %1431 = vmatpush2.msra.mxu0 0.0
        %1432 = vmatprep.subr.mxu0 0.0
        %1433 = vmatpush2.msra.mxu0 0.0
        %1434 = vmatprep.subr.mxu0 0.0
        %1435 = vmatpush2.msra.mxu0 0.0
        %1436 = vmatprep.subr.mxu0 0.0
        %1437 = vmatpush2.msra.mxu0 0.0
        %1438 = vmatprep.subr.mxu0 0.0
        %1439 = vmatpush2.msra.mxu0 0.0
        %1440 = vmatprep.subr.mxu0 0.0
        %1441 = vmatpush2.msra.mxu0 0.0
        %1442 = vmatprep.subr.mxu0 0.0
        %1443 = vmatpush2.msra.mxu0 0.0
        %1444 = vmatprep.subr.mxu0 0.0
        %1445 = vmatpush2.msra.mxu0 0.0
        %1446 = vmatprep.mubr.f32.mxu0 0.0
        %1447 = vmatmul.mubr.f32.gmra.mxu0 %v530
        %v1448 = vpop.f32.mrf.mxu0
        %v1449 = vadd.f32 0.0, %v1448
        %v1450 = vpop.f32.mrf.mxu0
        %v1451 = vadd.f32 0.0, %v1450
        %1452 = vmatprep.mubr.f32.mxu0 0.0
        %1453 = vmatmul.mubr.f32.gmra.mxu0 %v533
        %v1454 = vpop.f32.mrf.mxu0
        %v1455 = vadd.f32 0.0, %v1454
        %v1456 = vpop.f32.mrf.mxu0
        %v1457 = vadd.f32 0.0, %v1456
        %1458 = vmatprep.mubr.f32.mxu0 0.0
        %1459 = vmatmul.mubr.f32.gmra.mxu0 %v536
        %v1460 = vpop.f32.mrf.mxu0
        %v1461 = vadd.f32 0.0, %v1460
        %v1462 = vpop.f32.mrf.mxu0
        %v1463 = vadd.f32 0.0, %v1462
        %1464 = vmatprep.mubr.f32.mxu0 0.0
        %1465 = vmatmul.mubr.f32.gmra.mxu0 %v539
        %v1466 = vpop.f32.mrf.mxu0
        %v1467 = vadd.f32 0.0, %v1466
        %v1468 = vpop.f32.mrf.mxu0
        %v1469 = vadd.f32 0.0, %v1468
        %1470 = vmatprep.mubr.f32.mxu0 0.0
        %1471 = vmatmul.mubr.f32.gmra.mxu0 %v542
        %v1472 = vpop.f32.mrf.mxu0
        %v1473 = vadd.f32 0.0, %v1472
        %v1474 = vpop.f32.mrf.mxu0
        %v1475 = vadd.f32 0.0, %v1474
        %1476 = vmatprep.mubr.f32.mxu0 0.0
        %1477 = vmatmul.mubr.f32.gmra.mxu0 %v545
        %v1478 = vpop.f32.mrf.mxu0
        %v1479 = vadd.f32 0.0, %v1478
        %v1480 = vpop.f32.mrf.mxu0
        %v1481 = vadd.f32 0.0, %v1480
        %1482 = vmatprep.mubr.f32.mxu0 0.0
        %1483 = vmatmul.mubr.f32.gmra.mxu0 %v548
        %v1484 = vpop.f32.mrf.mxu0
        %v1485 = vadd.f32 0.0, %v1484
        %v1486 = vpop.f32.mrf.mxu0
        %v1487 = vadd.f32 0.0, %v1486
        %1488 = vmatprep.mubr.f32.mxu0 0.0
        %1489 = vmatmul.mubr.f32.gmra.mxu0 %v551
        %v1490 = vpop.f32.mrf.mxu0
        %v1491 = vadd.f32 0.0, %v1490
        %v1492 = vpop.f32.mrf.mxu0
        %v1493 = vadd.f32 0.0, %v1492
        %1494 = vmatprep.mubr.f32.mxu0 0.0
        %1495 = vmatmul.mubr.f32.gmra.mxu0 %v554
        %v1496 = vpop.f32.mrf.mxu0
        %v1497 = vadd.f32 0.0, %v1496
        %v1498 = vpop.f32.mrf.mxu0
        %v1499 = vadd.f32 0.0, %v1498
        %1500 = vmatprep.mubr.f32.mxu0 0.0
        %1501 = vmatmul.mubr.f32.gmra.mxu0 %v557
        %v1502 = vpop.f32.mrf.mxu0
        %v1503 = vadd.f32 0.0, %v1502
        %v1504 = vpop.f32.mrf.mxu0
        %v1505 = vadd.f32 0.0, %v1504
        %1506 = vmatprep.mubr.f32.mxu0 0.0
        %1507 = vmatmul.mubr.f32.gmra.mxu0 %v560
        %v1508 = vpop.f32.mrf.mxu0
        %v1509 = vadd.f32 0.0, %v1508
        %v1510 = vpop.f32.mrf.mxu0
        %v1511 = vadd.f32 0.0, %v1510
        %1512 = vmatprep.mubr.f32.mxu0 0.0
        %1513 = vmatmul.mubr.f32.gmra.mxu0 %v563
        %v1514 = vpop.f32.mrf.mxu0
        %v1515 = vadd.f32 0.0, %v1514
        %v1516 = vpop.f32.mrf.mxu0
        %v1517 = vadd.f32 0.0, %v1516
        %1518 = vmatprep.mubr.f32.mxu0 0.0
        %1519 = vmatmul.mubr.f32.gmra.mxu0 %v566
        %v1520 = vpop.f32.mrf.mxu0
        %v1521 = vadd.f32 0.0, %v1520
        %v1522 = vpop.f32.mrf.mxu0
        %v1523 = vadd.f32 0.0, %v1522
        %1524 = vmatprep.mubr.f32.mxu0 0.0
        %1525 = vmatmul.mubr.f32.gmra.mxu0 %v569
        %v1526 = vpop.f32.mrf.mxu0
        %v1527 = vadd.f32 0.0, %v1526
        %v1528 = vpop.f32.mrf.mxu0
        %v1529 = vadd.f32 0.0, %v1528
        %1530 = vmatprep.mubr.f32.mxu0 0.0
        %1531 = vmatmul.mubr.f32.gmra.mxu0 %v572
        %v1532 = vpop.f32.mrf.mxu0
        %v1533 = vadd.f32 0.0, %v1532
        %v1534 = vpop.f32.mrf.mxu0
        %v1535 = vadd.f32 0.0, %v1534
        %1536 = vmatprep.mubr.f32.mxu0 0.0
        %1537 = vmatmul.mubr.f32.gmra.mxu0 %v575
        %v1538 = vpop.f32.mrf.mxu0
        %v1539 = vadd.f32 0.0, %v1538
        %v1540 = vpop.f32.mrf.mxu0
        %v1541 = vadd.f32 0.0, %v1540
        %1542 = vdwg.mxu0
        %1543 = vmatprep.subr.mxu0 0.0
        %1544 = vmatpush1.msra.mxu0 0.0
        %1545 = vmatprep.subr.mxu0 0.0
        %1546 = vmatpush1.msra.mxu0 0.0
        %1547 = vmatprep.subr.mxu0 0.0
        %1548 = vmatpush1.msra.mxu0 0.0
        %1549 = vmatprep.subr.mxu0 0.0
        %1550 = vmatpush1.msra.mxu0 0.0
        %1551 = vmatprep.subr.mxu0 %v526
        %1552 = vmatpush1.msra.mxu0 %v525
        %1553 = vmatprep.subr.mxu0 %v511
        %1554 = vmatpush1.msra.mxu0 %v510
        %1555 = vmatprep.subr.mxu0 %v496
        %1556 = vmatpush1.msra.mxu0 %v495
        %1557 = vmatprep.subr.mxu0 %v481
        %1558 = vmatpush1.msra.mxu0 %v480
        %1559 = vmatprep.subr.mxu0 %v466
        %1560 = vmatpush1.msra.mxu0 %v465
        %1561 = vmatprep.subr.mxu0 %v451
        %1562 = vmatpush1.msra.mxu0 %v450
        %1563 = vmatprep.subr.mxu0 %v436
        %1564 = vmatpush1.msra.mxu0 %v435
        %1565 = vmatprep.subr.mxu0 %v421
        %1566 = vmatpush1.msra.mxu0 %v420
        %1567 = vmatprep.subr.mxu0 %v406
        %1568 = vmatpush1.msra.mxu0 %v405
        %1569 = vmatprep.subr.mxu0 %v391
        %1570 = vmatpush1.msra.mxu0 %v390
        %1571 = vmatprep.subr.mxu0 %v376
        %1572 = vmatpush1.msra.mxu0 %v375
        %1573 = vmatprep.subr.mxu0 %v361
        %1574 = vmatpush1.msra.mxu0 %v360
        %1575 = vmatprep.subr.mxu0 0.0
        %1576 = vmatpush2.msra.mxu0 0.0
        %1577 = vmatprep.subr.mxu0 0.0
        %1578 = vmatpush2.msra.mxu0 0.0
        %1579 = vmatprep.subr.mxu0 0.0
        %1580 = vmatpush2.msra.mxu0 0.0
        %1581 = vmatprep.subr.mxu0 0.0
        %1582 = vmatpush2.msra.mxu0 0.0
        %1583 = vmatprep.subr.mxu0 0.0
        %1584 = vmatpush2.msra.mxu0 0.0
        %1585 = vmatprep.subr.mxu0 0.0
        %1586 = vmatpush2.msra.mxu0 0.0
        %1587 = vmatprep.subr.mxu0 0.0
        %1588 = vmatpush2.msra.mxu0 0.0
        %1589 = vmatprep.subr.mxu0 0.0
        %1590 = vmatpush2.msra.mxu0 0.0
        %1591 = vmatprep.subr.mxu0 0.0
        %1592 = vmatpush2.msra.mxu0 0.0
        %1593 = vmatprep.subr.mxu0 0.0
        %1594 = vmatpush2.msra.mxu0 0.0
        %1595 = vmatprep.subr.mxu0 0.0
        %1596 = vmatpush2.msra.mxu0 0.0
        %1597 = vmatprep.subr.mxu0 0.0
        %1598 = vmatpush2.msra.mxu0 0.0
        %1599 = vmatprep.subr.mxu0 0.0
        %1600 = vmatpush2.msra.mxu0 0.0
        %1601 = vmatprep.subr.mxu0 0.0
        %1602 = vmatpush2.msra.mxu0 0.0
        %1603 = vmatprep.subr.mxu0 0.0
        %1604 = vmatpush2.msra.mxu0 0.0
        %1605 = vmatprep.subr.mxu0 0.0
        %1606 = vmatpush2.msra.mxu0 0.0
        %1607 = vmatprep.mubr.f32.mxu0 0.0
        %1608 = vmatmul.mubr.f32.gmra.mxu0 %v530
        %v1609 = vpop.f32.mrf.mxu0
        %v1610 = vadd.f32 0.0, %v1609
        %v1611 = vpop.f32.mrf.mxu0
        %v1612 = vadd.f32 0.0, %v1611
        %1613 = vmatprep.mubr.f32.mxu0 0.0
        %1614 = vmatmul.mubr.f32.gmra.mxu0 %v533
        %v1615 = vpop.f32.mrf.mxu0
        %v1616 = vadd.f32 0.0, %v1615
        %v1617 = vpop.f32.mrf.mxu0
        %v1618 = vadd.f32 0.0, %v1617
        %1619 = vmatprep.mubr.f32.mxu0 0.0
        %1620 = vmatmul.mubr.f32.gmra.mxu0 %v536
        %v1621 = vpop.f32.mrf.mxu0
        %v1622 = vadd.f32 0.0, %v1621
        %v1623 = vpop.f32.mrf.mxu0
        %v1624 = vadd.f32 0.0, %v1623
        %1625 = vmatprep.mubr.f32.mxu0 0.0
        %1626 = vmatmul.mubr.f32.gmra.mxu0 %v539
        %v1627 = vpop.f32.mrf.mxu0
        %v1628 = vadd.f32 0.0, %v1627
        %v1629 = vpop.f32.mrf.mxu0
        %v1630 = vadd.f32 0.0, %v1629
        %1631 = vmatprep.mubr.f32.mxu0 0.0
        %1632 = vmatmul.mubr.f32.gmra.mxu0 %v542
        %v1633 = vpop.f32.mrf.mxu0
        %v1634 = vadd.f32 0.0, %v1633
        %v1635 = vpop.f32.mrf.mxu0
        %v1636 = vadd.f32 0.0, %v1635
        %1637 = vmatprep.mubr.f32.mxu0 0.0
        %1638 = vmatmul.mubr.f32.gmra.mxu0 %v545
        %v1639 = vpop.f32.mrf.mxu0
        %v1640 = vadd.f32 0.0, %v1639
        %v1641 = vpop.f32.mrf.mxu0
        %v1642 = vadd.f32 0.0, %v1641
        %1643 = vmatprep.mubr.f32.mxu0 0.0
        %1644 = vmatmul.mubr.f32.gmra.mxu0 %v548
        %v1645 = vpop.f32.mrf.mxu0
        %v1646 = vadd.f32 0.0, %v1645
        %v1647 = vpop.f32.mrf.mxu0
        %v1648 = vadd.f32 0.0, %v1647
        %1649 = vmatprep.mubr.f32.mxu0 0.0
        %1650 = vmatmul.mubr.f32.gmra.mxu0 %v551
        %v1651 = vpop.f32.mrf.mxu0
        %v1652 = vadd.f32 0.0, %v1651
        %v1653 = vpop.f32.mrf.mxu0
        %v1654 = vadd.f32 0.0, %v1653
        %1655 = vmatprep.mubr.f32.mxu0 0.0
        %1656 = vmatmul.mubr.f32.gmra.mxu0 %v554
        %v1657 = vpop.f32.mrf.mxu0
        %v1658 = vadd.f32 0.0, %v1657
        %v1659 = vpop.f32.mrf.mxu0
        %v1660 = vadd.f32 0.0, %v1659
        %1661 = vmatprep.mubr.f32.mxu0 0.0
        %1662 = vmatmul.mubr.f32.gmra.mxu0 %v557
        %v1663 = vpop.f32.mrf.mxu0
        %v1664 = vadd.f32 0.0, %v1663
        %v1665 = vpop.f32.mrf.mxu0
        %v1666 = vadd.f32 0.0, %v1665
        %1667 = vmatprep.mubr.f32.mxu0 0.0
        %1668 = vmatmul.mubr.f32.gmra.mxu0 %v560
        %v1669 = vpop.f32.mrf.mxu0
        %v1670 = vadd.f32 0.0, %v1669
        %v1671 = vpop.f32.mrf.mxu0
        %v1672 = vadd.f32 0.0, %v1671
        %1673 = vmatprep.mubr.f32.mxu0 0.0
        %1674 = vmatmul.mubr.f32.gmra.mxu0 %v563
        %v1675 = vpop.f32.mrf.mxu0
        %v1676 = vadd.f32 0.0, %v1675
        %v1677 = vpop.f32.mrf.mxu0
        %v1678 = vadd.f32 0.0, %v1677
        %1679 = vmatprep.mubr.f32.mxu0 0.0
        %1680 = vmatmul.mubr.f32.gmra.mxu0 %v566
        %v1681 = vpop.f32.mrf.mxu0
        %v1682 = vadd.f32 0.0, %v1681
        %v1683 = vpop.f32.mrf.mxu0
        %v1684 = vadd.f32 0.0, %v1683
        %1685 = vmatprep.mubr.f32.mxu0 0.0
        %1686 = vmatmul.mubr.f32.gmra.mxu0 %v569
        %v1687 = vpop.f32.mrf.mxu0
        %v1688 = vadd.f32 0.0, %v1687
        %v1689 = vpop.f32.mrf.mxu0
        %v1690 = vadd.f32 0.0, %v1689
        %1691 = vmatprep.mubr.f32.mxu0 0.0
        %1692 = vmatmul.mubr.f32.gmra.mxu0 %v572
        %v1693 = vpop.f32.mrf.mxu0
        %v1694 = vadd.f32 0.0, %v1693
        %v1695 = vpop.f32.mrf.mxu0
        %v1696 = vadd.f32 0.0, %v1695
        %1697 = vmatprep.mubr.f32.mxu0 0.0
        %1698 = vmatmul.mubr.f32.gmra.mxu0 %v575
        %v1699 = vpop.f32.mrf.mxu0
        %v1700 = vadd.f32 0.0, %v1699
        %v1701 = vpop.f32.mrf.mxu0
        %v1702 = vadd.f32 0.0, %v1701
        %1703 = vdwg.mxu0
        %1704 = vmatprep.subr.mxu0 0.0
        %1705 = vmatpush1.msra.mxu0 0.0
        %1706 = vmatprep.subr.mxu0 0.0
        %1707 = vmatpush1.msra.mxu0 0.0
        %1708 = vmatprep.subr.mxu0 0.0
        %1709 = vmatpush1.msra.mxu0 0.0
        %1710 = vmatprep.subr.mxu0 0.0
        %1711 = vmatpush1.msra.mxu0 0.0
        %1712 = vmatprep.subr.mxu0 0.0
        %1713 = vmatpush1.msra.mxu0 %v527
        %1714 = vmatprep.subr.mxu0 0.0
        %1715 = vmatpush1.msra.mxu0 %v512
        %1716 = vmatprep.subr.mxu0 0.0
        %1717 = vmatpush1.msra.mxu0 %v497
        %1718 = vmatprep.subr.mxu0 0.0
        %1719 = vmatpush1.msra.mxu0 %v482
        %1720 = vmatprep.subr.mxu0 0.0
        %1721 = vmatpush1.msra.mxu0 %v467
        %1722 = vmatprep.subr.mxu0 0.0
        %1723 = vmatpush1.msra.mxu0 %v452
        %1724 = vmatprep.subr.mxu0 0.0
        %1725 = vmatpush1.msra.mxu0 %v437
        %1726 = vmatprep.subr.mxu0 0.0
        %1727 = vmatpush1.msra.mxu0 %v422
        %1728 = vmatprep.subr.mxu0 0.0
        %1729 = vmatpush1.msra.mxu0 %v407
        %1730 = vmatprep.subr.mxu0 0.0
        %1731 = vmatpush1.msra.mxu0 %v392
        %1732 = vmatprep.subr.mxu0 0.0
        %1733 = vmatpush1.msra.mxu0 %v377
        %1734 = vmatprep.subr.mxu0 0.0
        %1735 = vmatpush1.msra.mxu0 %v362
        %1736 = vmatprep.subr.mxu0 0.0
        %1737 = vmatpush2.msra.mxu0 0.0
        %1738 = vmatprep.subr.mxu0 0.0
        %1739 = vmatpush2.msra.mxu0 0.0
        %1740 = vmatprep.subr.mxu0 0.0
        %1741 = vmatpush2.msra.mxu0 0.0
        %1742 = vmatprep.subr.mxu0 0.0
        %1743 = vmatpush2.msra.mxu0 0.0
        %1744 = vmatprep.subr.mxu0 0.0
        %1745 = vmatpush2.msra.mxu0 0.0
        %1746 = vmatprep.subr.mxu0 0.0
        %1747 = vmatpush2.msra.mxu0 0.0
        %1748 = vmatprep.subr.mxu0 0.0
        %1749 = vmatpush2.msra.mxu0 0.0
        %1750 = vmatprep.subr.mxu0 0.0
        %1751 = vmatpush2.msra.mxu0 0.0
        %1752 = vmatprep.subr.mxu0 0.0
        %1753 = vmatpush2.msra.mxu0 0.0
        %1754 = vmatprep.subr.mxu0 0.0
        %1755 = vmatpush2.msra.mxu0 0.0
        %1756 = vmatprep.subr.mxu0 0.0
        %1757 = vmatpush2.msra.mxu0 0.0
        %1758 = vmatprep.subr.mxu0 0.0
        %1759 = vmatpush2.msra.mxu0 0.0
        %1760 = vmatprep.subr.mxu0 0.0
        %1761 = vmatpush2.msra.mxu0 0.0
        %1762 = vmatprep.subr.mxu0 0.0
        %1763 = vmatpush2.msra.mxu0 0.0
        %1764 = vmatprep.subr.mxu0 0.0
        %1765 = vmatpush2.msra.mxu0 0.0
        %1766 = vmatprep.subr.mxu0 0.0
        %1767 = vmatpush2.msra.mxu0 0.0
        %1768 = vmatprep.mubr.f32.mxu0 0.0
        %1769 = vmatmul.mubr.f32.gmra.mxu0 %v530
        %v1770 = vpop.f32.mrf.mxu0
        %v1771 = vadd.f32 0.0, %v1770
        %v1772 = vpop.f32.mrf.mxu0
        %1773 = vmatprep.mubr.f32.mxu0 0.0
        %1774 = vmatmul.mubr.f32.gmra.mxu0 %v533
        %v1775 = vpop.f32.mrf.mxu0
        %v1776 = vadd.f32 0.0, %v1775
        %v1777 = vpop.f32.mrf.mxu0
        %1778 = vmatprep.mubr.f32.mxu0 0.0
        %1779 = vmatmul.mubr.f32.gmra.mxu0 %v536
        %v1780 = vpop.f32.mrf.mxu0
        %v1781 = vadd.f32 0.0, %v1780
        %v1782 = vpop.f32.mrf.mxu0
        %1783 = vmatprep.mubr.f32.mxu0 0.0
        %1784 = vmatmul.mubr.f32.gmra.mxu0 %v539
        %v1785 = vpop.f32.mrf.mxu0
        %v1786 = vadd.f32 0.0, %v1785
        %v1787 = vpop.f32.mrf.mxu0
        %1788 = vmatprep.mubr.f32.mxu0 0.0
        %1789 = vmatmul.mubr.f32.gmra.mxu0 %v542
        %v1790 = vpop.f32.mrf.mxu0
        %v1791 = vadd.f32 0.0, %v1790
        %v1792 = vpop.f32.mrf.mxu0
        %1793 = vmatprep.mubr.f32.mxu0 0.0
        %1794 = vmatmul.mubr.f32.gmra.mxu0 %v545
        %v1795 = vpop.f32.mrf.mxu0
        %v1796 = vadd.f32 0.0, %v1795
        %v1797 = vpop.f32.mrf.mxu0
        %1798 = vmatprep.mubr.f32.mxu0 0.0
        %1799 = vmatmul.mubr.f32.gmra.mxu0 %v548
        %v1800 = vpop.f32.mrf.mxu0
        %v1801 = vadd.f32 0.0, %v1800
        %v1802 = vpop.f32.mrf.mxu0
        %1803 = vmatprep.mubr.f32.mxu0 0.0
        %1804 = vmatmul.mubr.f32.gmra.mxu0 %v551
        %v1805 = vpop.f32.mrf.mxu0
        %v1806 = vadd.f32 0.0, %v1805
        %v1807 = vpop.f32.mrf.mxu0
        %1808 = vmatprep.mubr.f32.mxu0 0.0
        %1809 = vmatmul.mubr.f32.gmra.mxu0 %v554
        %v1810 = vpop.f32.mrf.mxu0
        %v1811 = vadd.f32 0.0, %v1810
        %v1812 = vpop.f32.mrf.mxu0
        %1813 = vmatprep.mubr.f32.mxu0 0.0
        %1814 = vmatmul.mubr.f32.gmra.mxu0 %v557
        %v1815 = vpop.f32.mrf.mxu0
        %v1816 = vadd.f32 0.0, %v1815
        %v1817 = vpop.f32.mrf.mxu0
        %1818 = vmatprep.mubr.f32.mxu0 0.0
        %1819 = vmatmul.mubr.f32.gmra.mxu0 %v560
        %v1820 = vpop.f32.mrf.mxu0
        %v1821 = vadd.f32 0.0, %v1820
        %v1822 = vpop.f32.mrf.mxu0
        %1823 = vmatprep.mubr.f32.mxu0 0.0
        %1824 = vmatmul.mubr.f32.gmra.mxu0 %v563
        %v1825 = vpop.f32.mrf.mxu0
        %v1826 = vadd.f32 0.0, %v1825
        %v1827 = vpop.f32.mrf.mxu0
        %1828 = vmatprep.mubr.f32.mxu0 0.0
        %1829 = vmatmul.mubr.f32.gmra.mxu0 %v566
        %v1830 = vpop.f32.mrf.mxu0
        %v1831 = vadd.f32 0.0, %v1830
        %v1832 = vpop.f32.mrf.mxu0
        %1833 = vmatprep.mubr.f32.mxu0 0.0
        %1834 = vmatmul.mubr.f32.gmra.mxu0 %v569
        %v1835 = vpop.f32.mrf.mxu0
        %v1836 = vadd.f32 0.0, %v1835
        %v1837 = vpop.f32.mrf.mxu0
        %1838 = vmatprep.mubr.f32.mxu0 0.0
        %1839 = vmatmul.mubr.f32.gmra.mxu0 %v572
        %v1840 = vpop.f32.mrf.mxu0
        %v1841 = vadd.f32 0.0, %v1840
        %v1842 = vpop.f32.mrf.mxu0
        %1843 = vmatprep.mubr.f32.mxu0 0.0
        %1844 = vmatmul.mubr.f32.gmra.mxu0 %v575
        %v1845 = vpop.f32.mrf.mxu0
        %v1846 = vadd.f32 0.0, %v1845
        %v1847 = vpop.f32.mrf.mxu0
        %1848 = vdwg.mxu0
        %v1849 = vld [vmem:[%s3] sm:$0xff]
        %v1850 = vld [vmem:[%s3 + $0x8] sm:$0xff]
        %v1851 = vld [vmem:[%s3 + $0x10] sm:$0xff]
        %v1852 = vld [vmem:[%s3 + $0x18] sm:$0xff]
        %v1853 = vld [vmem:[%s3 + $0x20] sm:$0xff]
        %v1854 = vld [vmem:[%s3 + $0x28] sm:$0xff]
        %v1855 = vld [vmem:[%s3 + $0x30] sm:$0xff]
        %v1856 = vld [vmem:[%s3 + $0x38] sm:$0xff]
        %v1857 = vld [vmem:[%s3 + $0x40] sm:$0xff]
        %v1858 = vld [vmem:[%s3 + $0x48] sm:$0xff]
        %v1859 = vld [vmem:[%s3 + $0x50] sm:$0xff]
        %v1860 = vld [vmem:[%s3 + $0x58] sm:$0xff]
        %v1861 = vld [vmem:[%s3 + $0x60] sm:$0xff]
        %v1862 = vld [vmem:[%s3 + $0x68] sm:$0xff]
        %v1863 = vld [vmem:[%s3 + $0x70] sm:$0xff]
        %v1864 = vadd.f32 %v644, %v1849
        %v1865 = vadd.f32 %v646, %v1850
        %v1866 = vadd.f32 %v805, %v1851
        %v1867 = vadd.f32 %v807, %v1852
        %v1868 = vadd.f32 %v966, %v1853
        %v1869 = vadd.f32 %v968, %v1854
        %v1870 = vadd.f32 %v1127, %v1855
        %v1871 = vadd.f32 %v1129, %v1856
        %v1872 = vadd.f32 %v1288, %v1857
        %v1873 = vadd.f32 %v1290, %v1858
        %v1874 = vadd.f32 %v1449, %v1859
        %v1875 = vadd.f32 %v1451, %v1860
        %v1876 = vadd.f32 %v1610, %v1861
        %v1877 = vadd.f32 %v1612, %v1862
        %v1878 = vadd.f32 %v1771, %v1863
        %v1879 = vadd.f32 %v650, %v1849
        %v1880 = vadd.f32 %v652, %v1850
        %v1881 = vadd.f32 %v811, %v1851
        %v1882 = vadd.f32 %v813, %v1852
        %v1883 = vadd.f32 %v972, %v1853
        %v1884 = vadd.f32 %v974, %v1854
        %v1885 = vadd.f32 %v1133, %v1855
        %v1886 = vadd.f32 %v1135, %v1856
        %v1887 = vadd.f32 %v1294, %v1857
        %v1888 = vadd.f32 %v1296, %v1858
        %v1889 = vadd.f32 %v1455, %v1859
        %v1890 = vadd.f32 %v1457, %v1860
        %v1891 = vadd.f32 %v1616, %v1861
        %v1892 = vadd.f32 %v1618, %v1862
        %v1893 = vadd.f32 %v1776, %v1863
        %v1894 = vadd.f32 %v656, %v1849
        %v1895 = vadd.f32 %v658, %v1850
        %v1896 = vadd.f32 %v817, %v1851
        %v1897 = vadd.f32 %v819, %v1852
        %v1898 = vadd.f32 %v978, %v1853
        %v1899 = vadd.f32 %v980, %v1854
        %v1900 = vadd.f32 %v1139, %v1855
        %v1901 = vadd.f32 %v1141, %v1856
        %v1902 = vadd.f32 %v1300, %v1857
        %v1903 = vadd.f32 %v1302, %v1858
        %v1904 = vadd.f32 %v1461, %v1859
        %v1905 = vadd.f32 %v1463, %v1860
        %v1906 = vadd.f32 %v1622, %v1861
        %v1907 = vadd.f32 %v1624, %v1862
        %v1908 = vadd.f32 %v1781, %v1863
        %v1909 = vadd.f32 %v662, %v1849
        %v1910 = vadd.f32 %v664, %v1850
        %v1911 = vadd.f32 %v823, %v1851
        %v1912 = vadd.f32 %v825, %v1852
        %v1913 = vadd.f32 %v984, %v1853
        %v1914 = vadd.f32 %v986, %v1854
        %v1915 = vadd.f32 %v1145, %v1855
        %v1916 = vadd.f32 %v1147, %v1856
        %v1917 = vadd.f32 %v1306, %v1857
        %v1918 = vadd.f32 %v1308, %v1858
        %v1919 = vadd.f32 %v1467, %v1859
        %v1920 = vadd.f32 %v1469, %v1860
        %v1921 = vadd.f32 %v1628, %v1861
        %v1922 = vadd.f32 %v1630, %v1862
        %v1923 = vadd.f32 %v1786, %v1863
        %v1924 = vadd.f32 %v668, %v1849
        %v1925 = vadd.f32 %v670, %v1850
        %v1926 = vadd.f32 %v829, %v1851
        %v1927 = vadd.f32 %v831, %v1852
        %v1928 = vadd.f32 %v990, %v1853
        %v1929 = vadd.f32 %v992, %v1854
        %v1930 = vadd.f32 %v1151, %v1855
        %v1931 = vadd.f32 %v1153, %v1856
        %v1932 = vadd.f32 %v1312, %v1857
        %v1933 = vadd.f32 %v1314, %v1858
        %v1934 = vadd.f32 %v1473, %v1859
        %v1935 = vadd.f32 %v1475, %v1860
        %v1936 = vadd.f32 %v1634, %v1861
        %v1937 = vadd.f32 %v1636, %v1862
        %v1938 = vadd.f32 %v1791, %v1863
        %v1939 = vadd.f32 %v674, %v1849
        %v1940 = vadd.f32 %v676, %v1850
        %v1941 = vadd.f32 %v835, %v1851
        %v1942 = vadd.f32 %v837, %v1852
        %v1943 = vadd.f32 %v996, %v1853
        %v1944 = vadd.f32 %v998, %v1854
        %v1945 = vadd.f32 %v1157, %v1855
        %v1946 = vadd.f32 %v1159, %v1856
        %v1947 = vadd.f32 %v1318, %v1857
        %v1948 = vadd.f32 %v1320, %v1858
        %v1949 = vadd.f32 %v1479, %v1859
        %v1950 = vadd.f32 %v1481, %v1860
        %v1951 = vadd.f32 %v1640, %v1861
        %v1952 = vadd.f32 %v1642, %v1862
        %v1953 = vadd.f32 %v1796, %v1863
        %v1954 = vadd.f32 %v680, %v1849
        %v1955 = vadd.f32 %v682, %v1850
        %v1956 = vadd.f32 %v841, %v1851
        %v1957 = vadd.f32 %v843, %v1852
        %v1958 = vadd.f32 %v1002, %v1853
        %v1959 = vadd.f32 %v1004, %v1854
        %v1960 = vadd.f32 %v1163, %v1855
        %v1961 = vadd.f32 %v1165, %v1856
        %v1962 = vadd.f32 %v1324, %v1857
        %v1963 = vadd.f32 %v1326, %v1858
        %v1964 = vadd.f32 %v1485, %v1859
        %v1965 = vadd.f32 %v1487, %v1860
        %v1966 = vadd.f32 %v1646, %v1861
        %v1967 = vadd.f32 %v1648, %v1862
        %v1968 = vadd.f32 %v1801, %v1863
        %v1969 = vadd.f32 %v686, %v1849
        %v1970 = vadd.f32 %v688, %v1850
        %v1971 = vadd.f32 %v847, %v1851
        %v1972 = vadd.f32 %v849, %v1852
        %v1973 = vadd.f32 %v1008, %v1853
        %v1974 = vadd.f32 %v1010, %v1854
        %v1975 = vadd.f32 %v1169, %v1855
        %v1976 = vadd.f32 %v1171, %v1856
        %v1977 = vadd.f32 %v1330, %v1857
        %v1978 = vadd.f32 %v1332, %v1858
        %v1979 = vadd.f32 %v1491, %v1859
        %v1980 = vadd.f32 %v1493, %v1860
        %v1981 = vadd.f32 %v1652, %v1861
        %v1982 = vadd.f32 %v1654, %v1862
        %v1983 = vadd.f32 %v1806, %v1863
        %v1984 = vadd.f32 %v692, %v1849
        %v1985 = vadd.f32 %v694, %v1850
        %v1986 = vadd.f32 %v853, %v1851
        %v1987 = vadd.f32 %v855, %v1852
        %v1988 = vadd.f32 %v1014, %v1853
        %v1989 = vadd.f32 %v1016, %v1854
        %v1990 = vadd.f32 %v1175, %v1855
        %v1991 = vadd.f32 %v1177, %v1856
        %v1992 = vadd.f32 %v1336, %v1857
        %v1993 = vadd.f32 %v1338, %v1858
        %v1994 = vadd.f32 %v1497, %v1859
        %v1995 = vadd.f32 %v1499, %v1860
        %v1996 = vadd.f32 %v1658, %v1861
        %v1997 = vadd.f32 %v1660, %v1862
        %v1998 = vadd.f32 %v1811, %v1863
        %v1999 = vadd.f32 %v698, %v1849
        %v2000 = vadd.f32 %v700, %v1850
        %v2001 = vadd.f32 %v859, %v1851
        %v2002 = vadd.f32 %v861, %v1852
        %v2003 = vadd.f32 %v1020, %v1853
        %v2004 = vadd.f32 %v1022, %v1854
        %v2005 = vadd.f32 %v1181, %v1855
        %v2006 = vadd.f32 %v1183, %v1856
        %v2007 = vadd.f32 %v1342, %v1857
        %v2008 = vadd.f32 %v1344, %v1858
        %v2009 = vadd.f32 %v1503, %v1859
        %v2010 = vadd.f32 %v1505, %v1860
        %v2011 = vadd.f32 %v1664, %v1861
        %v2012 = vadd.f32 %v1666, %v1862
        %v2013 = vadd.f32 %v1816, %v1863
        %v2014 = vadd.f32 %v704, %v1849
        %v2015 = vadd.f32 %v706, %v1850
        %v2016 = vadd.f32 %v865, %v1851
        %v2017 = vadd.f32 %v867, %v1852
        %v2018 = vadd.f32 %v1026, %v1853
        %v2019 = vadd.f32 %v1028, %v1854
        %v2020 = vadd.f32 %v1187, %v1855
        %v2021 = vadd.f32 %v1189, %v1856
        %v2022 = vadd.f32 %v1348, %v1857
        %v2023 = vadd.f32 %v1350, %v1858
        %v2024 = vadd.f32 %v1509, %v1859
        %v2025 = vadd.f32 %v1511, %v1860
        %v2026 = vadd.f32 %v1670, %v1861
        %v2027 = vadd.f32 %v1672, %v1862
        %v2028 = vadd.f32 %v1821, %v1863
        %v2029 = vadd.f32 %v710, %v1849
        %v2030 = vadd.f32 %v712, %v1850
        %v2031 = vadd.f32 %v871, %v1851
        %v2032 = vadd.f32 %v873, %v1852
        %v2033 = vadd.f32 %v1032, %v1853
        %v2034 = vadd.f32 %v1034, %v1854
        %v2035 = vadd.f32 %v1193, %v1855
        %v2036 = vadd.f32 %v1195, %v1856
        %v2037 = vadd.f32 %v1354, %v1857
        %v2038 = vadd.f32 %v1356, %v1858
        %v2039 = vadd.f32 %v1515, %v1859
        %v2040 = vadd.f32 %v1517, %v1860
        %v2041 = vadd.f32 %v1676, %v1861
        %v2042 = vadd.f32 %v1678, %v1862
        %v2043 = vadd.f32 %v1826, %v1863
        %v2044 = vadd.f32 %v716, %v1849
        %v2045 = vadd.f32 %v718, %v1850
        %v2046 = vadd.f32 %v877, %v1851
        %v2047 = vadd.f32 %v879, %v1852
        %v2048 = vadd.f32 %v1038, %v1853
        %v2049 = vadd.f32 %v1040, %v1854
        %v2050 = vadd.f32 %v1199, %v1855
        %v2051 = vadd.f32 %v1201, %v1856
        %v2052 = vadd.f32 %v1360, %v1857
        %v2053 = vadd.f32 %v1362, %v1858
        %v2054 = vadd.f32 %v1521, %v1859
        %v2055 = vadd.f32 %v1523, %v1860
        %v2056 = vadd.f32 %v1682, %v1861
        %v2057 = vadd.f32 %v1684, %v1862
        %v2058 = vadd.f32 %v1831, %v1863
        %v2059 = vadd.f32 %v722, %v1849
        %v2060 = vadd.f32 %v724, %v1850
        %v2061 = vadd.f32 %v883, %v1851
        %v2062 = vadd.f32 %v885, %v1852
        %v2063 = vadd.f32 %v1044, %v1853
        %v2064 = vadd.f32 %v1046, %v1854
        %v2065 = vadd.f32 %v1205, %v1855
        %v2066 = vadd.f32 %v1207, %v1856
        %v2067 = vadd.f32 %v1366, %v1857
        %v2068 = vadd.f32 %v1368, %v1858
        %v2069 = vadd.f32 %v1527, %v1859
        %v2070 = vadd.f32 %v1529, %v1860
        %v2071 = vadd.f32 %v1688, %v1861
        %v2072 = vadd.f32 %v1690, %v1862
        %v2073 = vadd.f32 %v1836, %v1863
        %v2074 = vadd.f32 %v728, %v1849
        %v2075 = vadd.f32 %v730, %v1850
        %v2076 = vadd.f32 %v889, %v1851
        %v2077 = vadd.f32 %v891, %v1852
        %v2078 = vadd.f32 %v1050, %v1853
        %v2079 = vadd.f32 %v1052, %v1854
        %v2080 = vadd.f32 %v1211, %v1855
        %v2081 = vadd.f32 %v1213, %v1856
        %v2082 = vadd.f32 %v1372, %v1857
        %v2083 = vadd.f32 %v1374, %v1858
        %v2084 = vadd.f32 %v1533, %v1859
        %v2085 = vadd.f32 %v1535, %v1860
        %v2086 = vadd.f32 %v1694, %v1861
        %v2087 = vadd.f32 %v1696, %v1862
        %v2088 = vadd.f32 %v1841, %v1863
        %v2089 = vadd.f32 %v734, %v1849
        %v2090 = vadd.f32 %v736, %v1850
        %v2091 = vadd.f32 %v895, %v1851
        %v2092 = vadd.f32 %v897, %v1852
        %v2093 = vadd.f32 %v1056, %v1853
        %v2094 = vadd.f32 %v1058, %v1854
        %v2095 = vadd.f32 %v1217, %v1855
        %v2096 = vadd.f32 %v1219, %v1856
        %v2097 = vadd.f32 %v1378, %v1857
        %v2098 = vadd.f32 %v1380, %v1858
        %v2099 = vadd.f32 %v1539, %v1859
        %v2100 = vadd.f32 %v1541, %v1860
        %v2101 = vadd.f32 %v1700, %v1861
        %v2102 = vadd.f32 %v1702, %v1862
        %v2103 = vadd.f32 %v1846, %v1863
        %v2104 = vmax.f32 %v1864, 0.0
        %v2105 = vmax.f32 %v1865, 0.0
        %v2106 = vmax.f32 %v1866, 0.0
        %v2107 = vmax.f32 %v1867, 0.0
        %v2108 = vmax.f32 %v1868, 0.0
        %v2109 = vmax.f32 %v1869, 0.0
        %v2110 = vmax.f32 %v1870, 0.0
        %v2111 = vmax.f32 %v1871, 0.0
        %v2112 = vmax.f32 %v1872, 0.0
        %v2113 = vmax.f32 %v1873, 0.0
        %v2114 = vmax.f32 %v1874, 0.0
        %v2115 = vmax.f32 %v1875, 0.0
        %v2116 = vmax.f32 %v1876, 0.0
        %v2117 = vmax.f32 %v1877, 0.0
        %v2118 = vmax.f32 %v1878, 0.0
        %v2119 = vmax.f32 %v1879, 0.0
        %v2120 = vmax.f32 %v1880, 0.0
        %v2121 = vmax.f32 %v1881, 0.0
        %v2122 = vmax.f32 %v1882, 0.0
        %v2123 = vmax.f32 %v1883, 0.0
        %v2124 = vmax.f32 %v1884, 0.0
        %v2125 = vmax.f32 %v1885, 0.0
        %v2126 = vmax.f32 %v1886, 0.0
        %v2127 = vmax.f32 %v1887, 0.0
        %v2128 = vmax.f32 %v1888, 0.0
        %v2129 = vmax.f32 %v1889, 0.0
        %v2130 = vmax.f32 %v1890, 0.0
        %v2131 = vmax.f32 %v1891, 0.0
        %v2132 = vmax.f32 %v1892, 0.0
        %v2133 = vmax.f32 %v1893, 0.0
        %v2134 = vmax.f32 %v1894, 0.0
        %v2135 = vmax.f32 %v1895, 0.0
        %v2136 = vmax.f32 %v1896, 0.0
        %v2137 = vmax.f32 %v1897, 0.0
        %v2138 = vmax.f32 %v1898, 0.0
        %v2139 = vmax.f32 %v1899, 0.0
        %v2140 = vmax.f32 %v1900, 0.0
        %v2141 = vmax.f32 %v1901, 0.0
        %v2142 = vmax.f32 %v1902, 0.0
        %v2143 = vmax.f32 %v1903, 0.0
        %v2144 = vmax.f32 %v1904, 0.0
        %v2145 = vmax.f32 %v1905, 0.0
        %v2146 = vmax.f32 %v1906, 0.0
        %v2147 = vmax.f32 %v1907, 0.0
        %v2148 = vmax.f32 %v1908, 0.0
        %v2149 = vmax.f32 %v1909, 0.0
        %v2150 = vmax.f32 %v1910, 0.0
        %v2151 = vmax.f32 %v1911, 0.0
        %v2152 = vmax.f32 %v1912, 0.0
        %v2153 = vmax.f32 %v1913, 0.0
        %v2154 = vmax.f32 %v1914, 0.0
        %v2155 = vmax.f32 %v1915, 0.0
        %v2156 = vmax.f32 %v1916, 0.0
        %v2157 = vmax.f32 %v1917, 0.0
        %v2158 = vmax.f32 %v1918, 0.0
        %v2159 = vmax.f32 %v1919, 0.0
        %v2160 = vmax.f32 %v1920, 0.0
        %v2161 = vmax.f32 %v1921, 0.0
        %v2162 = vmax.f32 %v1922, 0.0
        %v2163 = vmax.f32 %v1923, 0.0
        %v2164 = vmax.f32 %v1924, 0.0
        %v2165 = vmax.f32 %v1925, 0.0
        %v2166 = vmax.f32 %v1926, 0.0
        %v2167 = vmax.f32 %v1927, 0.0
        %v2168 = vmax.f32 %v1928, 0.0
        %v2169 = vmax.f32 %v1929, 0.0
        %v2170 = vmax.f32 %v1930, 0.0
        %v2171 = vmax.f32 %v1931, 0.0
        %v2172 = vmax.f32 %v1932, 0.0
        %v2173 = vmax.f32 %v1933, 0.0
        %v2174 = vmax.f32 %v1934, 0.0
        %v2175 = vmax.f32 %v1935, 0.0
        %v2176 = vmax.f32 %v1936, 0.0
        %v2177 = vmax.f32 %v1937, 0.0
        %v2178 = vmax.f32 %v1938, 0.0
        %v2179 = vmax.f32 %v1939, 0.0
        %v2180 = vmax.f32 %v1940, 0.0
        %v2181 = vmax.f32 %v1941, 0.0
        %v2182 = vmax.f32 %v1942, 0.0
        %v2183 = vmax.f32 %v1943, 0.0
        %v2184 = vmax.f32 %v1944, 0.0
        %v2185 = vmax.f32 %v1945, 0.0
        %v2186 = vmax.f32 %v1946, 0.0
        %v2187 = vmax.f32 %v1947, 0.0
        %v2188 = vmax.f32 %v1948, 0.0
        %v2189 = vmax.f32 %v1949, 0.0
        %v2190 = vmax.f32 %v1950, 0.0
        %v2191 = vmax.f32 %v1951, 0.0
        %v2192 = vmax.f32 %v1952, 0.0
        %v2193 = vmax.f32 %v1953, 0.0
        %v2194 = vmax.f32 %v1954, 0.0
        %v2195 = vmax.f32 %v1955, 0.0
        %v2196 = vmax.f32 %v1956, 0.0
        %v2197 = vmax.f32 %v1957, 0.0
        %v2198 = vmax.f32 %v1958, 0.0
        %v2199 = vmax.f32 %v1959, 0.0
        %v2200 = vmax.f32 %v1960, 0.0
        %v2201 = vmax.f32 %v1961, 0.0
        %v2202 = vmax.f32 %v1962, 0.0
        %v2203 = vmax.f32 %v1963, 0.0
        %v2204 = vmax.f32 %v1964, 0.0
        %v2205 = vmax.f32 %v1965, 0.0
        %v2206 = vmax.f32 %v1966, 0.0
        %v2207 = vmax.f32 %v1967, 0.0
        %v2208 = vmax.f32 %v1968, 0.0
        %v2209 = vmax.f32 %v1969, 0.0
        %v2210 = vmax.f32 %v1970, 0.0
        %v2211 = vmax.f32 %v1971, 0.0
        %v2212 = vmax.f32 %v1972, 0.0
        %v2213 = vmax.f32 %v1973, 0.0
        %v2214 = vmax.f32 %v1974, 0.0
        %v2215 = vmax.f32 %v1975, 0.0
        %v2216 = vmax.f32 %v1976, 0.0
        %v2217 = vmax.f32 %v1977, 0.0
        %v2218 = vmax.f32 %v1978, 0.0
        %v2219 = vmax.f32 %v1979, 0.0
        %v2220 = vmax.f32 %v1980, 0.0
        %v2221 = vmax.f32 %v1981, 0.0
        %v2222 = vmax.f32 %v1982, 0.0
        %v2223 = vmax.f32 %v1983, 0.0
        %v2224 = vmax.f32 %v1984, 0.0
        %v2225 = vmax.f32 %v1985, 0.0
        %v2226 = vmax.f32 %v1986, 0.0
        %v2227 = vmax.f32 %v1987, 0.0
        %v2228 = vmax.f32 %v1988, 0.0
        %v2229 = vmax.f32 %v1989, 0.0
        %v2230 = vmax.f32 %v1990, 0.0
        %v2231 = vmax.f32 %v1991, 0.0
        %v2232 = vmax.f32 %v1992, 0.0
        %v2233 = vmax.f32 %v1993, 0.0
        %v2234 = vmax.f32 %v1994, 0.0
        %v2235 = vmax.f32 %v1995, 0.0
        %v2236 = vmax.f32 %v1996, 0.0
        %v2237 = vmax.f32 %v1997, 0.0
        %v2238 = vmax.f32 %v1998, 0.0
        %v2239 = vmax.f32 %v1999, 0.0
        %v2240 = vmax.f32 %v2000, 0.0
        %v2241 = vmax.f32 %v2001, 0.0
        %v2242 = vmax.f32 %v2002, 0.0
        %v2243 = vmax.f32 %v2003, 0.0
        %v2244 = vmax.f32 %v2004, 0.0
        %v2245 = vmax.f32 %v2005, 0.0
        %v2246 = vmax.f32 %v2006, 0.0
        %v2247 = vmax.f32 %v2007, 0.0
        %v2248 = vmax.f32 %v2008, 0.0
        %v2249 = vmax.f32 %v2009, 0.0
        %v2250 = vmax.f32 %v2010, 0.0
        %v2251 = vmax.f32 %v2011, 0.0
        %v2252 = vmax.f32 %v2012, 0.0
        %v2253 = vmax.f32 %v2013, 0.0
        %v2254 = vmax.f32 %v2014, 0.0
        %v2255 = vmax.f32 %v2015, 0.0
        %v2256 = vmax.f32 %v2016, 0.0
        %v2257 = vmax.f32 %v2017, 0.0
        %v2258 = vmax.f32 %v2018, 0.0
        %v2259 = vmax.f32 %v2019, 0.0
        %v2260 = vmax.f32 %v2020, 0.0
        %v2261 = vmax.f32 %v2021, 0.0
        %v2262 = vmax.f32 %v2022, 0.0
        %v2263 = vmax.f32 %v2023, 0.0
        %v2264 = vmax.f32 %v2024, 0.0
        %v2265 = vmax.f32 %v2025, 0.0
        %v2266 = vmax.f32 %v2026, 0.0
        %v2267 = vmax.f32 %v2027, 0.0
        %v2268 = vmax.f32 %v2028, 0.0
        %v2269 = vmax.f32 %v2029, 0.0
        %v2270 = vmax.f32 %v2030, 0.0
        %v2271 = vmax.f32 %v2031, 0.0
        %v2272 = vmax.f32 %v2032, 0.0
        %v2273 = vmax.f32 %v2033, 0.0
        %v2274 = vmax.f32 %v2034, 0.0
        %v2275 = vmax.f32 %v2035, 0.0
        %v2276 = vmax.f32 %v2036, 0.0
        %v2277 = vmax.f32 %v2037, 0.0
        %v2278 = vmax.f32 %v2038, 0.0
        %v2279 = vmax.f32 %v2039, 0.0
        %v2280 = vmax.f32 %v2040, 0.0
        %v2281 = vmax.f32 %v2041, 0.0
        %v2282 = vmax.f32 %v2042, 0.0
        %v2283 = vmax.f32 %v2043, 0.0
        %v2284 = vmax.f32 %v2044, 0.0
        %v2285 = vmax.f32 %v2045, 0.0
        %v2286 = vmax.f32 %v2046, 0.0
        %v2287 = vmax.f32 %v2047, 0.0
        %v2288 = vmax.f32 %v2048, 0.0
        %v2289 = vmax.f32 %v2049, 0.0
        %v2290 = vmax.f32 %v2050, 0.0
        %v2291 = vmax.f32 %v2051, 0.0
        %v2292 = vmax.f32 %v2052, 0.0
        %v2293 = vmax.f32 %v2053, 0.0
        %v2294 = vmax.f32 %v2054, 0.0
        %v2295 = vmax.f32 %v2055, 0.0
        %v2296 = vmax.f32 %v2056, 0.0
        %v2297 = vmax.f32 %v2057, 0.0
        %v2298 = vmax.f32 %v2058, 0.0
        %v2299 = vmax.f32 %v2059, 0.0
        %v2300 = vmax.f32 %v2060, 0.0
        %v2301 = vmax.f32 %v2061, 0.0
        %v2302 = vmax.f32 %v2062, 0.0
        %v2303 = vmax.f32 %v2063, 0.0
        %v2304 = vmax.f32 %v2064, 0.0
        %v2305 = vmax.f32 %v2065, 0.0
        %v2306 = vmax.f32 %v2066, 0.0
        %v2307 = vmax.f32 %v2067, 0.0
        %v2308 = vmax.f32 %v2068, 0.0
        %v2309 = vmax.f32 %v2069, 0.0
        %v2310 = vmax.f32 %v2070, 0.0
        %v2311 = vmax.f32 %v2071, 0.0
        %v2312 = vmax.f32 %v2072, 0.0
        %v2313 = vmax.f32 %v2073, 0.0
        %v2314 = vmax.f32 %v2074, 0.0
        %v2315 = vmax.f32 %v2075, 0.0
        %v2316 = vmax.f32 %v2076, 0.0
        %v2317 = vmax.f32 %v2077, 0.0
        %v2318 = vmax.f32 %v2078, 0.0
        %v2319 = vmax.f32 %v2079, 0.0
        %v2320 = vmax.f32 %v2080, 0.0
        %v2321 = vmax.f32 %v2081, 0.0
        %v2322 = vmax.f32 %v2082, 0.0
        %v2323 = vmax.f32 %v2083, 0.0
        %v2324 = vmax.f32 %v2084, 0.0
        %v2325 = vmax.f32 %v2085, 0.0
        %v2326 = vmax.f32 %v2086, 0.0
        %v2327 = vmax.f32 %v2087, 0.0
        %v2328 = vmax.f32 %v2088, 0.0
        %v2329 = vmax.f32 %v2089, 0.0
        %v2330 = vmax.f32 %v2090, 0.0
        %v2331 = vmax.f32 %v2091, 0.0
        %v2332 = vmax.f32 %v2092, 0.0
        %v2333 = vmax.f32 %v2093, 0.0
        %v2334 = vmax.f32 %v2094, 0.0
        %v2335 = vmax.f32 %v2095, 0.0
        %v2336 = vmax.f32 %v2096, 0.0
        %v2337 = vmax.f32 %v2097, 0.0
        %v2338 = vmax.f32 %v2098, 0.0
        %v2339 = vmax.f32 %v2099, 0.0
        %v2340 = vmax.f32 %v2100, 0.0
        %v2341 = vmax.f32 %v2101, 0.0
        %v2342 = vmax.f32 %v2102, 0.0
        %v2343 = vmax.f32 %v2103, 0.0
        %v2344 = vrot.slane %v2104, 4
        %v2345 = vmax.f32 %v2104, %v2344
        %v2346 = vrot.slane %v2345, 2
        %v2347 = vmax.f32 %v2345, %v2346
        %v2348 = vrot.slane %v2347, 1
        %v2349 = vmax.f32 %v2347, %v2348
        %v2350 = vrot.slane %v2105, 4
        %v2351 = vmax.f32 %v2105, %v2350
        %v2352 = vrot.slane %v2351, 2
        %v2353 = vmax.f32 %v2351, %v2352
        %v2354 = vrot.slane %v2353, 1
        %v2355 = vmax.f32 %v2353, %v2354
        %v2356 = vrot.slane %v2106, 4
        %v2357 = vmax.f32 %v2106, %v2356
        %v2358 = vrot.slane %v2357, 2
        %v2359 = vmax.f32 %v2357, %v2358
        %v2360 = vrot.slane %v2359, 1
        %v2361 = vmax.f32 %v2359, %v2360
        %v2362 = vrot.slane %v2107, 4
        %v2363 = vmax.f32 %v2107, %v2362
        %v2364 = vrot.slane %v2363, 2
        %v2365 = vmax.f32 %v2363, %v2364
        %v2366 = vrot.slane %v2365, 1
        %v2367 = vmax.f32 %v2365, %v2366
        %v2368 = vrot.slane %v2108, 4
        %v2369 = vmax.f32 %v2108, %v2368
        %v2370 = vrot.slane %v2369, 2
        %v2371 = vmax.f32 %v2369, %v2370
        %v2372 = vrot.slane %v2371, 1
        %v2373 = vmax.f32 %v2371, %v2372
        %v2374 = vrot.slane %v2109, 4
        %v2375 = vmax.f32 %v2109, %v2374
        %v2376 = vrot.slane %v2375, 2
        %v2377 = vmax.f32 %v2375, %v2376
        %v2378 = vrot.slane %v2377, 1
        %v2379 = vmax.f32 %v2377, %v2378
        %v2380 = vrot.slane %v2110, 4
        %v2381 = vmax.f32 %v2110, %v2380
        %v2382 = vrot.slane %v2381, 2
        %v2383 = vmax.f32 %v2381, %v2382
        %v2384 = vrot.slane %v2383, 1
        %v2385 = vmax.f32 %v2383, %v2384
        %v2386 = vrot.slane %v2111, 4
        %v2387 = vmax.f32 %v2111, %v2386
        %v2388 = vrot.slane %v2387, 2
        %v2389 = vmax.f32 %v2387, %v2388
        %v2390 = vrot.slane %v2389, 1
        %v2391 = vmax.f32 %v2389, %v2390
        %v2392 = vrot.slane %v2112, 4
        %v2393 = vmax.f32 %v2112, %v2392
        %v2394 = vrot.slane %v2393, 2
        %v2395 = vmax.f32 %v2393, %v2394
        %v2396 = vrot.slane %v2395, 1
        %v2397 = vmax.f32 %v2395, %v2396
        %v2398 = vrot.slane %v2113, 4
        %v2399 = vmax.f32 %v2113, %v2398
        %v2400 = vrot.slane %v2399, 2
        %v2401 = vmax.f32 %v2399, %v2400
        %v2402 = vrot.slane %v2401, 1
        %v2403 = vmax.f32 %v2401, %v2402
        %v2404 = vrot.slane %v2114, 4
        %v2405 = vmax.f32 %v2114, %v2404
        %v2406 = vrot.slane %v2405, 2
        %v2407 = vmax.f32 %v2405, %v2406
        %v2408 = vrot.slane %v2407, 1
        %v2409 = vmax.f32 %v2407, %v2408
        %v2410 = vrot.slane %v2115, 4
        %v2411 = vmax.f32 %v2115, %v2410
        %v2412 = vrot.slane %v2411, 2
        %v2413 = vmax.f32 %v2411, %v2412
        %v2414 = vrot.slane %v2413, 1
        %v2415 = vmax.f32 %v2413, %v2414
        %v2416 = vrot.slane %v2116, 4
        %v2417 = vmax.f32 %v2116, %v2416
        %v2418 = vrot.slane %v2417, 2
        %v2419 = vmax.f32 %v2417, %v2418
        %v2420 = vrot.slane %v2419, 1
        %v2421 = vmax.f32 %v2419, %v2420
        %v2422 = vrot.slane %v2117, 4
        %v2423 = vmax.f32 %v2117, %v2422
        %v2424 = vrot.slane %v2423, 2
        %v2425 = vmax.f32 %v2423, %v2424
        %v2426 = vrot.slane %v2425, 1
        %v2427 = vmax.f32 %v2425, %v2426
        %v2428 = vrot.slane %v2118, 4
        %v2429 = vmax.f32 %v2118, %v2428
        %v2430 = vrot.slane %v2429, 2
        %v2431 = vmax.f32 %v2429, %v2430
        %v2432 = vrot.slane %v2431, 1
        %v2433 = vmax.f32 %v2431, %v2432
        %v2434 = vrot.slane %v2119, 4
        %v2435 = vmax.f32 %v2119, %v2434
        %v2436 = vrot.slane %v2435, 2
        %v2437 = vmax.f32 %v2435, %v2436
        %v2438 = vrot.slane %v2437, 1
        %v2439 = vmax.f32 %v2437, %v2438
        %v2440 = vrot.slane %v2120, 4
        %v2441 = vmax.f32 %v2120, %v2440
        %v2442 = vrot.slane %v2441, 2
        %v2443 = vmax.f32 %v2441, %v2442
        %v2444 = vrot.slane %v2443, 1
        %v2445 = vmax.f32 %v2443, %v2444
        %v2446 = vrot.slane %v2121, 4
        %v2447 = vmax.f32 %v2121, %v2446
        %v2448 = vrot.slane %v2447, 2
        %v2449 = vmax.f32 %v2447, %v2448
        %v2450 = vrot.slane %v2449, 1
        %v2451 = vmax.f32 %v2449, %v2450
        %v2452 = vrot.slane %v2122, 4
        %v2453 = vmax.f32 %v2122, %v2452
        %v2454 = vrot.slane %v2453, 2
        %v2455 = vmax.f32 %v2453, %v2454
        %v2456 = vrot.slane %v2455, 1
        %v2457 = vmax.f32 %v2455, %v2456
        %v2458 = vrot.slane %v2123, 4
        %v2459 = vmax.f32 %v2123, %v2458
        %v2460 = vrot.slane %v2459, 2
        %v2461 = vmax.f32 %v2459, %v2460
        %v2462 = vrot.slane %v2461, 1
        %v2463 = vmax.f32 %v2461, %v2462
        %v2464 = vrot.slane %v2124, 4
        %v2465 = vmax.f32 %v2124, %v2464
        %v2466 = vrot.slane %v2465, 2
        %v2467 = vmax.f32 %v2465, %v2466
        %v2468 = vrot.slane %v2467, 1
        %v2469 = vmax.f32 %v2467, %v2468
        %v2470 = vrot.slane %v2125, 4
        %v2471 = vmax.f32 %v2125, %v2470
        %v2472 = vrot.slane %v2471, 2
        %v2473 = vmax.f32 %v2471, %v2472
        %v2474 = vrot.slane %v2473, 1
        %v2475 = vmax.f32 %v2473, %v2474
        %v2476 = vrot.slane %v2126, 4
        %v2477 = vmax.f32 %v2126, %v2476
        %v2478 = vrot.slane %v2477, 2
        %v2479 = vmax.f32 %v2477, %v2478
        %v2480 = vrot.slane %v2479, 1
        %v2481 = vmax.f32 %v2479, %v2480
        %v2482 = vrot.slane %v2127, 4
        %v2483 = vmax.f32 %v2127, %v2482
        %v2484 = vrot.slane %v2483, 2
        %v2485 = vmax.f32 %v2483, %v2484
        %v2486 = vrot.slane %v2485, 1
        %v2487 = vmax.f32 %v2485, %v2486
        %v2488 = vrot.slane %v2128, 4
        %v2489 = vmax.f32 %v2128, %v2488
        %v2490 = vrot.slane %v2489, 2
        %v2491 = vmax.f32 %v2489, %v2490
        %v2492 = vrot.slane %v2491, 1
        %v2493 = vmax.f32 %v2491, %v2492
        %v2494 = vrot.slane %v2129, 4
        %v2495 = vmax.f32 %v2129, %v2494
        %v2496 = vrot.slane %v2495, 2
        %v2497 = vmax.f32 %v2495, %v2496
        %v2498 = vrot.slane %v2497, 1
        %v2499 = vmax.f32 %v2497, %v2498
        %v2500 = vrot.slane %v2130, 4
        %v2501 = vmax.f32 %v2130, %v2500
        %v2502 = vrot.slane %v2501, 2
        %v2503 = vmax.f32 %v2501, %v2502
        %v2504 = vrot.slane %v2503, 1
        %v2505 = vmax.f32 %v2503, %v2504
        %v2506 = vrot.slane %v2131, 4
        %v2507 = vmax.f32 %v2131, %v2506
        %v2508 = vrot.slane %v2507, 2
        %v2509 = vmax.f32 %v2507, %v2508
        %v2510 = vrot.slane %v2509, 1
        %v2511 = vmax.f32 %v2509, %v2510
        %v2512 = vrot.slane %v2132, 4
        %v2513 = vmax.f32 %v2132, %v2512
        %v2514 = vrot.slane %v2513, 2
        %v2515 = vmax.f32 %v2513, %v2514
        %v2516 = vrot.slane %v2515, 1
        %v2517 = vmax.f32 %v2515, %v2516
        %v2518 = vrot.slane %v2133, 4
        %v2519 = vmax.f32 %v2133, %v2518
        %v2520 = vrot.slane %v2519, 2
        %v2521 = vmax.f32 %v2519, %v2520
        %v2522 = vrot.slane %v2521, 1
        %v2523 = vmax.f32 %v2521, %v2522
        %v2524 = vrot.slane %v2134, 4
        %v2525 = vmax.f32 %v2134, %v2524
        %v2526 = vrot.slane %v2525, 2
        %v2527 = vmax.f32 %v2525, %v2526
        %v2528 = vrot.slane %v2527, 1
        %v2529 = vmax.f32 %v2527, %v2528
        %v2530 = vrot.slane %v2135, 4
        %v2531 = vmax.f32 %v2135, %v2530
        %v2532 = vrot.slane %v2531, 2
        %v2533 = vmax.f32 %v2531, %v2532
        %v2534 = vrot.slane %v2533, 1
        %v2535 = vmax.f32 %v2533, %v2534
        %v2536 = vrot.slane %v2136, 4
        %v2537 = vmax.f32 %v2136, %v2536
        %v2538 = vrot.slane %v2537, 2
        %v2539 = vmax.f32 %v2537, %v2538
        %v2540 = vrot.slane %v2539, 1
        %v2541 = vmax.f32 %v2539, %v2540
        %v2542 = vrot.slane %v2137, 4
        %v2543 = vmax.f32 %v2137, %v2542
        %v2544 = vrot.slane %v2543, 2
        %v2545 = vmax.f32 %v2543, %v2544
        %v2546 = vrot.slane %v2545, 1
        %v2547 = vmax.f32 %v2545, %v2546
        %v2548 = vrot.slane %v2138, 4
        %v2549 = vmax.f32 %v2138, %v2548
        %v2550 = vrot.slane %v2549, 2
        %v2551 = vmax.f32 %v2549, %v2550
        %v2552 = vrot.slane %v2551, 1
        %v2553 = vmax.f32 %v2551, %v2552
        %v2554 = vrot.slane %v2139, 4
        %v2555 = vmax.f32 %v2139, %v2554
        %v2556 = vrot.slane %v2555, 2
        %v2557 = vmax.f32 %v2555, %v2556
        %v2558 = vrot.slane %v2557, 1
        %v2559 = vmax.f32 %v2557, %v2558
        %v2560 = vrot.slane %v2140, 4
        %v2561 = vmax.f32 %v2140, %v2560
        %v2562 = vrot.slane %v2561, 2
        %v2563 = vmax.f32 %v2561, %v2562
        %v2564 = vrot.slane %v2563, 1
        %v2565 = vmax.f32 %v2563, %v2564
        %v2566 = vrot.slane %v2141, 4
        %v2567 = vmax.f32 %v2141, %v2566
        %v2568 = vrot.slane %v2567, 2
        %v2569 = vmax.f32 %v2567, %v2568
        %v2570 = vrot.slane %v2569, 1
        %v2571 = vmax.f32 %v2569, %v2570
        %v2572 = vrot.slane %v2142, 4
        %v2573 = vmax.f32 %v2142, %v2572
        %v2574 = vrot.slane %v2573, 2
        %v2575 = vmax.f32 %v2573, %v2574
        %v2576 = vrot.slane %v2575, 1
        %v2577 = vmax.f32 %v2575, %v2576
        %v2578 = vrot.slane %v2143, 4
        %v2579 = vmax.f32 %v2143, %v2578
        %v2580 = vrot.slane %v2579, 2
        %v2581 = vmax.f32 %v2579, %v2580
        %v2582 = vrot.slane %v2581, 1
        %v2583 = vmax.f32 %v2581, %v2582
        %v2584 = vrot.slane %v2144, 4
        %v2585 = vmax.f32 %v2144, %v2584
        %v2586 = vrot.slane %v2585, 2
        %v2587 = vmax.f32 %v2585, %v2586
        %v2588 = vrot.slane %v2587, 1
        %v2589 = vmax.f32 %v2587, %v2588
        %v2590 = vrot.slane %v2145, 4
        %v2591 = vmax.f32 %v2145, %v2590
        %v2592 = vrot.slane %v2591, 2
        %v2593 = vmax.f32 %v2591, %v2592
        %v2594 = vrot.slane %v2593, 1
        %v2595 = vmax.f32 %v2593, %v2594
        %v2596 = vrot.slane %v2146, 4
        %v2597 = vmax.f32 %v2146, %v2596
        %v2598 = vrot.slane %v2597, 2
        %v2599 = vmax.f32 %v2597, %v2598
        %v2600 = vrot.slane %v2599, 1
        %v2601 = vmax.f32 %v2599, %v2600
        %v2602 = vrot.slane %v2147, 4
        %v2603 = vmax.f32 %v2147, %v2602
        %v2604 = vrot.slane %v2603, 2
        %v2605 = vmax.f32 %v2603, %v2604
        %v2606 = vrot.slane %v2605, 1
        %v2607 = vmax.f32 %v2605, %v2606
        %v2608 = vrot.slane %v2148, 4
        %v2609 = vmax.f32 %v2148, %v2608
        %v2610 = vrot.slane %v2609, 2
        %v2611 = vmax.f32 %v2609, %v2610
        %v2612 = vrot.slane %v2611, 1
        %v2613 = vmax.f32 %v2611, %v2612
        %v2614 = vrot.slane %v2149, 4
        %v2615 = vmax.f32 %v2149, %v2614
        %v2616 = vrot.slane %v2615, 2
        %v2617 = vmax.f32 %v2615, %v2616
        %v2618 = vrot.slane %v2617, 1
        %v2619 = vmax.f32 %v2617, %v2618
        %v2620 = vrot.slane %v2150, 4
        %v2621 = vmax.f32 %v2150, %v2620
        %v2622 = vrot.slane %v2621, 2
        %v2623 = vmax.f32 %v2621, %v2622
        %v2624 = vrot.slane %v2623, 1
        %v2625 = vmax.f32 %v2623, %v2624
        %v2626 = vrot.slane %v2151, 4
        %v2627 = vmax.f32 %v2151, %v2626
        %v2628 = vrot.slane %v2627, 2
        %v2629 = vmax.f32 %v2627, %v2628
        %v2630 = vrot.slane %v2629, 1
        %v2631 = vmax.f32 %v2629, %v2630
        %v2632 = vrot.slane %v2152, 4
        %v2633 = vmax.f32 %v2152, %v2632
        %v2634 = vrot.slane %v2633, 2
        %v2635 = vmax.f32 %v2633, %v2634
        %v2636 = vrot.slane %v2635, 1
        %v2637 = vmax.f32 %v2635, %v2636
        %v2638 = vrot.slane %v2153, 4
        %v2639 = vmax.f32 %v2153, %v2638
        %v2640 = vrot.slane %v2639, 2
        %v2641 = vmax.f32 %v2639, %v2640
        %v2642 = vrot.slane %v2641, 1
        %v2643 = vmax.f32 %v2641, %v2642
        %v2644 = vrot.slane %v2154, 4
        %v2645 = vmax.f32 %v2154, %v2644
        %v2646 = vrot.slane %v2645, 2
        %v2647 = vmax.f32 %v2645, %v2646
        %v2648 = vrot.slane %v2647, 1
        %v2649 = vmax.f32 %v2647, %v2648
        %v2650 = vrot.slane %v2155, 4
        %v2651 = vmax.f32 %v2155, %v2650
        %v2652 = vrot.slane %v2651, 2
        %v2653 = vmax.f32 %v2651, %v2652
        %v2654 = vrot.slane %v2653, 1
        %v2655 = vmax.f32 %v2653, %v2654
        %v2656 = vrot.slane %v2156, 4
        %v2657 = vmax.f32 %v2156, %v2656
        %v2658 = vrot.slane %v2657, 2
        %v2659 = vmax.f32 %v2657, %v2658
        %v2660 = vrot.slane %v2659, 1
        %v2661 = vmax.f32 %v2659, %v2660
        %v2662 = vrot.slane %v2157, 4
        %v2663 = vmax.f32 %v2157, %v2662
        %v2664 = vrot.slane %v2663, 2
        %v2665 = vmax.f32 %v2663, %v2664
        %v2666 = vrot.slane %v2665, 1
        %v2667 = vmax.f32 %v2665, %v2666
        %v2668 = vrot.slane %v2158, 4
        %v2669 = vmax.f32 %v2158, %v2668
        %v2670 = vrot.slane %v2669, 2
        %v2671 = vmax.f32 %v2669, %v2670
        %v2672 = vrot.slane %v2671, 1
        %v2673 = vmax.f32 %v2671, %v2672
        %v2674 = vrot.slane %v2159, 4
        %v2675 = vmax.f32 %v2159, %v2674
        %v2676 = vrot.slane %v2675, 2
        %v2677 = vmax.f32 %v2675, %v2676
        %v2678 = vrot.slane %v2677, 1
        %v2679 = vmax.f32 %v2677, %v2678
        %v2680 = vrot.slane %v2160, 4
        %v2681 = vmax.f32 %v2160, %v2680
        %v2682 = vrot.slane %v2681, 2
        %v2683 = vmax.f32 %v2681, %v2682
        %v2684 = vrot.slane %v2683, 1
        %v2685 = vmax.f32 %v2683, %v2684
        %v2686 = vrot.slane %v2161, 4
        %v2687 = vmax.f32 %v2161, %v2686
        %v2688 = vrot.slane %v2687, 2
        %v2689 = vmax.f32 %v2687, %v2688
        %v2690 = vrot.slane %v2689, 1
        %v2691 = vmax.f32 %v2689, %v2690
        %v2692 = vrot.slane %v2162, 4
        %v2693 = vmax.f32 %v2162, %v2692
        %v2694 = vrot.slane %v2693, 2
        %v2695 = vmax.f32 %v2693, %v2694
        %v2696 = vrot.slane %v2695, 1
        %v2697 = vmax.f32 %v2695, %v2696
        %v2698 = vrot.slane %v2163, 4
        %v2699 = vmax.f32 %v2163, %v2698
        %v2700 = vrot.slane %v2699, 2
        %v2701 = vmax.f32 %v2699, %v2700
        %v2702 = vrot.slane %v2701, 1
        %v2703 = vmax.f32 %v2701, %v2702
        %v2704 = vrot.slane %v2164, 4
        %v2705 = vmax.f32 %v2164, %v2704
        %v2706 = vrot.slane %v2705, 2
        %v2707 = vmax.f32 %v2705, %v2706
        %v2708 = vrot.slane %v2707, 1
        %v2709 = vmax.f32 %v2707, %v2708
        %v2710 = vrot.slane %v2165, 4
        %v2711 = vmax.f32 %v2165, %v2710
        %v2712 = vrot.slane %v2711, 2
        %v2713 = vmax.f32 %v2711, %v2712
        %v2714 = vrot.slane %v2713, 1
        %v2715 = vmax.f32 %v2713, %v2714
        %v2716 = vrot.slane %v2166, 4
        %v2717 = vmax.f32 %v2166, %v2716
        %v2718 = vrot.slane %v2717, 2
        %v2719 = vmax.f32 %v2717, %v2718
        %v2720 = vrot.slane %v2719, 1
        %v2721 = vmax.f32 %v2719, %v2720
        %v2722 = vrot.slane %v2167, 4
        %v2723 = vmax.f32 %v2167, %v2722
        %v2724 = vrot.slane %v2723, 2
        %v2725 = vmax.f32 %v2723, %v2724
        %v2726 = vrot.slane %v2725, 1
        %v2727 = vmax.f32 %v2725, %v2726
        %v2728 = vrot.slane %v2168, 4
        %v2729 = vmax.f32 %v2168, %v2728
        %v2730 = vrot.slane %v2729, 2
        %v2731 = vmax.f32 %v2729, %v2730
        %v2732 = vrot.slane %v2731, 1
        %v2733 = vmax.f32 %v2731, %v2732
        %v2734 = vrot.slane %v2169, 4
        %v2735 = vmax.f32 %v2169, %v2734
        %v2736 = vrot.slane %v2735, 2
        %v2737 = vmax.f32 %v2735, %v2736
        %v2738 = vrot.slane %v2737, 1
        %v2739 = vmax.f32 %v2737, %v2738
        %v2740 = vrot.slane %v2170, 4
        %v2741 = vmax.f32 %v2170, %v2740
        %v2742 = vrot.slane %v2741, 2
        %v2743 = vmax.f32 %v2741, %v2742
        %v2744 = vrot.slane %v2743, 1
        %v2745 = vmax.f32 %v2743, %v2744
        %v2746 = vrot.slane %v2171, 4
        %v2747 = vmax.f32 %v2171, %v2746
        %v2748 = vrot.slane %v2747, 2
        %v2749 = vmax.f32 %v2747, %v2748
        %v2750 = vrot.slane %v2749, 1
        %v2751 = vmax.f32 %v2749, %v2750
        %v2752 = vrot.slane %v2172, 4
        %v2753 = vmax.f32 %v2172, %v2752
        %v2754 = vrot.slane %v2753, 2
        %v2755 = vmax.f32 %v2753, %v2754
        %v2756 = vrot.slane %v2755, 1
        %v2757 = vmax.f32 %v2755, %v2756
        %v2758 = vrot.slane %v2173, 4
        %v2759 = vmax.f32 %v2173, %v2758
        %v2760 = vrot.slane %v2759, 2
        %v2761 = vmax.f32 %v2759, %v2760
        %v2762 = vrot.slane %v2761, 1
        %v2763 = vmax.f32 %v2761, %v2762
        %v2764 = vrot.slane %v2174, 4
        %v2765 = vmax.f32 %v2174, %v2764
        %v2766 = vrot.slane %v2765, 2
        %v2767 = vmax.f32 %v2765, %v2766
        %v2768 = vrot.slane %v2767, 1
        %v2769 = vmax.f32 %v2767, %v2768
        %v2770 = vrot.slane %v2175, 4
        %v2771 = vmax.f32 %v2175, %v2770
        %v2772 = vrot.slane %v2771, 2
        %v2773 = vmax.f32 %v2771, %v2772
        %v2774 = vrot.slane %v2773, 1
        %v2775 = vmax.f32 %v2773, %v2774
        %v2776 = vrot.slane %v2176, 4
        %v2777 = vmax.f32 %v2176, %v2776
        %v2778 = vrot.slane %v2777, 2
        %v2779 = vmax.f32 %v2777, %v2778
        %v2780 = vrot.slane %v2779, 1
        %v2781 = vmax.f32 %v2779, %v2780
        %v2782 = vrot.slane %v2177, 4
        %v2783 = vmax.f32 %v2177, %v2782
        %v2784 = vrot.slane %v2783, 2
        %v2785 = vmax.f32 %v2783, %v2784
        %v2786 = vrot.slane %v2785, 1
        %v2787 = vmax.f32 %v2785, %v2786
        %v2788 = vrot.slane %v2178, 4
        %v2789 = vmax.f32 %v2178, %v2788
        %v2790 = vrot.slane %v2789, 2
        %v2791 = vmax.f32 %v2789, %v2790
        %v2792 = vrot.slane %v2791, 1
        %v2793 = vmax.f32 %v2791, %v2792
        %v2794 = vrot.slane %v2179, 4
        %v2795 = vmax.f32 %v2179, %v2794
        %v2796 = vrot.slane %v2795, 2
        %v2797 = vmax.f32 %v2795, %v2796
        %v2798 = vrot.slane %v2797, 1
        %v2799 = vmax.f32 %v2797, %v2798
        %v2800 = vrot.slane %v2180, 4
        %v2801 = vmax.f32 %v2180, %v2800
        %v2802 = vrot.slane %v2801, 2
        %v2803 = vmax.f32 %v2801, %v2802
        %v2804 = vrot.slane %v2803, 1
        %v2805 = vmax.f32 %v2803, %v2804
        %v2806 = vrot.slane %v2181, 4
        %v2807 = vmax.f32 %v2181, %v2806
        %v2808 = vrot.slane %v2807, 2
        %v2809 = vmax.f32 %v2807, %v2808
        %v2810 = vrot.slane %v2809, 1
        %v2811 = vmax.f32 %v2809, %v2810
        %v2812 = vrot.slane %v2182, 4
        %v2813 = vmax.f32 %v2182, %v2812
        %v2814 = vrot.slane %v2813, 2
        %v2815 = vmax.f32 %v2813, %v2814
        %v2816 = vrot.slane %v2815, 1
        %v2817 = vmax.f32 %v2815, %v2816
        %v2818 = vrot.slane %v2183, 4
        %v2819 = vmax.f32 %v2183, %v2818
        %v2820 = vrot.slane %v2819, 2
        %v2821 = vmax.f32 %v2819, %v2820
        %v2822 = vrot.slane %v2821, 1
        %v2823 = vmax.f32 %v2821, %v2822
        %v2824 = vrot.slane %v2184, 4
        %v2825 = vmax.f32 %v2184, %v2824
        %v2826 = vrot.slane %v2825, 2
        %v2827 = vmax.f32 %v2825, %v2826
        %v2828 = vrot.slane %v2827, 1
        %v2829 = vmax.f32 %v2827, %v2828
        %v2830 = vrot.slane %v2185, 4
        %v2831 = vmax.f32 %v2185, %v2830
        %v2832 = vrot.slane %v2831, 2
        %v2833 = vmax.f32 %v2831, %v2832
        %v2834 = vrot.slane %v2833, 1
        %v2835 = vmax.f32 %v2833, %v2834
        %v2836 = vrot.slane %v2186, 4
        %v2837 = vmax.f32 %v2186, %v2836
        %v2838 = vrot.slane %v2837, 2
        %v2839 = vmax.f32 %v2837, %v2838
        %v2840 = vrot.slane %v2839, 1
        %v2841 = vmax.f32 %v2839, %v2840
        %v2842 = vrot.slane %v2187, 4
        %v2843 = vmax.f32 %v2187, %v2842
        %v2844 = vrot.slane %v2843, 2
        %v2845 = vmax.f32 %v2843, %v2844
        %v2846 = vrot.slane %v2845, 1
        %v2847 = vmax.f32 %v2845, %v2846
        %v2848 = vrot.slane %v2188, 4
        %v2849 = vmax.f32 %v2188, %v2848
        %v2850 = vrot.slane %v2849, 2
        %v2851 = vmax.f32 %v2849, %v2850
        %v2852 = vrot.slane %v2851, 1
        %v2853 = vmax.f32 %v2851, %v2852
        %v2854 = vrot.slane %v2189, 4
        %v2855 = vmax.f32 %v2189, %v2854
        %v2856 = vrot.slane %v2855, 2
        %v2857 = vmax.f32 %v2855, %v2856
        %v2858 = vrot.slane %v2857, 1
        %v2859 = vmax.f32 %v2857, %v2858
        %v2860 = vrot.slane %v2190, 4
        %v2861 = vmax.f32 %v2190, %v2860
        %v2862 = vrot.slane %v2861, 2
        %v2863 = vmax.f32 %v2861, %v2862
        %v2864 = vrot.slane %v2863, 1
        %v2865 = vmax.f32 %v2863, %v2864
        %v2866 = vrot.slane %v2191, 4
        %v2867 = vmax.f32 %v2191, %v2866
        %v2868 = vrot.slane %v2867, 2
        %v2869 = vmax.f32 %v2867, %v2868
        %v2870 = vrot.slane %v2869, 1
        %v2871 = vmax.f32 %v2869, %v2870
        %v2872 = vrot.slane %v2192, 4
        %v2873 = vmax.f32 %v2192, %v2872
        %v2874 = vrot.slane %v2873, 2
        %v2875 = vmax.f32 %v2873, %v2874
        %v2876 = vrot.slane %v2875, 1
        %v2877 = vmax.f32 %v2875, %v2876
        %v2878 = vrot.slane %v2193, 4
        %v2879 = vmax.f32 %v2193, %v2878
        %v2880 = vrot.slane %v2879, 2
        %v2881 = vmax.f32 %v2879, %v2880
        %v2882 = vrot.slane %v2881, 1
        %v2883 = vmax.f32 %v2881, %v2882
        %v2884 = vrot.slane %v2194, 4
        %v2885 = vmax.f32 %v2194, %v2884
        %v2886 = vrot.slane %v2885, 2
        %v2887 = vmax.f32 %v2885, %v2886
        %v2888 = vrot.slane %v2887, 1
        %v2889 = vmax.f32 %v2887, %v2888
        %v2890 = vrot.slane %v2195, 4
        %v2891 = vmax.f32 %v2195, %v2890
        %v2892 = vrot.slane %v2891, 2
        %v2893 = vmax.f32 %v2891, %v2892
        %v2894 = vrot.slane %v2893, 1
        %v2895 = vmax.f32 %v2893, %v2894
        %v2896 = vrot.slane %v2196, 4
        %v2897 = vmax.f32 %v2196, %v2896
        %v2898 = vrot.slane %v2897, 2
        %v2899 = vmax.f32 %v2897, %v2898
        %v2900 = vrot.slane %v2899, 1
        %v2901 = vmax.f32 %v2899, %v2900
        %v2902 = vrot.slane %v2197, 4
        %v2903 = vmax.f32 %v2197, %v2902
        %v2904 = vrot.slane %v2903, 2
        %v2905 = vmax.f32 %v2903, %v2904
        %v2906 = vrot.slane %v2905, 1
        %v2907 = vmax.f32 %v2905, %v2906
        %v2908 = vrot.slane %v2198, 4
        %v2909 = vmax.f32 %v2198, %v2908
        %v2910 = vrot.slane %v2909, 2
        %v2911 = vmax.f32 %v2909, %v2910
        %v2912 = vrot.slane %v2911, 1
        %v2913 = vmax.f32 %v2911, %v2912
        %v2914 = vrot.slane %v2199, 4
        %v2915 = vmax.f32 %v2199, %v2914
        %v2916 = vrot.slane %v2915, 2
        %v2917 = vmax.f32 %v2915, %v2916
        %v2918 = vrot.slane %v2917, 1
        %v2919 = vmax.f32 %v2917, %v2918
        %v2920 = vrot.slane %v2200, 4
        %v2921 = vmax.f32 %v2200, %v2920
        %v2922 = vrot.slane %v2921, 2
        %v2923 = vmax.f32 %v2921, %v2922
        %v2924 = vrot.slane %v2923, 1
        %v2925 = vmax.f32 %v2923, %v2924
        %v2926 = vrot.slane %v2201, 4
        %v2927 = vmax.f32 %v2201, %v2926
        %v2928 = vrot.slane %v2927, 2
        %v2929 = vmax.f32 %v2927, %v2928
        %v2930 = vrot.slane %v2929, 1
        %v2931 = vmax.f32 %v2929, %v2930
        %v2932 = vrot.slane %v2202, 4
        %v2933 = vmax.f32 %v2202, %v2932
        %v2934 = vrot.slane %v2933, 2
        %v2935 = vmax.f32 %v2933, %v2934
        %v2936 = vrot.slane %v2935, 1
        %v2937 = vmax.f32 %v2935, %v2936
        %v2938 = vrot.slane %v2203, 4
        %v2939 = vmax.f32 %v2203, %v2938
        %v2940 = vrot.slane %v2939, 2
        %v2941 = vmax.f32 %v2939, %v2940
        %v2942 = vrot.slane %v2941, 1
        %v2943 = vmax.f32 %v2941, %v2942
        %v2944 = vrot.slane %v2204, 4
        %v2945 = vmax.f32 %v2204, %v2944
        %v2946 = vrot.slane %v2945, 2
        %v2947 = vmax.f32 %v2945, %v2946
        %v2948 = vrot.slane %v2947, 1
        %v2949 = vmax.f32 %v2947, %v2948
        %v2950 = vrot.slane %v2205, 4
        %v2951 = vmax.f32 %v2205, %v2950
        %v2952 = vrot.slane %v2951, 2
        %v2953 = vmax.f32 %v2951, %v2952
        %v2954 = vrot.slane %v2953, 1
        %v2955 = vmax.f32 %v2953, %v2954
        %v2956 = vrot.slane %v2206, 4
        %v2957 = vmax.f32 %v2206, %v2956
        %v2958 = vrot.slane %v2957, 2
        %v2959 = vmax.f32 %v2957, %v2958
        %v2960 = vrot.slane %v2959, 1
        %v2961 = vmax.f32 %v2959, %v2960
        %v2962 = vrot.slane %v2207, 4
        %v2963 = vmax.f32 %v2207, %v2962
        %v2964 = vrot.slane %v2963, 2
        %v2965 = vmax.f32 %v2963, %v2964
        %v2966 = vrot.slane %v2965, 1
        %v2967 = vmax.f32 %v2965, %v2966
        %v2968 = vrot.slane %v2208, 4
        %v2969 = vmax.f32 %v2208, %v2968
        %v2970 = vrot.slane %v2969, 2
        %v2971 = vmax.f32 %v2969, %v2970
        %v2972 = vrot.slane %v2971, 1
        %v2973 = vmax.f32 %v2971, %v2972
        %v2974 = vrot.slane %v2209, 4
        %v2975 = vmax.f32 %v2209, %v2974
        %v2976 = vrot.slane %v2975, 2
        %v2977 = vmax.f32 %v2975, %v2976
        %v2978 = vrot.slane %v2977, 1
        %v2979 = vmax.f32 %v2977, %v2978
        %v2980 = vrot.slane %v2210, 4
        %v2981 = vmax.f32 %v2210, %v2980
        %v2982 = vrot.slane %v2981, 2
        %v2983 = vmax.f32 %v2981, %v2982
        %v2984 = vrot.slane %v2983, 1
        %v2985 = vmax.f32 %v2983, %v2984
        %v2986 = vrot.slane %v2211, 4
        %v2987 = vmax.f32 %v2211, %v2986
        %v2988 = vrot.slane %v2987, 2
        %v2989 = vmax.f32 %v2987, %v2988
        %v2990 = vrot.slane %v2989, 1
        %v2991 = vmax.f32 %v2989, %v2990
        %v2992 = vrot.slane %v2212, 4
        %v2993 = vmax.f32 %v2212, %v2992
        %v2994 = vrot.slane %v2993, 2
        %v2995 = vmax.f32 %v2993, %v2994
        %v2996 = vrot.slane %v2995, 1
        %v2997 = vmax.f32 %v2995, %v2996
        %v2998 = vrot.slane %v2213, 4
        %v2999 = vmax.f32 %v2213, %v2998
        %v3000 = vrot.slane %v2999, 2
        %v3001 = vmax.f32 %v2999, %v3000
        %v3002 = vrot.slane %v3001, 1
        %v3003 = vmax.f32 %v3001, %v3002
        %v3004 = vrot.slane %v2214, 4
        %v3005 = vmax.f32 %v2214, %v3004
        %v3006 = vrot.slane %v3005, 2
        %v3007 = vmax.f32 %v3005, %v3006
        %v3008 = vrot.slane %v3007, 1
        %v3009 = vmax.f32 %v3007, %v3008
        %v3010 = vrot.slane %v2215, 4
        %v3011 = vmax.f32 %v2215, %v3010
        %v3012 = vrot.slane %v3011, 2
        %v3013 = vmax.f32 %v3011, %v3012
        %v3014 = vrot.slane %v3013, 1
        %v3015 = vmax.f32 %v3013, %v3014
        %v3016 = vrot.slane %v2216, 4
        %v3017 = vmax.f32 %v2216, %v3016
        %v3018 = vrot.slane %v3017, 2
        %v3019 = vmax.f32 %v3017, %v3018
        %v3020 = vrot.slane %v3019, 1
        %v3021 = vmax.f32 %v3019, %v3020
        %v3022 = vrot.slane %v2217, 4
        %v3023 = vmax.f32 %v2217, %v3022
        %v3024 = vrot.slane %v3023, 2
        %v3025 = vmax.f32 %v3023, %v3024
        %v3026 = vrot.slane %v3025, 1
        %v3027 = vmax.f32 %v3025, %v3026
        %v3028 = vrot.slane %v2218, 4
        %v3029 = vmax.f32 %v2218, %v3028
        %v3030 = vrot.slane %v3029, 2
        %v3031 = vmax.f32 %v3029, %v3030
        %v3032 = vrot.slane %v3031, 1
        %v3033 = vmax.f32 %v3031, %v3032
        %v3034 = vrot.slane %v2219, 4
        %v3035 = vmax.f32 %v2219, %v3034
        %v3036 = vrot.slane %v3035, 2
        %v3037 = vmax.f32 %v3035, %v3036
        %v3038 = vrot.slane %v3037, 1
        %v3039 = vmax.f32 %v3037, %v3038
        %v3040 = vrot.slane %v2220, 4
        %v3041 = vmax.f32 %v2220, %v3040
        %v3042 = vrot.slane %v3041, 2
        %v3043 = vmax.f32 %v3041, %v3042
        %v3044 = vrot.slane %v3043, 1
        %v3045 = vmax.f32 %v3043, %v3044
        %v3046 = vrot.slane %v2221, 4
        %v3047 = vmax.f32 %v2221, %v3046
        %v3048 = vrot.slane %v3047, 2
        %v3049 = vmax.f32 %v3047, %v3048
        %v3050 = vrot.slane %v3049, 1
        %v3051 = vmax.f32 %v3049, %v3050
        %v3052 = vrot.slane %v2222, 4
        %v3053 = vmax.f32 %v2222, %v3052
        %v3054 = vrot.slane %v3053, 2
        %v3055 = vmax.f32 %v3053, %v3054
        %v3056 = vrot.slane %v3055, 1
        %v3057 = vmax.f32 %v3055, %v3056
        %v3058 = vrot.slane %v2223, 4
        %v3059 = vmax.f32 %v2223, %v3058
        %v3060 = vrot.slane %v3059, 2
        %v3061 = vmax.f32 %v3059, %v3060
        %v3062 = vrot.slane %v3061, 1
        %v3063 = vmax.f32 %v3061, %v3062
        %v3064 = vrot.slane %v2224, 4
        %v3065 = vmax.f32 %v2224, %v3064
        %v3066 = vrot.slane %v3065, 2
        %v3067 = vmax.f32 %v3065, %v3066
        %v3068 = vrot.slane %v3067, 1
        %v3069 = vmax.f32 %v3067, %v3068
        %v3070 = vrot.slane %v2225, 4
        %v3071 = vmax.f32 %v2225, %v3070
        %v3072 = vrot.slane %v3071, 2
        %v3073 = vmax.f32 %v3071, %v3072
        %v3074 = vrot.slane %v3073, 1
        %v3075 = vmax.f32 %v3073, %v3074
        %v3076 = vrot.slane %v2226, 4
        %v3077 = vmax.f32 %v2226, %v3076
        %v3078 = vrot.slane %v3077, 2
        %v3079 = vmax.f32 %v3077, %v3078
        %v3080 = vrot.slane %v3079, 1
        %v3081 = vmax.f32 %v3079, %v3080
        %v3082 = vrot.slane %v2227, 4
        %v3083 = vmax.f32 %v2227, %v3082
        %v3084 = vrot.slane %v3083, 2
        %v3085 = vmax.f32 %v3083, %v3084
        %v3086 = vrot.slane %v3085, 1
        %v3087 = vmax.f32 %v3085, %v3086
        %v3088 = vrot.slane %v2228, 4
        %v3089 = vmax.f32 %v2228, %v3088
        %v3090 = vrot.slane %v3089, 2
        %v3091 = vmax.f32 %v3089, %v3090
        %v3092 = vrot.slane %v3091, 1
        %v3093 = vmax.f32 %v3091, %v3092
        %v3094 = vrot.slane %v2229, 4
        %v3095 = vmax.f32 %v2229, %v3094
        %v3096 = vrot.slane %v3095, 2
        %v3097 = vmax.f32 %v3095, %v3096
        %v3098 = vrot.slane %v3097, 1
        %v3099 = vmax.f32 %v3097, %v3098
        %v3100 = vrot.slane %v2230, 4
        %v3101 = vmax.f32 %v2230, %v3100
        %v3102 = vrot.slane %v3101, 2
        %v3103 = vmax.f32 %v3101, %v3102
        %v3104 = vrot.slane %v3103, 1
        %v3105 = vmax.f32 %v3103, %v3104
        %v3106 = vrot.slane %v2231, 4
        %v3107 = vmax.f32 %v2231, %v3106
        %v3108 = vrot.slane %v3107, 2
        %v3109 = vmax.f32 %v3107, %v3108
        %v3110 = vrot.slane %v3109, 1
        %v3111 = vmax.f32 %v3109, %v3110
        %v3112 = vrot.slane %v2232, 4
        %v3113 = vmax.f32 %v2232, %v3112
        %v3114 = vrot.slane %v3113, 2
        %v3115 = vmax.f32 %v3113, %v3114
        %v3116 = vrot.slane %v3115, 1
        %v3117 = vmax.f32 %v3115, %v3116
        %v3118 = vrot.slane %v2233, 4
        %v3119 = vmax.f32 %v2233, %v3118
        %v3120 = vrot.slane %v3119, 2
        %v3121 = vmax.f32 %v3119, %v3120
        %v3122 = vrot.slane %v3121, 1
        %v3123 = vmax.f32 %v3121, %v3122
        %v3124 = vrot.slane %v2234, 4
        %v3125 = vmax.f32 %v2234, %v3124
        %v3126 = vrot.slane %v3125, 2
        %v3127 = vmax.f32 %v3125, %v3126
        %v3128 = vrot.slane %v3127, 1
        %v3129 = vmax.f32 %v3127, %v3128
        %v3130 = vrot.slane %v2235, 4
        %v3131 = vmax.f32 %v2235, %v3130
        %v3132 = vrot.slane %v3131, 2
        %v3133 = vmax.f32 %v3131, %v3132
        %v3134 = vrot.slane %v3133, 1
        %v3135 = vmax.f32 %v3133, %v3134
        %v3136 = vrot.slane %v2236, 4
        %v3137 = vmax.f32 %v2236, %v3136
        %v3138 = vrot.slane %v3137, 2
        %v3139 = vmax.f32 %v3137, %v3138
        %v3140 = vrot.slane %v3139, 1
        %v3141 = vmax.f32 %v3139, %v3140
        %v3142 = vrot.slane %v2237, 4
        %v3143 = vmax.f32 %v2237, %v3142
        %v3144 = vrot.slane %v3143, 2
        %v3145 = vmax.f32 %v3143, %v3144
        %v3146 = vrot.slane %v3145, 1
        %v3147 = vmax.f32 %v3145, %v3146
        %v3148 = vrot.slane %v2238, 4
        %v3149 = vmax.f32 %v2238, %v3148
        %v3150 = vrot.slane %v3149, 2
        %v3151 = vmax.f32 %v3149, %v3150
        %v3152 = vrot.slane %v3151, 1
        %v3153 = vmax.f32 %v3151, %v3152
        %v3154 = vrot.slane %v2239, 4
        %v3155 = vmax.f32 %v2239, %v3154
        %v3156 = vrot.slane %v3155, 2
        %v3157 = vmax.f32 %v3155, %v3156
        %v3158 = vrot.slane %v3157, 1
        %v3159 = vmax.f32 %v3157, %v3158
        %v3160 = vrot.slane %v2240, 4
        %v3161 = vmax.f32 %v2240, %v3160
        %v3162 = vrot.slane %v3161, 2
        %v3163 = vmax.f32 %v3161, %v3162
        %v3164 = vrot.slane %v3163, 1
        %v3165 = vmax.f32 %v3163, %v3164
        %v3166 = vrot.slane %v2241, 4
        %v3167 = vmax.f32 %v2241, %v3166
        %v3168 = vrot.slane %v3167, 2
        %v3169 = vmax.f32 %v3167, %v3168
        %v3170 = vrot.slane %v3169, 1
        %v3171 = vmax.f32 %v3169, %v3170
        %v3172 = vrot.slane %v2242, 4
        %v3173 = vmax.f32 %v2242, %v3172
        %v3174 = vrot.slane %v3173, 2
        %v3175 = vmax.f32 %v3173, %v3174
        %v3176 = vrot.slane %v3175, 1
        %v3177 = vmax.f32 %v3175, %v3176
        %v3178 = vrot.slane %v2243, 4
        %v3179 = vmax.f32 %v2243, %v3178
        %v3180 = vrot.slane %v3179, 2
        %v3181 = vmax.f32 %v3179, %v3180
        %v3182 = vrot.slane %v3181, 1
        %v3183 = vmax.f32 %v3181, %v3182
        %v3184 = vrot.slane %v2244, 4
        %v3185 = vmax.f32 %v2244, %v3184
        %v3186 = vrot.slane %v3185, 2
        %v3187 = vmax.f32 %v3185, %v3186
        %v3188 = vrot.slane %v3187, 1
        %v3189 = vmax.f32 %v3187, %v3188
        %v3190 = vrot.slane %v2245, 4
        %v3191 = vmax.f32 %v2245, %v3190
        %v3192 = vrot.slane %v3191, 2
        %v3193 = vmax.f32 %v3191, %v3192
        %v3194 = vrot.slane %v3193, 1
        %v3195 = vmax.f32 %v3193, %v3194
        %v3196 = vrot.slane %v2246, 4
        %v3197 = vmax.f32 %v2246, %v3196
        %v3198 = vrot.slane %v3197, 2
        %v3199 = vmax.f32 %v3197, %v3198
        %v3200 = vrot.slane %v3199, 1
        %v3201 = vmax.f32 %v3199, %v3200
        %v3202 = vrot.slane %v2247, 4
        %v3203 = vmax.f32 %v2247, %v3202
        %v3204 = vrot.slane %v3203, 2
        %v3205 = vmax.f32 %v3203, %v3204
        %v3206 = vrot.slane %v3205, 1
        %v3207 = vmax.f32 %v3205, %v3206
        %v3208 = vrot.slane %v2248, 4
        %v3209 = vmax.f32 %v2248, %v3208
        %v3210 = vrot.slane %v3209, 2
        %v3211 = vmax.f32 %v3209, %v3210
        %v3212 = vrot.slane %v3211, 1
        %v3213 = vmax.f32 %v3211, %v3212
        %v3214 = vrot.slane %v2249, 4
        %v3215 = vmax.f32 %v2249, %v3214
        %v3216 = vrot.slane %v3215, 2
        %v3217 = vmax.f32 %v3215, %v3216
        %v3218 = vrot.slane %v3217, 1
        %v3219 = vmax.f32 %v3217, %v3218
        %v3220 = vrot.slane %v2250, 4
        %v3221 = vmax.f32 %v2250, %v3220
        %v3222 = vrot.slane %v3221, 2
        %v3223 = vmax.f32 %v3221, %v3222
        %v3224 = vrot.slane %v3223, 1
        %v3225 = vmax.f32 %v3223, %v3224
        %v3226 = vrot.slane %v2251, 4
        %v3227 = vmax.f32 %v2251, %v3226
        %v3228 = vrot.slane %v3227, 2
        %v3229 = vmax.f32 %v3227, %v3228
        %v3230 = vrot.slane %v3229, 1
        %v3231 = vmax.f32 %v3229, %v3230
        %v3232 = vrot.slane %v2252, 4
        %v3233 = vmax.f32 %v2252, %v3232
        %v3234 = vrot.slane %v3233, 2
        %v3235 = vmax.f32 %v3233, %v3234
        %v3236 = vrot.slane %v3235, 1
        %v3237 = vmax.f32 %v3235, %v3236
        %v3238 = vrot.slane %v2253, 4
        %v3239 = vmax.f32 %v2253, %v3238
        %v3240 = vrot.slane %v3239, 2
        %v3241 = vmax.f32 %v3239, %v3240
        %v3242 = vrot.slane %v3241, 1
        %v3243 = vmax.f32 %v3241, %v3242
        %v3244 = vrot.slane %v2254, 4
        %v3245 = vmax.f32 %v2254, %v3244
        %v3246 = vrot.slane %v3245, 2
        %v3247 = vmax.f32 %v3245, %v3246
        %v3248 = vrot.slane %v3247, 1
        %v3249 = vmax.f32 %v3247, %v3248
        %v3250 = vrot.slane %v2255, 4
        %v3251 = vmax.f32 %v2255, %v3250
        %v3252 = vrot.slane %v3251, 2
        %v3253 = vmax.f32 %v3251, %v3252
        %v3254 = vrot.slane %v3253, 1
        %v3255 = vmax.f32 %v3253, %v3254
        %v3256 = vrot.slane %v2256, 4
        %v3257 = vmax.f32 %v2256, %v3256
        %v3258 = vrot.slane %v3257, 2
        %v3259 = vmax.f32 %v3257, %v3258
        %v3260 = vrot.slane %v3259, 1
        %v3261 = vmax.f32 %v3259, %v3260
        %v3262 = vrot.slane %v2257, 4
        %v3263 = vmax.f32 %v2257, %v3262
        %v3264 = vrot.slane %v3263, 2
        %v3265 = vmax.f32 %v3263, %v3264
        %v3266 = vrot.slane %v3265, 1
        %v3267 = vmax.f32 %v3265, %v3266
        %v3268 = vrot.slane %v2258, 4
        %v3269 = vmax.f32 %v2258, %v3268
        %v3270 = vrot.slane %v3269, 2
        %v3271 = vmax.f32 %v3269, %v3270
        %v3272 = vrot.slane %v3271, 1
        %v3273 = vmax.f32 %v3271, %v3272
        %v3274 = vrot.slane %v2259, 4
        %v3275 = vmax.f32 %v2259, %v3274
        %v3276 = vrot.slane %v3275, 2
        %v3277 = vmax.f32 %v3275, %v3276
        %v3278 = vrot.slane %v3277, 1
        %v3279 = vmax.f32 %v3277, %v3278
        %v3280 = vrot.slane %v2260, 4
        %v3281 = vmax.f32 %v2260, %v3280
        %v3282 = vrot.slane %v3281, 2
        %v3283 = vmax.f32 %v3281, %v3282
        %v3284 = vrot.slane %v3283, 1
        %v3285 = vmax.f32 %v3283, %v3284
        %v3286 = vrot.slane %v2261, 4
        %v3287 = vmax.f32 %v2261, %v3286
        %v3288 = vrot.slane %v3287, 2
        %v3289 = vmax.f32 %v3287, %v3288
        %v3290 = vrot.slane %v3289, 1
        %v3291 = vmax.f32 %v3289, %v3290
        %v3292 = vrot.slane %v2262, 4
        %v3293 = vmax.f32 %v2262, %v3292
        %v3294 = vrot.slane %v3293, 2
        %v3295 = vmax.f32 %v3293, %v3294
        %v3296 = vrot.slane %v3295, 1
        %v3297 = vmax.f32 %v3295, %v3296
        %v3298 = vrot.slane %v2263, 4
        %v3299 = vmax.f32 %v2263, %v3298
        %v3300 = vrot.slane %v3299, 2
        %v3301 = vmax.f32 %v3299, %v3300
        %v3302 = vrot.slane %v3301, 1
        %v3303 = vmax.f32 %v3301, %v3302
        %v3304 = vrot.slane %v2264, 4
        %v3305 = vmax.f32 %v2264, %v3304
        %v3306 = vrot.slane %v3305, 2
        %v3307 = vmax.f32 %v3305, %v3306
        %v3308 = vrot.slane %v3307, 1
        %v3309 = vmax.f32 %v3307, %v3308
        %v3310 = vrot.slane %v2265, 4
        %v3311 = vmax.f32 %v2265, %v3310
        %v3312 = vrot.slane %v3311, 2
        %v3313 = vmax.f32 %v3311, %v3312
        %v3314 = vrot.slane %v3313, 1
        %v3315 = vmax.f32 %v3313, %v3314
        %v3316 = vrot.slane %v2266, 4
        %v3317 = vmax.f32 %v2266, %v3316
        %v3318 = vrot.slane %v3317, 2
        %v3319 = vmax.f32 %v3317, %v3318
        %v3320 = vrot.slane %v3319, 1
        %v3321 = vmax.f32 %v3319, %v3320
        %v3322 = vrot.slane %v2267, 4
        %v3323 = vmax.f32 %v2267, %v3322
        %v3324 = vrot.slane %v3323, 2
        %v3325 = vmax.f32 %v3323, %v3324
        %v3326 = vrot.slane %v3325, 1
        %v3327 = vmax.f32 %v3325, %v3326
        %v3328 = vrot.slane %v2268, 4
        %v3329 = vmax.f32 %v2268, %v3328
        %v3330 = vrot.slane %v3329, 2
        %v3331 = vmax.f32 %v3329, %v3330
        %v3332 = vrot.slane %v3331, 1
        %v3333 = vmax.f32 %v3331, %v3332
        %v3334 = vrot.slane %v2269, 4
        %v3335 = vmax.f32 %v2269, %v3334
        %v3336 = vrot.slane %v3335, 2
        %v3337 = vmax.f32 %v3335, %v3336
        %v3338 = vrot.slane %v3337, 1
        %v3339 = vmax.f32 %v3337, %v3338
        %v3340 = vrot.slane %v2270, 4
        %v3341 = vmax.f32 %v2270, %v3340
        %v3342 = vrot.slane %v3341, 2
        %v3343 = vmax.f32 %v3341, %v3342
        %v3344 = vrot.slane %v3343, 1
        %v3345 = vmax.f32 %v3343, %v3344
        %v3346 = vrot.slane %v2271, 4
        %v3347 = vmax.f32 %v2271, %v3346
        %v3348 = vrot.slane %v3347, 2
        %v3349 = vmax.f32 %v3347, %v3348
        %v3350 = vrot.slane %v3349, 1
        %v3351 = vmax.f32 %v3349, %v3350
        %v3352 = vrot.slane %v2272, 4
        %v3353 = vmax.f32 %v2272, %v3352
        %v3354 = vrot.slane %v3353, 2
        %v3355 = vmax.f32 %v3353, %v3354
        %v3356 = vrot.slane %v3355, 1
        %v3357 = vmax.f32 %v3355, %v3356
        %v3358 = vrot.slane %v2273, 4
        %v3359 = vmax.f32 %v2273, %v3358
        %v3360 = vrot.slane %v3359, 2
        %v3361 = vmax.f32 %v3359, %v3360
        %v3362 = vrot.slane %v3361, 1
        %v3363 = vmax.f32 %v3361, %v3362
        %v3364 = vrot.slane %v2274, 4
        %v3365 = vmax.f32 %v2274, %v3364
        %v3366 = vrot.slane %v3365, 2
        %v3367 = vmax.f32 %v3365, %v3366
        %v3368 = vrot.slane %v3367, 1
        %v3369 = vmax.f32 %v3367, %v3368
        %v3370 = vrot.slane %v2275, 4
        %v3371 = vmax.f32 %v2275, %v3370
        %v3372 = vrot.slane %v3371, 2
        %v3373 = vmax.f32 %v3371, %v3372
        %v3374 = vrot.slane %v3373, 1
        %v3375 = vmax.f32 %v3373, %v3374
        %v3376 = vrot.slane %v2276, 4
        %v3377 = vmax.f32 %v2276, %v3376
        %v3378 = vrot.slane %v3377, 2
        %v3379 = vmax.f32 %v3377, %v3378
        %v3380 = vrot.slane %v3379, 1
        %v3381 = vmax.f32 %v3379, %v3380
        %v3382 = vrot.slane %v2277, 4
        %v3383 = vmax.f32 %v2277, %v3382
        %v3384 = vrot.slane %v3383, 2
        %v3385 = vmax.f32 %v3383, %v3384
        %v3386 = vrot.slane %v3385, 1
        %v3387 = vmax.f32 %v3385, %v3386
        %v3388 = vrot.slane %v2278, 4
        %v3389 = vmax.f32 %v2278, %v3388
        %v3390 = vrot.slane %v3389, 2
        %v3391 = vmax.f32 %v3389, %v3390
        %v3392 = vrot.slane %v3391, 1
        %v3393 = vmax.f32 %v3391, %v3392
        %v3394 = vrot.slane %v2279, 4
        %v3395 = vmax.f32 %v2279, %v3394
        %v3396 = vrot.slane %v3395, 2
        %v3397 = vmax.f32 %v3395, %v3396
        %v3398 = vrot.slane %v3397, 1
        %v3399 = vmax.f32 %v3397, %v3398
        %v3400 = vrot.slane %v2280, 4
        %v3401 = vmax.f32 %v2280, %v3400
        %v3402 = vrot.slane %v3401, 2
        %v3403 = vmax.f32 %v3401, %v3402
        %v3404 = vrot.slane %v3403, 1
        %v3405 = vmax.f32 %v3403, %v3404
        %v3406 = vrot.slane %v2281, 4
        %v3407 = vmax.f32 %v2281, %v3406
        %v3408 = vrot.slane %v3407, 2
        %v3409 = vmax.f32 %v3407, %v3408
        %v3410 = vrot.slane %v3409, 1
        %v3411 = vmax.f32 %v3409, %v3410
        %v3412 = vrot.slane %v2282, 4
        %v3413 = vmax.f32 %v2282, %v3412
        %v3414 = vrot.slane %v3413, 2
        %v3415 = vmax.f32 %v3413, %v3414
        %v3416 = vrot.slane %v3415, 1
        %v3417 = vmax.f32 %v3415, %v3416
        %v3418 = vrot.slane %v2283, 4
        %v3419 = vmax.f32 %v2283, %v3418
        %v3420 = vrot.slane %v3419, 2
        %v3421 = vmax.f32 %v3419, %v3420
        %v3422 = vrot.slane %v3421, 1
        %v3423 = vmax.f32 %v3421, %v3422
        %v3424 = vrot.slane %v2284, 4
        %v3425 = vmax.f32 %v2284, %v3424
        %v3426 = vrot.slane %v3425, 2
        %v3427 = vmax.f32 %v3425, %v3426
        %v3428 = vrot.slane %v3427, 1
        %v3429 = vmax.f32 %v3427, %v3428
        %v3430 = vrot.slane %v2285, 4
        %v3431 = vmax.f32 %v2285, %v3430
        %v3432 = vrot.slane %v3431, 2
        %v3433 = vmax.f32 %v3431, %v3432
        %v3434 = vrot.slane %v3433, 1
        %v3435 = vmax.f32 %v3433, %v3434
        %v3436 = vrot.slane %v2286, 4
        %v3437 = vmax.f32 %v2286, %v3436
        %v3438 = vrot.slane %v3437, 2
        %v3439 = vmax.f32 %v3437, %v3438
        %v3440 = vrot.slane %v3439, 1
        %v3441 = vmax.f32 %v3439, %v3440
        %v3442 = vrot.slane %v2287, 4
        %v3443 = vmax.f32 %v2287, %v3442
        %v3444 = vrot.slane %v3443, 2
        %v3445 = vmax.f32 %v3443, %v3444
        %v3446 = vrot.slane %v3445, 1
        %v3447 = vmax.f32 %v3445, %v3446
        %v3448 = vrot.slane %v2288, 4
        %v3449 = vmax.f32 %v2288, %v3448
        %v3450 = vrot.slane %v3449, 2
        %v3451 = vmax.f32 %v3449, %v3450
        %v3452 = vrot.slane %v3451, 1
        %v3453 = vmax.f32 %v3451, %v3452
        %v3454 = vrot.slane %v2289, 4
        %v3455 = vmax.f32 %v2289, %v3454
        %v3456 = vrot.slane %v3455, 2
        %v3457 = vmax.f32 %v3455, %v3456
        %v3458 = vrot.slane %v3457, 1
        %v3459 = vmax.f32 %v3457, %v3458
        %v3460 = vrot.slane %v2290, 4
        %v3461 = vmax.f32 %v2290, %v3460
        %v3462 = vrot.slane %v3461, 2
        %v3463 = vmax.f32 %v3461, %v3462
        %v3464 = vrot.slane %v3463, 1
        %v3465 = vmax.f32 %v3463, %v3464
        %v3466 = vrot.slane %v2291, 4
        %v3467 = vmax.f32 %v2291, %v3466
        %v3468 = vrot.slane %v3467, 2
        %v3469 = vmax.f32 %v3467, %v3468
        %v3470 = vrot.slane %v3469, 1
        %v3471 = vmax.f32 %v3469, %v3470
        %v3472 = vrot.slane %v2292, 4
        %v3473 = vmax.f32 %v2292, %v3472
        %v3474 = vrot.slane %v3473, 2
        %v3475 = vmax.f32 %v3473, %v3474
        %v3476 = vrot.slane %v3475, 1
        %v3477 = vmax.f32 %v3475, %v3476
        %v3478 = vrot.slane %v2293, 4
        %v3479 = vmax.f32 %v2293, %v3478
        %v3480 = vrot.slane %v3479, 2
        %v3481 = vmax.f32 %v3479, %v3480
        %v3482 = vrot.slane %v3481, 1
        %v3483 = vmax.f32 %v3481, %v3482
        %v3484 = vrot.slane %v2294, 4
        %v3485 = vmax.f32 %v2294, %v3484
        %v3486 = vrot.slane %v3485, 2
        %v3487 = vmax.f32 %v3485, %v3486
        %v3488 = vrot.slane %v3487, 1
        %v3489 = vmax.f32 %v3487, %v3488
        %v3490 = vrot.slane %v2295, 4
        %v3491 = vmax.f32 %v2295, %v3490
        %v3492 = vrot.slane %v3491, 2
        %v3493 = vmax.f32 %v3491, %v3492
        %v3494 = vrot.slane %v3493, 1
        %v3495 = vmax.f32 %v3493, %v3494
        %v3496 = vrot.slane %v2296, 4
        %v3497 = vmax.f32 %v2296, %v3496
        %v3498 = vrot.slane %v3497, 2
        %v3499 = vmax.f32 %v3497, %v3498
        %v3500 = vrot.slane %v3499, 1
        %v3501 = vmax.f32 %v3499, %v3500
        %v3502 = vrot.slane %v2297, 4
        %v3503 = vmax.f32 %v2297, %v3502
        %v3504 = vrot.slane %v3503, 2
        %v3505 = vmax.f32 %v3503, %v3504
        %v3506 = vrot.slane %v3505, 1
        %v3507 = vmax.f32 %v3505, %v3506
        %v3508 = vrot.slane %v2298, 4
        %v3509 = vmax.f32 %v2298, %v3508
        %v3510 = vrot.slane %v3509, 2
        %v3511 = vmax.f32 %v3509, %v3510
        %v3512 = vrot.slane %v3511, 1
        %v3513 = vmax.f32 %v3511, %v3512
        %v3514 = vrot.slane %v2299, 4
        %v3515 = vmax.f32 %v2299, %v3514
        %v3516 = vrot.slane %v3515, 2
        %v3517 = vmax.f32 %v3515, %v3516
        %v3518 = vrot.slane %v3517, 1
        %v3519 = vmax.f32 %v3517, %v3518
        %v3520 = vrot.slane %v2300, 4
        %v3521 = vmax.f32 %v2300, %v3520
        %v3522 = vrot.slane %v3521, 2
        %v3523 = vmax.f32 %v3521, %v3522
        %v3524 = vrot.slane %v3523, 1
        %v3525 = vmax.f32 %v3523, %v3524
        %v3526 = vrot.slane %v2301, 4
        %v3527 = vmax.f32 %v2301, %v3526
        %v3528 = vrot.slane %v3527, 2
        %v3529 = vmax.f32 %v3527, %v3528
        %v3530 = vrot.slane %v3529, 1
        %v3531 = vmax.f32 %v3529, %v3530
        %v3532 = vrot.slane %v2302, 4
        %v3533 = vmax.f32 %v2302, %v3532
        %v3534 = vrot.slane %v3533, 2
        %v3535 = vmax.f32 %v3533, %v3534
        %v3536 = vrot.slane %v3535, 1
        %v3537 = vmax.f32 %v3535, %v3536
        %v3538 = vrot.slane %v2303, 4
        %v3539 = vmax.f32 %v2303, %v3538
        %v3540 = vrot.slane %v3539, 2
        %v3541 = vmax.f32 %v3539, %v3540
        %v3542 = vrot.slane %v3541, 1
        %v3543 = vmax.f32 %v3541, %v3542
        %v3544 = vrot.slane %v2304, 4
        %v3545 = vmax.f32 %v2304, %v3544
        %v3546 = vrot.slane %v3545, 2
        %v3547 = vmax.f32 %v3545, %v3546
        %v3548 = vrot.slane %v3547, 1
        %v3549 = vmax.f32 %v3547, %v3548
        %v3550 = vrot.slane %v2305, 4
        %v3551 = vmax.f32 %v2305, %v3550
        %v3552 = vrot.slane %v3551, 2
        %v3553 = vmax.f32 %v3551, %v3552
        %v3554 = vrot.slane %v3553, 1
        %v3555 = vmax.f32 %v3553, %v3554
        %v3556 = vrot.slane %v2306, 4
        %v3557 = vmax.f32 %v2306, %v3556
        %v3558 = vrot.slane %v3557, 2
        %v3559 = vmax.f32 %v3557, %v3558
        %v3560 = vrot.slane %v3559, 1
        %v3561 = vmax.f32 %v3559, %v3560
        %v3562 = vrot.slane %v2307, 4
        %v3563 = vmax.f32 %v2307, %v3562
        %v3564 = vrot.slane %v3563, 2
        %v3565 = vmax.f32 %v3563, %v3564
        %v3566 = vrot.slane %v3565, 1
        %v3567 = vmax.f32 %v3565, %v3566
        %v3568 = vrot.slane %v2308, 4
        %v3569 = vmax.f32 %v2308, %v3568
        %v3570 = vrot.slane %v3569, 2
        %v3571 = vmax.f32 %v3569, %v3570
        %v3572 = vrot.slane %v3571, 1
        %v3573 = vmax.f32 %v3571, %v3572
        %v3574 = vrot.slane %v2309, 4
        %v3575 = vmax.f32 %v2309, %v3574
        %v3576 = vrot.slane %v3575, 2
        %v3577 = vmax.f32 %v3575, %v3576
        %v3578 = vrot.slane %v3577, 1
        %v3579 = vmax.f32 %v3577, %v3578
        %v3580 = vrot.slane %v2310, 4
        %v3581 = vmax.f32 %v2310, %v3580
        %v3582 = vrot.slane %v3581, 2
        %v3583 = vmax.f32 %v3581, %v3582
        %v3584 = vrot.slane %v3583, 1
        %v3585 = vmax.f32 %v3583, %v3584
        %v3586 = vrot.slane %v2311, 4
        %v3587 = vmax.f32 %v2311, %v3586
        %v3588 = vrot.slane %v3587, 2
        %v3589 = vmax.f32 %v3587, %v3588
        %v3590 = vrot.slane %v3589, 1
        %v3591 = vmax.f32 %v3589, %v3590
        %v3592 = vrot.slane %v2312, 4
        %v3593 = vmax.f32 %v2312, %v3592
        %v3594 = vrot.slane %v3593, 2
        %v3595 = vmax.f32 %v3593, %v3594
        %v3596 = vrot.slane %v3595, 1
        %v3597 = vmax.f32 %v3595, %v3596
        %v3598 = vrot.slane %v2313, 4
        %v3599 = vmax.f32 %v2313, %v3598
        %v3600 = vrot.slane %v3599, 2
        %v3601 = vmax.f32 %v3599, %v3600
        %v3602 = vrot.slane %v3601, 1
        %v3603 = vmax.f32 %v3601, %v3602
        %v3604 = vrot.slane %v2314, 4
        %v3605 = vmax.f32 %v2314, %v3604
        %v3606 = vrot.slane %v3605, 2
        %v3607 = vmax.f32 %v3605, %v3606
        %v3608 = vrot.slane %v3607, 1
        %v3609 = vmax.f32 %v3607, %v3608
        %v3610 = vrot.slane %v2315, 4
        %v3611 = vmax.f32 %v2315, %v3610
        %v3612 = vrot.slane %v3611, 2
        %v3613 = vmax.f32 %v3611, %v3612
        %v3614 = vrot.slane %v3613, 1
        %v3615 = vmax.f32 %v3613, %v3614
        %v3616 = vrot.slane %v2316, 4
        %v3617 = vmax.f32 %v2316, %v3616
        %v3618 = vrot.slane %v3617, 2
        %v3619 = vmax.f32 %v3617, %v3618
        %v3620 = vrot.slane %v3619, 1
        %v3621 = vmax.f32 %v3619, %v3620
        %v3622 = vrot.slane %v2317, 4
        %v3623 = vmax.f32 %v2317, %v3622
        %v3624 = vrot.slane %v3623, 2
        %v3625 = vmax.f32 %v3623, %v3624
        %v3626 = vrot.slane %v3625, 1
        %v3627 = vmax.f32 %v3625, %v3626
        %v3628 = vrot.slane %v2318, 4
        %v3629 = vmax.f32 %v2318, %v3628
        %v3630 = vrot.slane %v3629, 2
        %v3631 = vmax.f32 %v3629, %v3630
        %v3632 = vrot.slane %v3631, 1
        %v3633 = vmax.f32 %v3631, %v3632
        %v3634 = vrot.slane %v2319, 4
        %v3635 = vmax.f32 %v2319, %v3634
        %v3636 = vrot.slane %v3635, 2
        %v3637 = vmax.f32 %v3635, %v3636
        %v3638 = vrot.slane %v3637, 1
        %v3639 = vmax.f32 %v3637, %v3638
        %v3640 = vrot.slane %v2320, 4
        %v3641 = vmax.f32 %v2320, %v3640
        %v3642 = vrot.slane %v3641, 2
        %v3643 = vmax.f32 %v3641, %v3642
        %v3644 = vrot.slane %v3643, 1
        %v3645 = vmax.f32 %v3643, %v3644
        %v3646 = vrot.slane %v2321, 4
        %v3647 = vmax.f32 %v2321, %v3646
        %v3648 = vrot.slane %v3647, 2
        %v3649 = vmax.f32 %v3647, %v3648
        %v3650 = vrot.slane %v3649, 1
        %v3651 = vmax.f32 %v3649, %v3650
        %v3652 = vrot.slane %v2322, 4
        %v3653 = vmax.f32 %v2322, %v3652
        %v3654 = vrot.slane %v3653, 2
        %v3655 = vmax.f32 %v3653, %v3654
        %v3656 = vrot.slane %v3655, 1
        %v3657 = vmax.f32 %v3655, %v3656
        %v3658 = vrot.slane %v2323, 4
        %v3659 = vmax.f32 %v2323, %v3658
        %v3660 = vrot.slane %v3659, 2
        %v3661 = vmax.f32 %v3659, %v3660
        %v3662 = vrot.slane %v3661, 1
        %v3663 = vmax.f32 %v3661, %v3662
        %v3664 = vrot.slane %v2324, 4
        %v3665 = vmax.f32 %v2324, %v3664
        %v3666 = vrot.slane %v3665, 2
        %v3667 = vmax.f32 %v3665, %v3666
        %v3668 = vrot.slane %v3667, 1
        %v3669 = vmax.f32 %v3667, %v3668
        %v3670 = vrot.slane %v2325, 4
        %v3671 = vmax.f32 %v2325, %v3670
        %v3672 = vrot.slane %v3671, 2
        %v3673 = vmax.f32 %v3671, %v3672
        %v3674 = vrot.slane %v3673, 1
        %v3675 = vmax.f32 %v3673, %v3674
        %v3676 = vrot.slane %v2326, 4
        %v3677 = vmax.f32 %v2326, %v3676
        %v3678 = vrot.slane %v3677, 2
        %v3679 = vmax.f32 %v3677, %v3678
        %v3680 = vrot.slane %v3679, 1
        %v3681 = vmax.f32 %v3679, %v3680
        %v3682 = vrot.slane %v2327, 4
        %v3683 = vmax.f32 %v2327, %v3682
        %v3684 = vrot.slane %v3683, 2
        %v3685 = vmax.f32 %v3683, %v3684
        %v3686 = vrot.slane %v3685, 1
        %v3687 = vmax.f32 %v3685, %v3686
        %v3688 = vrot.slane %v2328, 4
        %v3689 = vmax.f32 %v2328, %v3688
        %v3690 = vrot.slane %v3689, 2
        %v3691 = vmax.f32 %v3689, %v3690
        %v3692 = vrot.slane %v3691, 1
        %v3693 = vmax.f32 %v3691, %v3692
        %v3694 = vrot.slane %v2329, 4
        %v3695 = vmax.f32 %v2329, %v3694
        %v3696 = vrot.slane %v3695, 2
        %v3697 = vmax.f32 %v3695, %v3696
        %v3698 = vrot.slane %v3697, 1
        %v3699 = vmax.f32 %v3697, %v3698
        %v3700 = vrot.slane %v2330, 4
        %v3701 = vmax.f32 %v2330, %v3700
        %v3702 = vrot.slane %v3701, 2
        %v3703 = vmax.f32 %v3701, %v3702
        %v3704 = vrot.slane %v3703, 1
        %v3705 = vmax.f32 %v3703, %v3704
        %v3706 = vrot.slane %v2331, 4
        %v3707 = vmax.f32 %v2331, %v3706
        %v3708 = vrot.slane %v3707, 2
        %v3709 = vmax.f32 %v3707, %v3708
        %v3710 = vrot.slane %v3709, 1
        %v3711 = vmax.f32 %v3709, %v3710
        %v3712 = vrot.slane %v2332, 4
        %v3713 = vmax.f32 %v2332, %v3712
        %v3714 = vrot.slane %v3713, 2
        %v3715 = vmax.f32 %v3713, %v3714
        %v3716 = vrot.slane %v3715, 1
        %v3717 = vmax.f32 %v3715, %v3716
        %v3718 = vrot.slane %v2333, 4
        %v3719 = vmax.f32 %v2333, %v3718
        %v3720 = vrot.slane %v3719, 2
        %v3721 = vmax.f32 %v3719, %v3720
        %v3722 = vrot.slane %v3721, 1
        %v3723 = vmax.f32 %v3721, %v3722
        %v3724 = vrot.slane %v2334, 4
        %v3725 = vmax.f32 %v2334, %v3724
        %v3726 = vrot.slane %v3725, 2
        %v3727 = vmax.f32 %v3725, %v3726
        %v3728 = vrot.slane %v3727, 1
        %v3729 = vmax.f32 %v3727, %v3728
        %v3730 = vrot.slane %v2335, 4
        %v3731 = vmax.f32 %v2335, %v3730
        %v3732 = vrot.slane %v3731, 2
        %v3733 = vmax.f32 %v3731, %v3732
        %v3734 = vrot.slane %v3733, 1
        %v3735 = vmax.f32 %v3733, %v3734
        %v3736 = vrot.slane %v2336, 4
        %v3737 = vmax.f32 %v2336, %v3736
        %v3738 = vrot.slane %v3737, 2
        %v3739 = vmax.f32 %v3737, %v3738
        %v3740 = vrot.slane %v3739, 1
        %v3741 = vmax.f32 %v3739, %v3740
        %v3742 = vrot.slane %v2337, 4
        %v3743 = vmax.f32 %v2337, %v3742
        %v3744 = vrot.slane %v3743, 2
        %v3745 = vmax.f32 %v3743, %v3744
        %v3746 = vrot.slane %v3745, 1
        %v3747 = vmax.f32 %v3745, %v3746
        %v3748 = vrot.slane %v2338, 4
        %v3749 = vmax.f32 %v2338, %v3748
        %v3750 = vrot.slane %v3749, 2
        %v3751 = vmax.f32 %v3749, %v3750
        %v3752 = vrot.slane %v3751, 1
        %v3753 = vmax.f32 %v3751, %v3752
        %v3754 = vrot.slane %v2339, 4
        %v3755 = vmax.f32 %v2339, %v3754
        %v3756 = vrot.slane %v3755, 2
        %v3757 = vmax.f32 %v3755, %v3756
        %v3758 = vrot.slane %v3757, 1
        %v3759 = vmax.f32 %v3757, %v3758
        %v3760 = vrot.slane %v2340, 4
        %v3761 = vmax.f32 %v2340, %v3760
        %v3762 = vrot.slane %v3761, 2
        %v3763 = vmax.f32 %v3761, %v3762
        %v3764 = vrot.slane %v3763, 1
        %v3765 = vmax.f32 %v3763, %v3764
        %v3766 = vrot.slane %v2341, 4
        %v3767 = vmax.f32 %v2341, %v3766
        %v3768 = vrot.slane %v3767, 2
        %v3769 = vmax.f32 %v3767, %v3768
        %v3770 = vrot.slane %v3769, 1
        %v3771 = vmax.f32 %v3769, %v3770
        %v3772 = vrot.slane %v2342, 4
        %v3773 = vmax.f32 %v2342, %v3772
        %v3774 = vrot.slane %v3773, 2
        %v3775 = vmax.f32 %v3773, %v3774
        %v3776 = vrot.slane %v3775, 1
        %v3777 = vmax.f32 %v3775, %v3776
        %v3778 = vrot.slane %v2343, 4
        %v3779 = vmax.f32 %v2343, %v3778
        %v3780 = vrot.slane %v3779, 2
        %v3781 = vmax.f32 %v3779, %v3780
        %v3782 = vrot.slane %v3781, 1
        %v3783 = vmax.f32 %v3781, %v3782
        %v3784 = vld [vmem:[#allocation5] sm:$0xff]
        %v3785 = vld [vmem:[#allocation5 + $0x8] sm:$0xff]
        %v3786 = vld [vmem:[#allocation5 + $0x10] sm:$0xff]
        %v3787 = vld [vmem:[#allocation5 + $0x18] sm:$0xff]
        %v3788 = vld [vmem:[#allocation5 + $0x20] sm:$0xff]
        %v3789 = vld [vmem:[#allocation5 + $0x28] sm:$0xff]
        %v3790 = vld [vmem:[#allocation5 + $0x30] sm:$0xff]
        %v3791 = vld [vmem:[#allocation5 + $0x38] sm:$0xff]
        %v3792 = vld [vmem:[#allocation5 + $0x40] sm:$0xff]
        %v3793 = vld [vmem:[#allocation5 + $0x48] sm:$0xff]
        %v3794 = vld [vmem:[#allocation5 + $0x50] sm:$0xff]
        %v3795 = vld [vmem:[#allocation5 + $0x58] sm:$0xff]
        %v3796 = vld [vmem:[#allocation5 + $0x60] sm:$0xff]
        %v3797 = vld [vmem:[#allocation5 + $0x68] sm:$0xff]
        %v3798 = vld [vmem:[#allocation5 + $0x70] sm:$0xff]
        %v3799 = vld [vmem:[#allocation5 + $0x78] sm:$0xff]
        %v3800 = vld [vmem:[#allocation5 + $0x80] sm:$0xff]
        %v3801 = vld [vmem:[#allocation5 + $0x88] sm:$0xff]
        %v3802 = vld [vmem:[#allocation5 + $0x90] sm:$0xff]
        %v3803 = vld [vmem:[#allocation5 + $0x98] sm:$0xff]
        %v3804 = vld [vmem:[#allocation5 + $0xa0] sm:$0xff]
        %v3805 = vld [vmem:[#allocation5 + $0xa8] sm:$0xff]
        %v3806 = vld [vmem:[#allocation5 + $0xb0] sm:$0xff]
        %v3807 = vld [vmem:[#allocation5 + $0xb8] sm:$0xff]
        %v3808 = vld [vmem:[#allocation5 + $0xc0] sm:$0xff]
        %v3809 = vld [vmem:[#allocation5 + $0xc8] sm:$0xff]
        %v3810 = vld [vmem:[#allocation5 + $0xd0] sm:$0xff]
        %v3811 = vld [vmem:[#allocation5 + $0xd8] sm:$0xff]
        %v3812 = vld [vmem:[#allocation5 + $0xe0] sm:$0xff]
        %v3813 = vld [vmem:[#allocation5 + $0xe8] sm:$0xff]
        %v3814 = vld [vmem:[#allocation5 + $0xf0] sm:$0xff]
        %v3815 = vld [vmem:[#allocation5 + $0xf8] sm:$0xff]
        %v3816 = vld [vmem:[#allocation5 + $0x100] sm:$0xff]
        %v3817 = vld [vmem:[#allocation5 + $0x108] sm:$0xff]
        %v3818 = vld [vmem:[#allocation5 + $0x110] sm:$0xff]
        %v3819 = vld [vmem:[#allocation5 + $0x118] sm:$0xff]
        %v3820 = vld [vmem:[#allocation5 + $0x120] sm:$0xff]
        %v3821 = vld [vmem:[#allocation5 + $0x128] sm:$0xff]
        %v3822 = vld [vmem:[#allocation5 + $0x130] sm:$0xff]
        %v3823 = vld [vmem:[#allocation5 + $0x138] sm:$0xff]
        %v3824 = vld [vmem:[#allocation5 + $0x140] sm:$0xff]
        %v3825 = vld [vmem:[#allocation5 + $0x148] sm:$0xff]
        %v3826 = vld [vmem:[#allocation5 + $0x150] sm:$0xff]
        %v3827 = vld [vmem:[#allocation5 + $0x158] sm:$0xff]
        %v3828 = vld [vmem:[#allocation5 + $0x160] sm:$0xff]
        %v3829 = vld [vmem:[#allocation5 + $0x168] sm:$0xff]
        %v3830 = vld [vmem:[#allocation5 + $0x170] sm:$0xff]
        %v3831 = vld [vmem:[#allocation5 + $0x178] sm:$0xff]
        %v3832 = vld [vmem:[#allocation5 + $0x180] sm:$0xff]
        %v3833 = vld [vmem:[#allocation5 + $0x188] sm:$0xff]
        %v3834 = vld [vmem:[#allocation5 + $0x190] sm:$0xff]
        %v3835 = vld [vmem:[#allocation5 + $0x198] sm:$0xff]
        %v3836 = vld [vmem:[#allocation5 + $0x1a0] sm:$0xff]
        %v3837 = vld [vmem:[#allocation5 + $0x1a8] sm:$0xff]
        %v3838 = vld [vmem:[#allocation5 + $0x1b0] sm:$0xff]
        %v3839 = vld [vmem:[#allocation5 + $0x1b8] sm:$0xff]
        %v3840 = vld [vmem:[#allocation5 + $0x1c0] sm:$0xff]
        %v3841 = vld [vmem:[#allocation5 + $0x1c8] sm:$0xff]
        %v3842 = vld [vmem:[#allocation5 + $0x1d0] sm:$0xff]
        %v3843 = vld [vmem:[#allocation5 + $0x1d8] sm:$0xff]
        %v3844 = vld [vmem:[#allocation5 + $0x1e0] sm:$0xff]
        %v3845 = vld [vmem:[#allocation5 + $0x1e8] sm:$0xff]
        %v3846 = vld [vmem:[#allocation5 + $0x1f0] sm:$0xff]
        %v3847 = vld [vmem:[#allocation5 + $0x1f8] sm:$0xff]
        %v3848 = vld [vmem:[#allocation5 + $0x200] sm:$0xff]
        %v3849 = vld [vmem:[#allocation5 + $0x208] sm:$0xff]
        %v3850 = vld [vmem:[#allocation5 + $0x210] sm:$0xff]
        %v3851 = vld [vmem:[#allocation5 + $0x218] sm:$0xff]
        %v3852 = vld [vmem:[#allocation5 + $0x220] sm:$0xff]
        %v3853 = vld [vmem:[#allocation5 + $0x228] sm:$0xff]
        %v3854 = vld [vmem:[#allocation5 + $0x230] sm:$0xff]
        %v3855 = vld [vmem:[#allocation5 + $0x238] sm:$0xff]
        %v3856 = vld [vmem:[#allocation5 + $0x240] sm:$0xff]
        %v3857 = vld [vmem:[#allocation5 + $0x248] sm:$0xff]
        %v3858 = vld [vmem:[#allocation5 + $0x250] sm:$0xff]
        %v3859 = vld [vmem:[#allocation5 + $0x258] sm:$0xff]
        %v3860 = vld [vmem:[#allocation5 + $0x260] sm:$0xff]
        %v3861 = vld [vmem:[#allocation5 + $0x268] sm:$0xff]
        %v3862 = vld [vmem:[#allocation5 + $0x270] sm:$0xff]
        %v3863 = vld [vmem:[#allocation5 + $0x278] sm:$0xff]
        %v3864 = vld [vmem:[#allocation5 + $0x280] sm:$0xff]
        %v3865 = vld [vmem:[#allocation5 + $0x288] sm:$0xff]
        %v3866 = vld [vmem:[#allocation5 + $0x290] sm:$0xff]
        %v3867 = vld [vmem:[#allocation5 + $0x298] sm:$0xff]
        %v3868 = vld [vmem:[#allocation5 + $0x2a0] sm:$0xff]
        %v3869 = vld [vmem:[#allocation5 + $0x2a8] sm:$0xff]
        %v3870 = vld [vmem:[#allocation5 + $0x2b0] sm:$0xff]
        %v3871 = vld [vmem:[#allocation5 + $0x2b8] sm:$0xff]
        %v3872 = vld [vmem:[#allocation5 + $0x2c0] sm:$0xff]
        %v3873 = vld [vmem:[#allocation5 + $0x2c8] sm:$0xff]
        %v3874 = vld [vmem:[#allocation5 + $0x2d0] sm:$0xff]
        %v3875 = vld [vmem:[#allocation5 + $0x2d8] sm:$0xff]
        %v3876 = vld [vmem:[#allocation5 + $0x2e0] sm:$0xff]
        %v3877 = vld [vmem:[#allocation5 + $0x2e8] sm:$0xff]
        %v3878 = vld [vmem:[#allocation5 + $0x2f0] sm:$0xff]
        %v3879 = vld [vmem:[#allocation5 + $0x2f8] sm:$0xff]
        %v3880 = vld [vmem:[#allocation5 + $0x300] sm:$0xff]
        %v3881 = vld [vmem:[#allocation5 + $0x308] sm:$0xff]
        %v3882 = vld [vmem:[#allocation5 + $0x310] sm:$0xff]
        %v3883 = vld [vmem:[#allocation5 + $0x318] sm:$0xff]
        %v3884 = vld [vmem:[#allocation5 + $0x320] sm:$0xff]
        %v3885 = vld [vmem:[#allocation5 + $0x328] sm:$0xff]
        %v3886 = vld [vmem:[#allocation5 + $0x330] sm:$0xff]
        %v3887 = vld [vmem:[#allocation5 + $0x338] sm:$0xff]
        %v3888 = vld [vmem:[#allocation5 + $0x340] sm:$0xff]
        %v3889 = vld [vmem:[#allocation5 + $0x348] sm:$0xff]
        %v3890 = vld [vmem:[#allocation5 + $0x350] sm:$0xff]
        %v3891 = vld [vmem:[#allocation5 + $0x358] sm:$0xff]
        %v3892 = vld [vmem:[#allocation5 + $0x360] sm:$0xff]
        %v3893 = vld [vmem:[#allocation5 + $0x368] sm:$0xff]
        %v3894 = vld [vmem:[#allocation5 + $0x370] sm:$0xff]
        %v3895 = vld [vmem:[#allocation5 + $0x378] sm:$0xff]
        %v3896 = vld [vmem:[#allocation5 + $0x380] sm:$0xff]
        %v3897 = vld [vmem:[#allocation5 + $0x388] sm:$0xff]
        %v3898 = vld [vmem:[#allocation5 + $0x390] sm:$0xff]
        %v3899 = vld [vmem:[#allocation5 + $0x398] sm:$0xff]
        %v3900 = vld [vmem:[#allocation5 + $0x3a0] sm:$0xff]
        %v3901 = vld [vmem:[#allocation5 + $0x3a8] sm:$0xff]
        %v3902 = vld [vmem:[#allocation5 + $0x3b0] sm:$0xff]
        %v3903 = vld [vmem:[#allocation5 + $0x3b8] sm:$0xff]
        %v3904 = vld [vmem:[#allocation5 + $0x3c0] sm:$0xff]
        %v3905 = vld [vmem:[#allocation5 + $0x3c8] sm:$0xff]
        %v3906 = vld [vmem:[#allocation5 + $0x3d0] sm:$0xff]
        %v3907 = vld [vmem:[#allocation5 + $0x3d8] sm:$0xff]
        %v3908 = vld [vmem:[#allocation5 + $0x3e0] sm:$0xff]
        %v3909 = vld [vmem:[#allocation5 + $0x3e8] sm:$0xff]
        %v3910 = vld [vmem:[#allocation5 + $0x3f0] sm:$0xff]
        %v3911 = vld [vmem:[#allocation5 + $0x3f8] sm:$0xff]
        %v3912 = vld [vmem:[#allocation5 + $0x400] sm:$0xff]
        %v3913 = vld [vmem:[#allocation5 + $0x408] sm:$0xff]
        %v3914 = vld [vmem:[#allocation5 + $0x410] sm:$0xff]
        %v3915 = vld [vmem:[#allocation5 + $0x418] sm:$0xff]
        %v3916 = vld [vmem:[#allocation5 + $0x420] sm:$0xff]
        %v3917 = vld [vmem:[#allocation5 + $0x428] sm:$0xff]
        %v3918 = vld [vmem:[#allocation5 + $0x430] sm:$0xff]
        %v3919 = vld [vmem:[#allocation5 + $0x438] sm:$0xff]
        %v3920 = vld [vmem:[#allocation5 + $0x440] sm:$0xff]
        %v3921 = vld [vmem:[#allocation5 + $0x448] sm:$0xff]
        %v3922 = vld [vmem:[#allocation5 + $0x450] sm:$0xff]
        %v3923 = vld [vmem:[#allocation5 + $0x458] sm:$0xff]
        %v3924 = vld [vmem:[#allocation5 + $0x460] sm:$0xff]
        %v3925 = vld [vmem:[#allocation5 + $0x468] sm:$0xff]
        %v3926 = vld [vmem:[#allocation5 + $0x470] sm:$0xff]
        %v3927 = vld [vmem:[#allocation5 + $0x478] sm:$0xff]
        %v3928 = vld [vmem:[#allocation5 + $0x480] sm:$0xff]
        %v3929 = vld [vmem:[#allocation5 + $0x488] sm:$0xff]
        %v3930 = vld [vmem:[#allocation5 + $0x490] sm:$0xff]
        %v3931 = vld [vmem:[#allocation5 + $0x498] sm:$0xff]
        %v3932 = vld [vmem:[#allocation5 + $0x4a0] sm:$0xff]
        %v3933 = vld [vmem:[#allocation5 + $0x4a8] sm:$0xff]
        %v3934 = vld [vmem:[#allocation5 + $0x4b0] sm:$0xff]
        %v3935 = vld [vmem:[#allocation5 + $0x4b8] sm:$0xff]
        %v3936 = vld [vmem:[#allocation5 + $0x4c0] sm:$0xff]
        %v3937 = vld [vmem:[#allocation5 + $0x4c8] sm:$0xff]
        %v3938 = vld [vmem:[#allocation5 + $0x4d0] sm:$0xff]
        %v3939 = vld [vmem:[#allocation5 + $0x4d8] sm:$0xff]
        %v3940 = vld [vmem:[#allocation5 + $0x4e0] sm:$0xff]
        %v3941 = vld [vmem:[#allocation5 + $0x4e8] sm:$0xff]
        %v3942 = vld [vmem:[#allocation5 + $0x4f0] sm:$0xff]
        %v3943 = vld [vmem:[#allocation5 + $0x4f8] sm:$0xff]
        %v3944 = vld [vmem:[#allocation5 + $0x500] sm:$0xff]
        %v3945 = vld [vmem:[#allocation5 + $0x508] sm:$0xff]
        %v3946 = vld [vmem:[#allocation5 + $0x510] sm:$0xff]
        %v3947 = vld [vmem:[#allocation5 + $0x518] sm:$0xff]
        %v3948 = vld [vmem:[#allocation5 + $0x520] sm:$0xff]
        %v3949 = vld [vmem:[#allocation5 + $0x528] sm:$0xff]
        %v3950 = vld [vmem:[#allocation5 + $0x530] sm:$0xff]
        %v3951 = vld [vmem:[#allocation5 + $0x538] sm:$0xff]
        %v3952 = vld [vmem:[#allocation5 + $0x540] sm:$0xff]
        %v3953 = vld [vmem:[#allocation5 + $0x548] sm:$0xff]
        %v3954 = vld [vmem:[#allocation5 + $0x550] sm:$0xff]
        %v3955 = vld [vmem:[#allocation5 + $0x558] sm:$0xff]
        %v3956 = vld [vmem:[#allocation5 + $0x560] sm:$0xff]
        %v3957 = vld [vmem:[#allocation5 + $0x568] sm:$0xff]
        %v3958 = vld [vmem:[#allocation5 + $0x570] sm:$0xff]
        %v3959 = vld [vmem:[#allocation5 + $0x578] sm:$0xff]
        %v3960 = vld [vmem:[#allocation5 + $0x580] sm:$0xff]
        %v3961 = vld [vmem:[#allocation5 + $0x588] sm:$0xff]
        %v3962 = vld [vmem:[#allocation5 + $0x590] sm:$0xff]
        %v3963 = vld [vmem:[#allocation5 + $0x598] sm:$0xff]
        %v3964 = vld [vmem:[#allocation5 + $0x5a0] sm:$0xff]
        %v3965 = vld [vmem:[#allocation5 + $0x5a8] sm:$0xff]
        %v3966 = vld [vmem:[#allocation5 + $0x5b0] sm:$0xff]
        %v3967 = vld [vmem:[#allocation5 + $0x5b8] sm:$0xff]
        %v3968 = vld [vmem:[#allocation5 + $0x5c0] sm:$0xff]
        %v3969 = vld [vmem:[#allocation5 + $0x5c8] sm:$0xff]
        %v3970 = vld [vmem:[#allocation5 + $0x5d0] sm:$0xff]
        %v3971 = vld [vmem:[#allocation5 + $0x5d8] sm:$0xff]
        %v3972 = vld [vmem:[#allocation5 + $0x5e0] sm:$0xff]
        %v3973 = vld [vmem:[#allocation5 + $0x5e8] sm:$0xff]
        %v3974 = vld [vmem:[#allocation5 + $0x5f0] sm:$0xff]
        %v3975 = vld [vmem:[#allocation5 + $0x5f8] sm:$0xff]
        %v3976 = vld [vmem:[#allocation5 + $0x600] sm:$0xff]
        %v3977 = vld [vmem:[#allocation5 + $0x608] sm:$0xff]
        %v3978 = vld [vmem:[#allocation5 + $0x610] sm:$0xff]
        %v3979 = vld [vmem:[#allocation5 + $0x618] sm:$0xff]
        %v3980 = vld [vmem:[#allocation5 + $0x620] sm:$0xff]
        %v3981 = vld [vmem:[#allocation5 + $0x628] sm:$0xff]
        %v3982 = vld [vmem:[#allocation5 + $0x630] sm:$0xff]
        %v3983 = vld [vmem:[#allocation5 + $0x638] sm:$0xff]
        %v3984 = vld [vmem:[#allocation5 + $0x640] sm:$0xff]
        %v3985 = vld [vmem:[#allocation5 + $0x648] sm:$0xff]
        %v3986 = vld [vmem:[#allocation5 + $0x650] sm:$0xff]
        %v3987 = vld [vmem:[#allocation5 + $0x658] sm:$0xff]
        %v3988 = vld [vmem:[#allocation5 + $0x660] sm:$0xff]
        %v3989 = vld [vmem:[#allocation5 + $0x668] sm:$0xff]
        %v3990 = vld [vmem:[#allocation5 + $0x670] sm:$0xff]
        %v3991 = vld [vmem:[#allocation5 + $0x678] sm:$0xff]
        %v3992 = vld [vmem:[#allocation5 + $0x680] sm:$0xff]
        %v3993 = vld [vmem:[#allocation5 + $0x688] sm:$0xff]
        %v3994 = vld [vmem:[#allocation5 + $0x690] sm:$0xff]
        %v3995 = vld [vmem:[#allocation5 + $0x698] sm:$0xff]
        %v3996 = vld [vmem:[#allocation5 + $0x6a0] sm:$0xff]
        %v3997 = vld [vmem:[#allocation5 + $0x6a8] sm:$0xff]
        %v3998 = vld [vmem:[#allocation5 + $0x6b0] sm:$0xff]
        %v3999 = vld [vmem:[#allocation5 + $0x6b8] sm:$0xff]
        %v4000 = vld [vmem:[#allocation5 + $0x6c0] sm:$0xff]
        %v4001 = vld [vmem:[#allocation5 + $0x6c8] sm:$0xff]
        %v4002 = vld [vmem:[#allocation5 + $0x6d0] sm:$0xff]
        %v4003 = vld [vmem:[#allocation5 + $0x6d8] sm:$0xff]
        %v4004 = vld [vmem:[#allocation5 + $0x6e0] sm:$0xff]
        %v4005 = vld [vmem:[#allocation5 + $0x6e8] sm:$0xff]
        %v4006 = vld [vmem:[#allocation5 + $0x6f0] sm:$0xff]
        %v4007 = vld [vmem:[#allocation5 + $0x6f8] sm:$0xff]
        %v4008 = vld [vmem:[#allocation5 + $0x700] sm:$0xff]
        %v4009 = vld [vmem:[#allocation5 + $0x708] sm:$0xff]
        %v4010 = vld [vmem:[#allocation5 + $0x710] sm:$0xff]
        %v4011 = vld [vmem:[#allocation5 + $0x718] sm:$0xff]
        %v4012 = vld [vmem:[#allocation5 + $0x720] sm:$0xff]
        %v4013 = vld [vmem:[#allocation5 + $0x728] sm:$0xff]
        %v4014 = vld [vmem:[#allocation5 + $0x730] sm:$0xff]
        %v4015 = vld [vmem:[#allocation5 + $0x738] sm:$0xff]
        %v4016 = vld [vmem:[#allocation5 + $0x740] sm:$0xff]
        %v4017 = vld [vmem:[#allocation5 + $0x748] sm:$0xff]
        %v4018 = vld [vmem:[#allocation5 + $0x750] sm:$0xff]
        %v4019 = vld [vmem:[#allocation5 + $0x758] sm:$0xff]
        %v4020 = vld [vmem:[#allocation5 + $0x760] sm:$0xff]
        %v4021 = vld [vmem:[#allocation5 + $0x768] sm:$0xff]
        %v4022 = vld [vmem:[#allocation5 + $0x770] sm:$0xff]
        %v4023 = vld [vmem:[#allocation5 + $0x778] sm:$0xff]
        %v4024 = vld [vmem:[%s329] sm:$0xff]
        %v4025 = vld [vmem:[%s329 + $0x8] sm:$0xff]
        %v4026 = vld [vmem:[%s5] sm:$0xff]
        %v4027 = vld [vmem:[%s5 + $0x8] sm:$0xff]
        %v4028 = vld [vmem:[%s5 + $0x10] sm:$0xff]
        %v4029 = vld [vmem:[%s5 + $0x18] sm:$0xff]
        %vm4030 = vcmask 261120
        %v4032 = vsel %vm4030, %v4024, 0
        %v4035 = vsel %vm4030, %v4025, 0
        %4037 = vmatprep.subr.mxu0 0.0
        %4038 = vmatpush1.msra.mxu0 0.0
        %4039 = vmatprep.subr.mxu0 0.0
        %4040 = vmatpush1.msra.mxu0 0.0
        %4041 = vmatprep.subr.mxu0 0.0
        %4042 = vmatpush1.msra.mxu0 0.0
        %4043 = vmatprep.subr.mxu0 0.0
        %4044 = vmatpush1.msra.mxu0 0.0
        %4045 = vmatprep.subr.mxu0 0.0
        %4046 = vmatpush1.msra.mxu0 0.0
        %4047 = vmatprep.subr.mxu0 0.0
        %4048 = vmatpush1.msra.mxu0 0.0
        %4049 = vmatprep.subr.mxu0 0.0
        %4050 = vmatpush1.msra.mxu0 0.0
        %4051 = vmatprep.subr.mxu0 0.0
        %4052 = vmatpush1.msra.mxu0 0.0
        %4053 = vmatprep.subr.mxu0 0.0
        %4054 = vmatpush1.msra.mxu0 0.0
        %4055 = vmatprep.subr.mxu0 0.0
        %4056 = vmatpush1.msra.mxu0 0.0
        %4057 = vmatprep.subr.mxu0 0.0
        %4058 = vmatpush1.msra.mxu0 0.0
        %4059 = vmatprep.subr.mxu0 0.0
        %4060 = vmatpush1.msra.mxu0 0.0
        %4061 = vmatprep.subr.mxu0 0.0
        %4062 = vmatpush1.msra.mxu0 %v4029
        %4063 = vmatprep.subr.mxu0 0.0
        %4064 = vmatpush1.msra.mxu0 %v4028
        %4065 = vmatprep.subr.mxu0 0.0
        %4066 = vmatpush1.msra.mxu0 %v4027
        %4067 = vmatprep.subr.mxu0 0.0
        %4068 = vmatpush1.msra.mxu0 %v4026
        %4069 = vmatprep.subr.mxu0 0.0
        %4070 = vmatpush2.msra.mxu0 0.0
        %4071 = vmatprep.subr.mxu0 0.0
        %4072 = vmatpush2.msra.mxu0 0.0
        %4073 = vmatprep.subr.mxu0 0.0
        %4074 = vmatpush2.msra.mxu0 0.0
        %4075 = vmatprep.subr.mxu0 0.0
        %4076 = vmatpush2.msra.mxu0 0.0
        %4077 = vmatprep.subr.mxu0 0.0
        %4078 = vmatpush2.msra.mxu0 0.0
        %4079 = vmatprep.subr.mxu0 0.0
        %4080 = vmatpush2.msra.mxu0 0.0
        %4081 = vmatprep.subr.mxu0 0.0
        %4082 = vmatpush2.msra.mxu0 0.0
        %4083 = vmatprep.subr.mxu0 0.0
        %4084 = vmatpush2.msra.mxu0 0.0
        %4085 = vmatprep.subr.mxu0 0.0
        %4086 = vmatpush2.msra.mxu0 0.0
        %4087 = vmatprep.subr.mxu0 0.0
        %4088 = vmatpush2.msra.mxu0 0.0
        %4089 = vmatprep.subr.mxu0 0.0
        %4090 = vmatpush2.msra.mxu0 0.0
        %4091 = vmatprep.subr.mxu0 0.0
        %4092 = vmatpush2.msra.mxu0 0.0
        %4093 = vmatprep.subr.mxu0 0.0
        %4094 = vmatpush2.msra.mxu0 0.0
        %4095 = vmatprep.subr.mxu0 0.0
        %4096 = vmatpush2.msra.mxu0 0.0
        %4097 = vmatprep.subr.mxu0 0.0
        %4098 = vmatpush2.msra.mxu0 0.0
        %4099 = vmatprep.subr.mxu0 0.0
        %4100 = vmatpush2.msra.mxu0 0.0
        %4101 = vmatprep.mubr.f32.mxu0 0.0
        %4102 = vmatmul.mubr.f32.gmra.mxu0 %v4032
        %v4103 = vpop.f32.mrf.mxu0
        %v4104 = vadd.f32 0.0, %v4103
        %v4105 = vpop.f32.mrf.mxu0
        %4106 = vmatprep.mubr.f32.mxu0 0.0
        %4107 = vmatmul.mubr.f32.gmra.mxu0 %v4035
        %v4108 = vpop.f32.mrf.mxu0
        %v4109 = vadd.f32 0.0, %v4108
        %v4110 = vpop.f32.mrf.mxu0
        %4111 = vdwg.mxu0
        %vm4352 = vcmask 1041409
        %v4353 = vsel %vm4352, %v2439, %v2349
        %vm4354 = vcmask 1042434
        %v4355 = vsel %vm4354, %v2529, %v4353
        %vm4356 = vcmask 1043459
        %v4357 = vsel %vm4356, %v2619, %v4355
        %vm4358 = vcmask 1044484
        %v4359 = vsel %vm4358, %v2709, %v4357
        %vm4360 = vcmask 1045509
        %v4361 = vsel %vm4360, %v2799, %v4359
        %vm4362 = vcmask 1046534
        %v4363 = vsel %vm4362, %v2889, %v4361
        %vm4364 = vcmask 1047559
        %v4365 = vsel %vm4364, %v2979, %v4363
        %v4366 = vsel %vm4352, %v2445, %v2355
        %v4367 = vsel %vm4354, %v2535, %v4366
        %v4368 = vsel %vm4356, %v2625, %v4367
        %v4369 = vsel %vm4358, %v2715, %v4368
        %v4370 = vsel %vm4360, %v2805, %v4369
        %v4371 = vsel %vm4362, %v2895, %v4370
        %v4372 = vsel %vm4364, %v2985, %v4371
        %v4373 = vsel %vm4352, %v2451, %v2361
        %v4374 = vsel %vm4354, %v2541, %v4373
        %v4375 = vsel %vm4356, %v2631, %v4374
        %v4376 = vsel %vm4358, %v2721, %v4375
        %v4377 = vsel %vm4360, %v2811, %v4376
        %v4378 = vsel %vm4362, %v2901, %v4377
        %v4379 = vsel %vm4364, %v2991, %v4378
        %v4380 = vsel %vm4352, %v2457, %v2367
        %v4381 = vsel %vm4354, %v2547, %v4380
        %v4382 = vsel %vm4356, %v2637, %v4381
        %v4383 = vsel %vm4358, %v2727, %v4382
        %v4384 = vsel %vm4360, %v2817, %v4383
        %v4385 = vsel %vm4362, %v2907, %v4384
        %v4386 = vsel %vm4364, %v2997, %v4385
        %v4387 = vsel %vm4352, %v2463, %v2373
        %v4388 = vsel %vm4354, %v2553, %v4387
        %v4389 = vsel %vm4356, %v2643, %v4388
        %v4390 = vsel %vm4358, %v2733, %v4389
        %v4391 = vsel %vm4360, %v2823, %v4390
        %v4392 = vsel %vm4362, %v2913, %v4391
        %v4393 = vsel %vm4364, %v3003, %v4392
        %v4394 = vsel %vm4352, %v2469, %v2379
        %v4395 = vsel %vm4354, %v2559, %v4394
        %v4396 = vsel %vm4356, %v2649, %v4395
        %v4397 = vsel %vm4358, %v2739, %v4396
        %v4398 = vsel %vm4360, %v2829, %v4397
        %v4399 = vsel %vm4362, %v2919, %v4398
        %v4400 = vsel %vm4364, %v3009, %v4399
        %v4401 = vsel %vm4352, %v2475, %v2385
        %v4402 = vsel %vm4354, %v2565, %v4401
        %v4403 = vsel %vm4356, %v2655, %v4402
        %v4404 = vsel %vm4358, %v2745, %v4403
        %v4405 = vsel %vm4360, %v2835, %v4404
        %v4406 = vsel %vm4362, %v2925, %v4405
        %v4407 = vsel %vm4364, %v3015, %v4406
        %v4408 = vsel %vm4352, %v2481, %v2391
        %v4409 = vsel %vm4354, %v2571, %v4408
        %v4410 = vsel %vm4356, %v2661, %v4409
        %v4411 = vsel %vm4358, %v2751, %v4410
        %v4412 = vsel %vm4360, %v2841, %v4411
        %v4413 = vsel %vm4362, %v2931, %v4412
        %v4414 = vsel %vm4364, %v3021, %v4413
        %v4415 = vsel %vm4352, %v2487, %v2397
        %v4416 = vsel %vm4354, %v2577, %v4415
        %v4417 = vsel %vm4356, %v2667, %v4416
        %v4418 = vsel %vm4358, %v2757, %v4417
        %v4419 = vsel %vm4360, %v2847, %v4418
        %v4420 = vsel %vm4362, %v2937, %v4419
        %v4421 = vsel %vm4364, %v3027, %v4420
        %v4422 = vsel %vm4352, %v2493, %v2403
        %v4423 = vsel %vm4354, %v2583, %v4422
        %v4424 = vsel %vm4356, %v2673, %v4423
        %v4425 = vsel %vm4358, %v2763, %v4424
        %v4426 = vsel %vm4360, %v2853, %v4425
        %v4427 = vsel %vm4362, %v2943, %v4426
        %v4428 = vsel %vm4364, %v3033, %v4427
        %v4429 = vsel %vm4352, %v2499, %v2409
        %v4430 = vsel %vm4354, %v2589, %v4429
        %v4431 = vsel %vm4356, %v2679, %v4430
        %v4432 = vsel %vm4358, %v2769, %v4431
        %v4433 = vsel %vm4360, %v2859, %v4432
        %v4434 = vsel %vm4362, %v2949, %v4433
        %v4435 = vsel %vm4364, %v3039, %v4434
        %v4436 = vsel %vm4352, %v2505, %v2415
        %v4437 = vsel %vm4354, %v2595, %v4436
        %v4438 = vsel %vm4356, %v2685, %v4437
        %v4439 = vsel %vm4358, %v2775, %v4438
        %v4440 = vsel %vm4360, %v2865, %v4439
        %v4441 = vsel %vm4362, %v2955, %v4440
        %v4442 = vsel %vm4364, %v3045, %v4441
        %v4443 = vsel %vm4352, %v2511, %v2421
        %v4444 = vsel %vm4354, %v2601, %v4443
        %v4445 = vsel %vm4356, %v2691, %v4444
        %v4446 = vsel %vm4358, %v2781, %v4445
        %v4447 = vsel %vm4360, %v2871, %v4446
        %v4448 = vsel %vm4362, %v2961, %v4447
        %v4449 = vsel %vm4364, %v3051, %v4448
        %v4450 = vsel %vm4352, %v2517, %v2427
        %v4451 = vsel %vm4354, %v2607, %v4450
        %v4452 = vsel %vm4356, %v2697, %v4451
        %v4453 = vsel %vm4358, %v2787, %v4452
        %v4454 = vsel %vm4360, %v2877, %v4453
        %v4455 = vsel %vm4362, %v2967, %v4454
        %v4456 = vsel %vm4364, %v3057, %v4455
        %v4457 = vsel %vm4352, %v2523, %v2433
        %v4458 = vsel %vm4354, %v2613, %v4457
        %v4459 = vsel %vm4356, %v2703, %v4458
        %v4460 = vsel %vm4358, %v2793, %v4459
        %v4461 = vsel %vm4360, %v2883, %v4460
        %v4462 = vsel %vm4362, %v2973, %v4461
        %v4463 = vsel %vm4364, %v3063, %v4462
        %v4464 = vsel %vm4352, %v3159, %v3069
        %v4465 = vsel %vm4354, %v3249, %v4464
        %v4466 = vsel %vm4356, %v3339, %v4465
        %v4467 = vsel %vm4358, %v3429, %v4466
        %v4468 = vsel %vm4360, %v3519, %v4467
        %v4469 = vsel %vm4362, %v3609, %v4468
        %v4470 = vsel %vm4364, %v3699, %v4469
        %v4471 = vsel %vm4352, %v3165, %v3075
        %v4472 = vsel %vm4354, %v3255, %v4471
        %v4473 = vsel %vm4356, %v3345, %v4472
        %v4474 = vsel %vm4358, %v3435, %v4473
        %v4475 = vsel %vm4360, %v3525, %v4474
        %v4476 = vsel %vm4362, %v3615, %v4475
        %v4477 = vsel %vm4364, %v3705, %v4476
        %v4478 = vsel %vm4352, %v3171, %v3081
        %v4479 = vsel %vm4354, %v3261, %v4478
        %v4480 = vsel %vm4356, %v3351, %v4479
        %v4481 = vsel %vm4358, %v3441, %v4480
        %v4482 = vsel %vm4360, %v3531, %v4481
        %v4483 = vsel %vm4362, %v3621, %v4482
        %v4484 = vsel %vm4364, %v3711, %v4483
        %v4485 = vsel %vm4352, %v3177, %v3087
        %v4486 = vsel %vm4354, %v3267, %v4485
        %v4487 = vsel %vm4356, %v3357, %v4486
        %v4488 = vsel %vm4358, %v3447, %v4487
        %v4489 = vsel %vm4360, %v3537, %v4488
        %v4490 = vsel %vm4362, %v3627, %v4489
        %v4491 = vsel %vm4364, %v3717, %v4490
        %v4492 = vsel %vm4352, %v3183, %v3093
        %v4493 = vsel %vm4354, %v3273, %v4492
        %v4494 = vsel %vm4356, %v3363, %v4493
        %v4495 = vsel %vm4358, %v3453, %v4494
        %v4496 = vsel %vm4360, %v3543, %v4495
        %v4497 = vsel %vm4362, %v3633, %v4496
        %v4498 = vsel %vm4364, %v3723, %v4497
        %v4499 = vsel %vm4352, %v3189, %v3099
        %v4500 = vsel %vm4354, %v3279, %v4499
        %v4501 = vsel %vm4356, %v3369, %v4500
        %v4502 = vsel %vm4358, %v3459, %v4501
        %v4503 = vsel %vm4360, %v3549, %v4502
        %v4504 = vsel %vm4362, %v3639, %v4503
        %v4505 = vsel %vm4364, %v3729, %v4504
        %v4506 = vsel %vm4352, %v3195, %v3105
        %v4507 = vsel %vm4354, %v3285, %v4506
        %v4508 = vsel %vm4356, %v3375, %v4507
        %v4509 = vsel %vm4358, %v3465, %v4508
        %v4510 = vsel %vm4360, %v3555, %v4509
        %v4511 = vsel %vm4362, %v3645, %v4510
        %v4512 = vsel %vm4364, %v3735, %v4511
        %v4513 = vsel %vm4352, %v3201, %v3111
        %v4514 = vsel %vm4354, %v3291, %v4513
        %v4515 = vsel %vm4356, %v3381, %v4514
        %v4516 = vsel %vm4358, %v3471, %v4515
        %v4517 = vsel %vm4360, %v3561, %v4516
        %v4518 = vsel %vm4362, %v3651, %v4517
        %v4519 = vsel %vm4364, %v3741, %v4518
        %v4520 = vsel %vm4352, %v3207, %v3117
        %v4521 = vsel %vm4354, %v3297, %v4520
        %v4522 = vsel %vm4356, %v3387, %v4521
        %v4523 = vsel %vm4358, %v3477, %v4522
        %v4524 = vsel %vm4360, %v3567, %v4523
        %v4525 = vsel %vm4362, %v3657, %v4524
        %v4526 = vsel %vm4364, %v3747, %v4525
        %v4527 = vsel %vm4352, %v3213, %v3123
        %v4528 = vsel %vm4354, %v3303, %v4527
        %v4529 = vsel %vm4356, %v3393, %v4528
        %v4530 = vsel %vm4358, %v3483, %v4529
        %v4531 = vsel %vm4360, %v3573, %v4530
        %v4532 = vsel %vm4362, %v3663, %v4531
        %v4533 = vsel %vm4364, %v3753, %v4532
        %v4534 = vsel %vm4352, %v3219, %v3129
        %v4535 = vsel %vm4354, %v3309, %v4534
        %v4536 = vsel %vm4356, %v3399, %v4535
        %v4537 = vsel %vm4358, %v3489, %v4536
        %v4538 = vsel %vm4360, %v3579, %v4537
        %v4539 = vsel %vm4362, %v3669, %v4538
        %v4540 = vsel %vm4364, %v3759, %v4539
        %v4541 = vsel %vm4352, %v3225, %v3135
        %v4542 = vsel %vm4354, %v3315, %v4541
        %v4543 = vsel %vm4356, %v3405, %v4542
        %v4544 = vsel %vm4358, %v3495, %v4543
        %v4545 = vsel %vm4360, %v3585, %v4544
        %v4546 = vsel %vm4362, %v3675, %v4545
        %v4547 = vsel %vm4364, %v3765, %v4546
        %v4548 = vsel %vm4352, %v3231, %v3141
        %v4549 = vsel %vm4354, %v3321, %v4548
        %v4550 = vsel %vm4356, %v3411, %v4549
        %v4551 = vsel %vm4358, %v3501, %v4550
        %v4552 = vsel %vm4360, %v3591, %v4551
        %v4553 = vsel %vm4362, %v3681, %v4552
        %v4554 = vsel %vm4364, %v3771, %v4553
        %v4555 = vsel %vm4352, %v3237, %v3147
        %v4556 = vsel %vm4354, %v3327, %v4555
        %v4557 = vsel %vm4356, %v3417, %v4556
        %v4558 = vsel %vm4358, %v3507, %v4557
        %v4559 = vsel %vm4360, %v3597, %v4558
        %v4560 = vsel %vm4362, %v3687, %v4559
        %v4561 = vsel %vm4364, %v3777, %v4560
        %v4562 = vsel %vm4352, %v3243, %v3153
        %v4563 = vsel %vm4354, %v3333, %v4562
        %v4564 = vsel %vm4356, %v3423, %v4563
        %v4565 = vsel %vm4358, %v3513, %v4564
        %v4566 = vsel %vm4360, %v3603, %v4565
        %v4567 = vsel %vm4362, %v3693, %v4566
        %v4568 = vsel %vm4364, %v3783, %v4567
        %4599 = vmatprep.subr.mxu0 0.0
        %4600 = vmatpush1.msra.mxu0 %v3799
        %4601 = vmatprep.subr.mxu0 0.0
        %4602 = vmatpush1.msra.mxu0 %v3798
        %4603 = vmatprep.subr.mxu0 0.0
        %4604 = vmatpush1.msra.mxu0 %v3797
        %4605 = vmatprep.subr.mxu0 0.0
        %4606 = vmatpush1.msra.mxu0 %v3796
        %4607 = vmatprep.subr.mxu0 0.0
        %4608 = vmatpush1.msra.mxu0 %v3795
        %4609 = vmatprep.subr.mxu0 0.0
        %4610 = vmatpush1.msra.mxu0 %v3794
        %4611 = vmatprep.subr.mxu0 0.0
        %4612 = vmatpush1.msra.mxu0 %v3793
        %4613 = vmatprep.subr.mxu0 0.0
        %4614 = vmatpush1.msra.mxu0 %v3792
        %4615 = vmatprep.subr.mxu0 0.0
        %4616 = vmatpush1.msra.mxu0 %v3791
        %4617 = vmatprep.subr.mxu0 0.0
        %4618 = vmatpush1.msra.mxu0 %v3790
        %4619 = vmatprep.subr.mxu0 0.0
        %4620 = vmatpush1.msra.mxu0 %v3789
        %4621 = vmatprep.subr.mxu0 0.0
        %4622 = vmatpush1.msra.mxu0 %v3788
        %4623 = vmatprep.subr.mxu0 0.0
        %4624 = vmatpush1.msra.mxu0 %v3787
        %4625 = vmatprep.subr.mxu0 0.0
        %4626 = vmatpush1.msra.mxu0 %v3786
        %4627 = vmatprep.subr.mxu0 0.0
        %4628 = vmatpush1.msra.mxu0 %v3785
        %4629 = vmatprep.subr.mxu0 0.0
        %4630 = vmatpush1.msra.mxu0 %v3784
        %4631 = vmatprep.subr.mxu0 0.0
        %4632 = vmatpush2.msra.mxu0 %v3815
        %4633 = vmatprep.subr.mxu0 0.0
        %4634 = vmatpush2.msra.mxu0 %v3814
        %4635 = vmatprep.subr.mxu0 0.0
        %4636 = vmatpush2.msra.mxu0 %v3813
        %4637 = vmatprep.subr.mxu0 0.0
        %4638 = vmatpush2.msra.mxu0 %v3812
        %4639 = vmatprep.subr.mxu0 0.0
        %4640 = vmatpush2.msra.mxu0 %v3811
        %4641 = vmatprep.subr.mxu0 0.0
        %4642 = vmatpush2.msra.mxu0 %v3810
        %4643 = vmatprep.subr.mxu0 0.0
        %4644 = vmatpush2.msra.mxu0 %v3809
        %4645 = vmatprep.subr.mxu0 0.0
        %4646 = vmatpush2.msra.mxu0 %v3808
        %4647 = vmatprep.subr.mxu0 0.0
        %4648 = vmatpush2.msra.mxu0 %v3807
        %4649 = vmatprep.subr.mxu0 0.0
        %4650 = vmatpush2.msra.mxu0 %v3806
        %4651 = vmatprep.subr.mxu0 0.0
        %4652 = vmatpush2.msra.mxu0 %v3805
        %4653 = vmatprep.subr.mxu0 0.0
        %4654 = vmatpush2.msra.mxu0 %v3804
        %4655 = vmatprep.subr.mxu0 0.0
        %4656 = vmatpush2.msra.mxu0 %v3803
        %4657 = vmatprep.subr.mxu0 0.0
        %4658 = vmatpush2.msra.mxu0 %v3802
        %4659 = vmatprep.subr.mxu0 0.0
        %4660 = vmatpush2.msra.mxu0 %v3801
        %4661 = vmatprep.subr.mxu0 0.0
        %4662 = vmatpush2.msra.mxu0 %v3800
        %4663 = vmatprep.mubr.f32.mxu0 %v4372
        %4664 = vmatmul.mubr.f32.gmra.mxu0 %v4365
        %v4665 = vpop.f32.mrf.mxu0
        %v4666 = vadd.f32 %v4104, %v4665
        %v4667 = vpop.f32.mrf.mxu0
        %4668 = vmatprep.mubr.f32.mxu0 %v4477
        %4669 = vmatmul.mubr.f32.gmra.mxu0 %v4470
        %v4670 = vpop.f32.mrf.mxu0
        %v4671 = vadd.f32 %v4109, %v4670
        %v4672 = vpop.f32.mrf.mxu0
        %4673 = vdwg.mxu0
        %4674 = vmatprep.subr.mxu0 0.0
        %4675 = vmatpush1.msra.mxu0 %v3831
        %4676 = vmatprep.subr.mxu0 0.0
        %4677 = vmatpush1.msra.mxu0 %v3830
        %4678 = vmatprep.subr.mxu0 0.0
        %4679 = vmatpush1.msra.mxu0 %v3829
        %4680 = vmatprep.subr.mxu0 0.0
        %4681 = vmatpush1.msra.mxu0 %v3828
        %4682 = vmatprep.subr.mxu0 0.0
        %4683 = vmatpush1.msra.mxu0 %v3827
        %4684 = vmatprep.subr.mxu0 0.0
        %4685 = vmatpush1.msra.mxu0 %v3826
        %4686 = vmatprep.subr.mxu0 0.0
        %4687 = vmatpush1.msra.mxu0 %v3825
        %4688 = vmatprep.subr.mxu0 0.0
        %4689 = vmatpush1.msra.mxu0 %v3824
        %4690 = vmatprep.subr.mxu0 0.0
        %4691 = vmatpush1.msra.mxu0 %v3823
        %4692 = vmatprep.subr.mxu0 0.0
        %4693 = vmatpush1.msra.mxu0 %v3822
        %4694 = vmatprep.subr.mxu0 0.0
        %4695 = vmatpush1.msra.mxu0 %v3821
        %4696 = vmatprep.subr.mxu0 0.0
        %4697 = vmatpush1.msra.mxu0 %v3820
        %4698 = vmatprep.subr.mxu0 0.0
        %4699 = vmatpush1.msra.mxu0 %v3819
        %4700 = vmatprep.subr.mxu0 0.0
        %4701 = vmatpush1.msra.mxu0 %v3818
        %4702 = vmatprep.subr.mxu0 0.0
        %4703 = vmatpush1.msra.mxu0 %v3817
        %4704 = vmatprep.subr.mxu0 0.0
        %4705 = vmatpush1.msra.mxu0 %v3816
        %4706 = vmatprep.subr.mxu0 0.0
        %4707 = vmatpush2.msra.mxu0 %v3847
        %4708 = vmatprep.subr.mxu0 0.0
        %4709 = vmatpush2.msra.mxu0 %v3846
        %4710 = vmatprep.subr.mxu0 0.0
        %4711 = vmatpush2.msra.mxu0 %v3845
        %4712 = vmatprep.subr.mxu0 0.0
        %4713 = vmatpush2.msra.mxu0 %v3844
        %4714 = vmatprep.subr.mxu0 0.0
        %4715 = vmatpush2.msra.mxu0 %v3843
        %4716 = vmatprep.subr.mxu0 0.0
        %4717 = vmatpush2.msra.mxu0 %v3842
        %4718 = vmatprep.subr.mxu0 0.0
        %4719 = vmatpush2.msra.mxu0 %v3841
        %4720 = vmatprep.subr.mxu0 0.0
        %4721 = vmatpush2.msra.mxu0 %v3840
        %4722 = vmatprep.subr.mxu0 0.0
        %4723 = vmatpush2.msra.mxu0 %v3839
        %4724 = vmatprep.subr.mxu0 0.0
        %4725 = vmatpush2.msra.mxu0 %v3838
        %4726 = vmatprep.subr.mxu0 0.0
        %4727 = vmatpush2.msra.mxu0 %v3837
        %4728 = vmatprep.subr.mxu0 0.0
        %4729 = vmatpush2.msra.mxu0 %v3836
        %4730 = vmatprep.subr.mxu0 0.0
        %4731 = vmatpush2.msra.mxu0 %v3835
        %4732 = vmatprep.subr.mxu0 0.0
        %4733 = vmatpush2.msra.mxu0 %v3834
        %4734 = vmatprep.subr.mxu0 0.0
        %4735 = vmatpush2.msra.mxu0 %v3833
        %4736 = vmatprep.subr.mxu0 0.0
        %4737 = vmatpush2.msra.mxu0 %v3832
        %4738 = vmatprep.mubr.f32.mxu0 %v4386
        %4739 = vmatmul.mubr.f32.gmra.mxu0 %v4379
        %v4740 = vpop.f32.mrf.mxu0
        %v4741 = vadd.f32 %v4666, %v4740
        %v4742 = vpop.f32.mrf.mxu0
        %4743 = vmatprep.mubr.f32.mxu0 %v4491
        %4744 = vmatmul.mubr.f32.gmra.mxu0 %v4484
        %v4745 = vpop.f32.mrf.mxu0
        %v4746 = vadd.f32 %v4671, %v4745
        %v4747 = vpop.f32.mrf.mxu0
        %4748 = vdwg.mxu0
        %4749 = vmatprep.subr.mxu0 0.0
        %4750 = vmatpush1.msra.mxu0 %v3863
        %4751 = vmatprep.subr.mxu0 0.0
        %4752 = vmatpush1.msra.mxu0 %v3862
        %4753 = vmatprep.subr.mxu0 0.0
        %4754 = vmatpush1.msra.mxu0 %v3861
        %4755 = vmatprep.subr.mxu0 0.0
        %4756 = vmatpush1.msra.mxu0 %v3860
        %4757 = vmatprep.subr.mxu0 0.0
        %4758 = vmatpush1.msra.mxu0 %v3859
        %4759 = vmatprep.subr.mxu0 0.0
        %4760 = vmatpush1.msra.mxu0 %v3858
        %4761 = vmatprep.subr.mxu0 0.0
        %4762 = vmatpush1.msra.mxu0 %v3857
        %4763 = vmatprep.subr.mxu0 0.0
        %4764 = vmatpush1.msra.mxu0 %v3856
        %4765 = vmatprep.subr.mxu0 0.0
        %4766 = vmatpush1.msra.mxu0 %v3855
        %4767 = vmatprep.subr.mxu0 0.0
        %4768 = vmatpush1.msra.mxu0 %v3854
        %4769 = vmatprep.subr.mxu0 0.0
        %4770 = vmatpush1.msra.mxu0 %v3853
        %4771 = vmatprep.subr.mxu0 0.0
        %4772 = vmatpush1.msra.mxu0 %v3852
        %4773 = vmatprep.subr.mxu0 0.0
        %4774 = vmatpush1.msra.mxu0 %v3851
        %4775 = vmatprep.subr.mxu0 0.0
        %4776 = vmatpush1.msra.mxu0 %v3850
        %4777 = vmatprep.subr.mxu0 0.0
        %4778 = vmatpush1.msra.mxu0 %v3849
        %4779 = vmatprep.subr.mxu0 0.0
        %4780 = vmatpush1.msra.mxu0 %v3848
        %4781 = vmatprep.subr.mxu0 0.0
        %4782 = vmatpush2.msra.mxu0 %v3879
        %4783 = vmatprep.subr.mxu0 0.0
        %4784 = vmatpush2.msra.mxu0 %v3878
        %4785 = vmatprep.subr.mxu0 0.0
        %4786 = vmatpush2.msra.mxu0 %v3877
        %4787 = vmatprep.subr.mxu0 0.0
        %4788 = vmatpush2.msra.mxu0 %v3876
        %4789 = vmatprep.subr.mxu0 0.0
        %4790 = vmatpush2.msra.mxu0 %v3875
        %4791 = vmatprep.subr.mxu0 0.0
        %4792 = vmatpush2.msra.mxu0 %v3874
        %4793 = vmatprep.subr.mxu0 0.0
        %4794 = vmatpush2.msra.mxu0 %v3873
        %4795 = vmatprep.subr.mxu0 0.0
        %4796 = vmatpush2.msra.mxu0 %v3872
        %4797 = vmatprep.subr.mxu0 0.0
        %4798 = vmatpush2.msra.mxu0 %v3871
        %4799 = vmatprep.subr.mxu0 0.0
        %4800 = vmatpush2.msra.mxu0 %v3870
        %4801 = vmatprep.subr.mxu0 0.0
        %4802 = vmatpush2.msra.mxu0 %v3869
        %4803 = vmatprep.subr.mxu0 0.0
        %4804 = vmatpush2.msra.mxu0 %v3868
        %4805 = vmatprep.subr.mxu0 0.0
        %4806 = vmatpush2.msra.mxu0 %v3867
        %4807 = vmatprep.subr.mxu0 0.0
        %4808 = vmatpush2.msra.mxu0 %v3866
        %4809 = vmatprep.subr.mxu0 0.0
        %4810 = vmatpush2.msra.mxu0 %v3865
        %4811 = vmatprep.subr.mxu0 0.0
        %4812 = vmatpush2.msra.mxu0 %v3864
        %4813 = vmatprep.mubr.f32.mxu0 %v4400
        %4814 = vmatmul.mubr.f32.gmra.mxu0 %v4393
        %v4815 = vpop.f32.mrf.mxu0
        %v4816 = vadd.f32 %v4741, %v4815
        %v4817 = vpop.f32.mrf.mxu0
        %4818 = vmatprep.mubr.f32.mxu0 %v4505
        %4819 = vmatmul.mubr.f32.gmra.mxu0 %v4498
        %v4820 = vpop.f32.mrf.mxu0
        %v4821 = vadd.f32 %v4746, %v4820
        %v4822 = vpop.f32.mrf.mxu0
        %4823 = vdwg.mxu0
        %4824 = vmatprep.subr.mxu0 0.0
        %4825 = vmatpush1.msra.mxu0 %v3895
        %4826 = vmatprep.subr.mxu0 0.0
        %4827 = vmatpush1.msra.mxu0 %v3894
        %4828 = vmatprep.subr.mxu0 0.0
        %4829 = vmatpush1.msra.mxu0 %v3893
        %4830 = vmatprep.subr.mxu0 0.0
        %4831 = vmatpush1.msra.mxu0 %v3892
        %4832 = vmatprep.subr.mxu0 0.0
        %4833 = vmatpush1.msra.mxu0 %v3891
        %4834 = vmatprep.subr.mxu0 0.0
        %4835 = vmatpush1.msra.mxu0 %v3890
        %4836 = vmatprep.subr.mxu0 0.0
        %4837 = vmatpush1.msra.mxu0 %v3889
        %4838 = vmatprep.subr.mxu0 0.0
        %4839 = vmatpush1.msra.mxu0 %v3888
        %4840 = vmatprep.subr.mxu0 0.0
        %4841 = vmatpush1.msra.mxu0 %v3887
        %4842 = vmatprep.subr.mxu0 0.0
        %4843 = vmatpush1.msra.mxu0 %v3886
        %4844 = vmatprep.subr.mxu0 0.0
        %4845 = vmatpush1.msra.mxu0 %v3885
        %4846 = vmatprep.subr.mxu0 0.0
        %4847 = vmatpush1.msra.mxu0 %v3884
        %4848 = vmatprep.subr.mxu0 0.0
        %4849 = vmatpush1.msra.mxu0 %v3883
        %4850 = vmatprep.subr.mxu0 0.0
        %4851 = vmatpush1.msra.mxu0 %v3882
        %4852 = vmatprep.subr.mxu0 0.0
        %4853 = vmatpush1.msra.mxu0 %v3881
        %4854 = vmatprep.subr.mxu0 0.0
        %4855 = vmatpush1.msra.mxu0 %v3880
        %4856 = vmatprep.subr.mxu0 0.0
        %4857 = vmatpush2.msra.mxu0 %v3911
        %4858 = vmatprep.subr.mxu0 0.0
        %4859 = vmatpush2.msra.mxu0 %v3910
        %4860 = vmatprep.subr.mxu0 0.0
        %4861 = vmatpush2.msra.mxu0 %v3909
        %4862 = vmatprep.subr.mxu0 0.0
        %4863 = vmatpush2.msra.mxu0 %v3908
        %4864 = vmatprep.subr.mxu0 0.0
        %4865 = vmatpush2.msra.mxu0 %v3907
        %4866 = vmatprep.subr.mxu0 0.0
        %4867 = vmatpush2.msra.mxu0 %v3906
        %4868 = vmatprep.subr.mxu0 0.0
        %4869 = vmatpush2.msra.mxu0 %v3905
        %4870 = vmatprep.subr.mxu0 0.0
        %4871 = vmatpush2.msra.mxu0 %v3904
        %4872 = vmatprep.subr.mxu0 0.0
        %4873 = vmatpush2.msra.mxu0 %v3903
        %4874 = vmatprep.subr.mxu0 0.0
        %4875 = vmatpush2.msra.mxu0 %v3902
        %4876 = vmatprep.subr.mxu0 0.0
        %4877 = vmatpush2.msra.mxu0 %v3901
        %4878 = vmatprep.subr.mxu0 0.0
        %4879 = vmatpush2.msra.mxu0 %v3900
        %4880 = vmatprep.subr.mxu0 0.0
        %4881 = vmatpush2.msra.mxu0 %v3899
        %4882 = vmatprep.subr.mxu0 0.0
        %4883 = vmatpush2.msra.mxu0 %v3898
        %4884 = vmatprep.subr.mxu0 0.0
        %4885 = vmatpush2.msra.mxu0 %v3897
        %4886 = vmatprep.subr.mxu0 0.0
        %4887 = vmatpush2.msra.mxu0 %v3896
        %4888 = vmatprep.mubr.f32.mxu0 %v4414
        %4889 = vmatmul.mubr.f32.gmra.mxu0 %v4407
        %v4890 = vpop.f32.mrf.mxu0
        %v4891 = vadd.f32 %v4816, %v4890
        %v4892 = vpop.f32.mrf.mxu0
        %4893 = vmatprep.mubr.f32.mxu0 %v4519
        %4894 = vmatmul.mubr.f32.gmra.mxu0 %v4512
        %v4895 = vpop.f32.mrf.mxu0
        %v4896 = vadd.f32 %v4821, %v4895
        %v4897 = vpop.f32.mrf.mxu0
        %4898 = vdwg.mxu0
        %4899 = vmatprep.subr.mxu0 0.0
        %4900 = vmatpush1.msra.mxu0 %v3927
        %4901 = vmatprep.subr.mxu0 0.0
        %4902 = vmatpush1.msra.mxu0 %v3926
        %4903 = vmatprep.subr.mxu0 0.0
        %4904 = vmatpush1.msra.mxu0 %v3925
        %4905 = vmatprep.subr.mxu0 0.0
        %4906 = vmatpush1.msra.mxu0 %v3924
        %4907 = vmatprep.subr.mxu0 0.0
        %4908 = vmatpush1.msra.mxu0 %v3923
        %4909 = vmatprep.subr.mxu0 0.0
        %4910 = vmatpush1.msra.mxu0 %v3922
        %4911 = vmatprep.subr.mxu0 0.0
        %4912 = vmatpush1.msra.mxu0 %v3921
        %4913 = vmatprep.subr.mxu0 0.0
        %4914 = vmatpush1.msra.mxu0 %v3920
        %4915 = vmatprep.subr.mxu0 0.0
        %4916 = vmatpush1.msra.mxu0 %v3919
        %4917 = vmatprep.subr.mxu0 0.0
        %4918 = vmatpush1.msra.mxu0 %v3918
        %4919 = vmatprep.subr.mxu0 0.0
        %4920 = vmatpush1.msra.mxu0 %v3917
        %4921 = vmatprep.subr.mxu0 0.0
        %4922 = vmatpush1.msra.mxu0 %v3916
        %4923 = vmatprep.subr.mxu0 0.0
        %4924 = vmatpush1.msra.mxu0 %v3915
        %4925 = vmatprep.subr.mxu0 0.0
        %4926 = vmatpush1.msra.mxu0 %v3914
        %4927 = vmatprep.subr.mxu0 0.0
        %4928 = vmatpush1.msra.mxu0 %v3913
        %4929 = vmatprep.subr.mxu0 0.0
        %4930 = vmatpush1.msra.mxu0 %v3912
        %4931 = vmatprep.subr.mxu0 0.0
        %4932 = vmatpush2.msra.mxu0 %v3943
        %4933 = vmatprep.subr.mxu0 0.0
        %4934 = vmatpush2.msra.mxu0 %v3942
        %4935 = vmatprep.subr.mxu0 0.0
        %4936 = vmatpush2.msra.mxu0 %v3941
        %4937 = vmatprep.subr.mxu0 0.0
        %4938 = vmatpush2.msra.mxu0 %v3940
        %4939 = vmatprep.subr.mxu0 0.0
        %4940 = vmatpush2.msra.mxu0 %v3939
        %4941 = vmatprep.subr.mxu0 0.0
        %4942 = vmatpush2.msra.mxu0 %v3938
        %4943 = vmatprep.subr.mxu0 0.0
        %4944 = vmatpush2.msra.mxu0 %v3937
        %4945 = vmatprep.subr.mxu0 0.0
        %4946 = vmatpush2.msra.mxu0 %v3936
        %4947 = vmatprep.subr.mxu0 0.0
        %4948 = vmatpush2.msra.mxu0 %v3935
        %4949 = vmatprep.subr.mxu0 0.0
        %4950 = vmatpush2.msra.mxu0 %v3934
        %4951 = vmatprep.subr.mxu0 0.0
        %4952 = vmatpush2.msra.mxu0 %v3933
        %4953 = vmatprep.subr.mxu0 0.0
        %4954 = vmatpush2.msra.mxu0 %v3932
        %4955 = vmatprep.subr.mxu0 0.0
        %4956 = vmatpush2.msra.mxu0 %v3931
        %4957 = vmatprep.subr.mxu0 0.0
        %4958 = vmatpush2.msra.mxu0 %v3930
        %4959 = vmatprep.subr.mxu0 0.0
        %4960 = vmatpush2.msra.mxu0 %v3929
        %4961 = vmatprep.subr.mxu0 0.0
        %4962 = vmatpush2.msra.mxu0 %v3928
        %4963 = vmatprep.mubr.f32.mxu0 %v4428
        %4964 = vmatmul.mubr.f32.gmra.mxu0 %v4421
        %v4965 = vpop.f32.mrf.mxu0
        %v4966 = vadd.f32 %v4891, %v4965
        %v4967 = vpop.f32.mrf.mxu0
        %4968 = vmatprep.mubr.f32.mxu0 %v4533
        %4969 = vmatmul.mubr.f32.gmra.mxu0 %v4526
        %v4970 = vpop.f32.mrf.mxu0
        %v4971 = vadd.f32 %v4896, %v4970
        %v4972 = vpop.f32.mrf.mxu0
        %4973 = vdwg.mxu0
        %4974 = vmatprep.subr.mxu0 0.0
        %4975 = vmatpush1.msra.mxu0 %v3959
        %4976 = vmatprep.subr.mxu0 0.0
        %4977 = vmatpush1.msra.mxu0 %v3958
        %4978 = vmatprep.subr.mxu0 0.0
        %4979 = vmatpush1.msra.mxu0 %v3957
        %4980 = vmatprep.subr.mxu0 0.0
        %4981 = vmatpush1.msra.mxu0 %v3956
        %4982 = vmatprep.subr.mxu0 0.0
        %4983 = vmatpush1.msra.mxu0 %v3955
        %4984 = vmatprep.subr.mxu0 0.0
        %4985 = vmatpush1.msra.mxu0 %v3954
        %4986 = vmatprep.subr.mxu0 0.0
        %4987 = vmatpush1.msra.mxu0 %v3953
        %4988 = vmatprep.subr.mxu0 0.0
        %4989 = vmatpush1.msra.mxu0 %v3952
        %4990 = vmatprep.subr.mxu0 0.0
        %4991 = vmatpush1.msra.mxu0 %v3951
        %4992 = vmatprep.subr.mxu0 0.0
        %4993 = vmatpush1.msra.mxu0 %v3950
        %4994 = vmatprep.subr.mxu0 0.0
        %4995 = vmatpush1.msra.mxu0 %v3949
        %4996 = vmatprep.subr.mxu0 0.0
        %4997 = vmatpush1.msra.mxu0 %v3948
        %4998 = vmatprep.subr.mxu0 0.0
        %4999 = vmatpush1.msra.mxu0 %v3947
        %5000 = vmatprep.subr.mxu0 0.0
        %5001 = vmatpush1.msra.mxu0 %v3946
        %5002 = vmatprep.subr.mxu0 0.0
        %5003 = vmatpush1.msra.mxu0 %v3945
        %5004 = vmatprep.subr.mxu0 0.0
        %5005 = vmatpush1.msra.mxu0 %v3944
        %5006 = vmatprep.subr.mxu0 0.0
        %5007 = vmatpush2.msra.mxu0 %v3975
        %5008 = vmatprep.subr.mxu0 0.0
        %5009 = vmatpush2.msra.mxu0 %v3974
        %5010 = vmatprep.subr.mxu0 0.0
        %5011 = vmatpush2.msra.mxu0 %v3973
        %5012 = vmatprep.subr.mxu0 0.0
        %5013 = vmatpush2.msra.mxu0 %v3972
        %5014 = vmatprep.subr.mxu0 0.0
        %5015 = vmatpush2.msra.mxu0 %v3971
        %5016 = vmatprep.subr.mxu0 0.0
        %5017 = vmatpush2.msra.mxu0 %v3970
        %5018 = vmatprep.subr.mxu0 0.0
        %5019 = vmatpush2.msra.mxu0 %v3969
        %5020 = vmatprep.subr.mxu0 0.0
        %5021 = vmatpush2.msra.mxu0 %v3968
        %5022 = vmatprep.subr.mxu0 0.0
        %5023 = vmatpush2.msra.mxu0 %v3967
        %5024 = vmatprep.subr.mxu0 0.0
        %5025 = vmatpush2.msra.mxu0 %v3966
        %5026 = vmatprep.subr.mxu0 0.0
        %5027 = vmatpush2.msra.mxu0 %v3965
        %5028 = vmatprep.subr.mxu0 0.0
        %5029 = vmatpush2.msra.mxu0 %v3964
        %5030 = vmatprep.subr.mxu0 0.0
        %5031 = vmatpush2.msra.mxu0 %v3963
        %5032 = vmatprep.subr.mxu0 0.0
        %5033 = vmatpush2.msra.mxu0 %v3962
        %5034 = vmatprep.subr.mxu0 0.0
        %5035 = vmatpush2.msra.mxu0 %v3961
        %5036 = vmatprep.subr.mxu0 0.0
        %5037 = vmatpush2.msra.mxu0 %v3960
        %5038 = vmatprep.mubr.f32.mxu0 %v4442
        %5039 = vmatmul.mubr.f32.gmra.mxu0 %v4435
        %v5040 = vpop.f32.mrf.mxu0
        %v5041 = vadd.f32 %v4966, %v5040
        %v5042 = vpop.f32.mrf.mxu0
        %5043 = vmatprep.mubr.f32.mxu0 %v4547
        %5044 = vmatmul.mubr.f32.gmra.mxu0 %v4540
        %v5045 = vpop.f32.mrf.mxu0
        %v5046 = vadd.f32 %v4971, %v5045
        %v5047 = vpop.f32.mrf.mxu0
        %5048 = vdwg.mxu0
        %5049 = vmatprep.subr.mxu0 0.0
        %5050 = vmatpush1.msra.mxu0 %v3991
        %5051 = vmatprep.subr.mxu0 0.0
        %5052 = vmatpush1.msra.mxu0 %v3990
        %5053 = vmatprep.subr.mxu0 0.0
        %5054 = vmatpush1.msra.mxu0 %v3989
        %5055 = vmatprep.subr.mxu0 0.0
        %5056 = vmatpush1.msra.mxu0 %v3988
        %5057 = vmatprep.subr.mxu0 0.0
        %5058 = vmatpush1.msra.mxu0 %v3987
        %5059 = vmatprep.subr.mxu0 0.0
        %5060 = vmatpush1.msra.mxu0 %v3986
        %5061 = vmatprep.subr.mxu0 0.0
        %5062 = vmatpush1.msra.mxu0 %v3985
        %5063 = vmatprep.subr.mxu0 0.0
        %5064 = vmatpush1.msra.mxu0 %v3984
        %5065 = vmatprep.subr.mxu0 0.0
        %5066 = vmatpush1.msra.mxu0 %v3983
        %5067 = vmatprep.subr.mxu0 0.0
        %5068 = vmatpush1.msra.mxu0 %v3982
        %5069 = vmatprep.subr.mxu0 0.0
        %5070 = vmatpush1.msra.mxu0 %v3981
        %5071 = vmatprep.subr.mxu0 0.0
        %5072 = vmatpush1.msra.mxu0 %v3980
        %5073 = vmatprep.subr.mxu0 0.0
        %5074 = vmatpush1.msra.mxu0 %v3979
        %5075 = vmatprep.subr.mxu0 0.0
        %5076 = vmatpush1.msra.mxu0 %v3978
        %5077 = vmatprep.subr.mxu0 0.0
        %5078 = vmatpush1.msra.mxu0 %v3977
        %5079 = vmatprep.subr.mxu0 0.0
        %5080 = vmatpush1.msra.mxu0 %v3976
        %5081 = vmatprep.subr.mxu0 0.0
        %5082 = vmatpush2.msra.mxu0 %v4007
        %5083 = vmatprep.subr.mxu0 0.0
        %5084 = vmatpush2.msra.mxu0 %v4006
        %5085 = vmatprep.subr.mxu0 0.0
        %5086 = vmatpush2.msra.mxu0 %v4005
        %5087 = vmatprep.subr.mxu0 0.0
        %5088 = vmatpush2.msra.mxu0 %v4004
        %5089 = vmatprep.subr.mxu0 0.0
        %5090 = vmatpush2.msra.mxu0 %v4003
        %5091 = vmatprep.subr.mxu0 0.0
        %5092 = vmatpush2.msra.mxu0 %v4002
        %5093 = vmatprep.subr.mxu0 0.0
        %5094 = vmatpush2.msra.mxu0 %v4001
        %5095 = vmatprep.subr.mxu0 0.0
        %5096 = vmatpush2.msra.mxu0 %v4000
        %5097 = vmatprep.subr.mxu0 0.0
        %5098 = vmatpush2.msra.mxu0 %v3999
        %5099 = vmatprep.subr.mxu0 0.0
        %5100 = vmatpush2.msra.mxu0 %v3998
        %5101 = vmatprep.subr.mxu0 0.0
        %5102 = vmatpush2.msra.mxu0 %v3997
        %5103 = vmatprep.subr.mxu0 0.0
        %5104 = vmatpush2.msra.mxu0 %v3996
        %5105 = vmatprep.subr.mxu0 0.0
        %5106 = vmatpush2.msra.mxu0 %v3995
        %5107 = vmatprep.subr.mxu0 0.0
        %5108 = vmatpush2.msra.mxu0 %v3994
        %5109 = vmatprep.subr.mxu0 0.0
        %5110 = vmatpush2.msra.mxu0 %v3993
        %5111 = vmatprep.subr.mxu0 0.0
        %5112 = vmatpush2.msra.mxu0 %v3992
        %5113 = vmatprep.mubr.f32.mxu0 %v4456
        %5114 = vmatmul.mubr.f32.gmra.mxu0 %v4449
        %v5115 = vpop.f32.mrf.mxu0
        %v5116 = vadd.f32 %v5041, %v5115
        %v5117 = vpop.f32.mrf.mxu0
        %5118 = vmatprep.mubr.f32.mxu0 %v4561
        %5119 = vmatmul.mubr.f32.gmra.mxu0 %v4554
        %v5120 = vpop.f32.mrf.mxu0
        %v5121 = vadd.f32 %v5046, %v5120
        %v5122 = vpop.f32.mrf.mxu0
        %5123 = vdwg.mxu0
        %5124 = vmatprep.subr.mxu0 0.0
        %5125 = vmatpush1.msra.mxu0 %v4023
        %5126 = vmatprep.subr.mxu0 0.0
        %5127 = vmatpush1.msra.mxu0 %v4022
        %5128 = vmatprep.subr.mxu0 0.0
        %5129 = vmatpush1.msra.mxu0 %v4021
        %5130 = vmatprep.subr.mxu0 0.0
        %5131 = vmatpush1.msra.mxu0 %v4020
        %5132 = vmatprep.subr.mxu0 0.0
        %5133 = vmatpush1.msra.mxu0 %v4019
        %5134 = vmatprep.subr.mxu0 0.0
        %5135 = vmatpush1.msra.mxu0 %v4018
        %5136 = vmatprep.subr.mxu0 0.0
        %5137 = vmatpush1.msra.mxu0 %v4017
        %5138 = vmatprep.subr.mxu0 0.0
        %5139 = vmatpush1.msra.mxu0 %v4016
        %5140 = vmatprep.subr.mxu0 0.0
        %5141 = vmatpush1.msra.mxu0 %v4015
        %5142 = vmatprep.subr.mxu0 0.0
        %5143 = vmatpush1.msra.mxu0 %v4014
        %5144 = vmatprep.subr.mxu0 0.0
        %5145 = vmatpush1.msra.mxu0 %v4013
        %5146 = vmatprep.subr.mxu0 0.0
        %5147 = vmatpush1.msra.mxu0 %v4012
        %5148 = vmatprep.subr.mxu0 0.0
        %5149 = vmatpush1.msra.mxu0 %v4011
        %5150 = vmatprep.subr.mxu0 0.0
        %5151 = vmatpush1.msra.mxu0 %v4010
        %5152 = vmatprep.subr.mxu0 0.0
        %5153 = vmatpush1.msra.mxu0 %v4009
        %5154 = vmatprep.subr.mxu0 0.0
        %5155 = vmatpush1.msra.mxu0 %v4008
        %5156 = vmatprep.subr.mxu0 0.0
        %5157 = vmatpush2.msra.mxu0 0.0
        %5158 = vmatprep.subr.mxu0 0.0
        %5159 = vmatpush2.msra.mxu0 0.0
        %5160 = vmatprep.subr.mxu0 0.0
        %5161 = vmatpush2.msra.mxu0 0.0
        %5162 = vmatprep.subr.mxu0 0.0
        %5163 = vmatpush2.msra.mxu0 0.0
        %5164 = vmatprep.subr.mxu0 0.0
        %5165 = vmatpush2.msra.mxu0 0.0
        %5166 = vmatprep.subr.mxu0 0.0
        %5167 = vmatpush2.msra.mxu0 0.0
        %5168 = vmatprep.subr.mxu0 0.0
        %5169 = vmatpush2.msra.mxu0 0.0
        %5170 = vmatprep.subr.mxu0 0.0
        %5171 = vmatpush2.msra.mxu0 0.0
        %5172 = vmatprep.subr.mxu0 0.0
        %5173 = vmatpush2.msra.mxu0 0.0
        %5174 = vmatprep.subr.mxu0 0.0
        %5175 = vmatpush2.msra.mxu0 0.0
        %5176 = vmatprep.subr.mxu0 0.0
        %5177 = vmatpush2.msra.mxu0 0.0
        %5178 = vmatprep.subr.mxu0 0.0
        %5179 = vmatpush2.msra.mxu0 0.0
        %5180 = vmatprep.subr.mxu0 0.0
        %5181 = vmatpush2.msra.mxu0 0.0
        %5182 = vmatprep.subr.mxu0 0.0
        %5183 = vmatpush2.msra.mxu0 0.0
        %5184 = vmatprep.subr.mxu0 0.0
        %5185 = vmatpush2.msra.mxu0 0.0
        %5186 = vmatprep.subr.mxu0 0.0
        %5187 = vmatpush2.msra.mxu0 0.0
        %5188 = vmatprep.mubr.f32.mxu0 0.0
        %5189 = vmatmul.mubr.f32.gmra.mxu0 %v4463
        %v5190 = vpop.f32.mrf.mxu0
        %v5191 = vadd.f32 %v5116, %v5190
        %v5192 = vpop.f32.mrf.mxu0
        %5193 = vmatprep.mubr.f32.mxu0 0.0
        %5194 = vmatmul.mubr.f32.gmra.mxu0 %v4568
        %v5195 = vpop.f32.mrf.mxu0
        %v5196 = vadd.f32 %v5121, %v5195
        %v5197 = vpop.f32.mrf.mxu0
        %5198 = vdwg.mxu0
        %v5199 = vld [vmem:[%s6] sm:$0x1]
        %v5201 = vlaneseq
        %v5202 = vshrl.u32 %v5201, 7
        %v5203 = vsub.s32 0, %v5202
        %v5204 = vrot.slane %v5199, %v5203
        %v5206 = vadd.f32 %v5191, %v5204
        %v5207 = vadd.f32 %v5196, %v5204
        %5208 = vst [vmem:[%s318] sm:$0xff] %v5206
        %5209 = vst [vmem:[%s318 + $0x8] sm:$0xff] %v5207
        %s5210 = sand.u32 %s188, 1
        %s5211 = scalar_lea.sflag [#allocation4], %s5210
        %s5212 = sand.u32 %s188, 1
        %s5213 = smul.addr %s5212, 16
        %s5214 = scalar_lea.vmem [#allocation7], %s5213
        // Predicated region
        $region57: #{tpu_custom_call.1} parent=47 // pred_check
          %p5215 = pneg %p198
        $region58: #{tpu_custom_call.1} parent=47 // pred_check_branch
          %5217 = sbr.rel (%p5215) target = $region60
        $region59: #{tpu_custom_call.1} parent=47 // pred_region
          %s5218 = smul.u32 2, %s23
          %s5220 = ssub.s32 256, 256
          %5221 = vsyncadd %s5211, %s5220
          %s5222 = smul.addr %s5218, 128
          %s5223 = scalar_lea.hbm %s7, %s5222
          %s5224 = sshll.u32 %s5214, 4
          %s5225 = int_to_ptr.vmem [resolvable:$true] %s5224
          %5230 = dma.vmem_to_hbm [thread:$0]  %s5225, 256, %s5223, %s5211, 128, 128, 8
        $region60: #{tpu_custom_call.1} parent=47 // pred_fallthru
          _
      $region48: #{tpu_custom_call.1} parent=5 // pred_fallthru
        _
      %p5231 = scmp.le.s32.totalorder 2, %s18
      // Predicated region
      $region61: #{tpu_custom_call.1} parent=5 // pred_check
        %p5232 = pneg %p5231
      $region62: #{tpu_custom_call.1} parent=5 // pred_check_branch
        %5234 = sbr.rel (%p5232) target = $region64
      $region63: #{tpu_custom_call.1} parent=5 // pred_region
        %s5235 = ssub.s32 %s18, 2
        // Predicated region
        $region65: #{tpu_custom_call.1} parent=63 // pred_check
          %p5236 = pneg %p204
        $region66: #{tpu_custom_call.1} parent=63 // pred_check_branch
          %5238 = sbr.rel (%p5236) target = $region68
        $region67: #{tpu_custom_call.1} parent=63 // pred_region
          %s5239 = sand.u32 %s189, 1
          %s5240 = scalar_lea.sflag [#allocation4], %s5239
          %s5241 = sand.u32 %s189, 1
          %s5242 = smul.addr %s5241, 16
          %s5243 = scalar_lea.vmem [#allocation7], %s5242
          %5244 = dma.done %s5240, 256
        $region68: #{tpu_custom_call.1} parent=63 // pred_fallthru
          _
      $region64: #{tpu_custom_call.1} parent=5 // pred_fallthru
        _
    $region6: #{tpu_custom_call.1} parent=1 // loop_footer
      %s22 = sadd.s32 1, %s18
    $region7: #{tpu_custom_call.1} parent=1 // loop_footer_branch
      %17 = sbr.rel target = $region3
    $region8: #{tpu_custom_call.1} parent=1 // loop_exit
      _
    %5245 = vsyncpa [#allocation3], 1
    %s5246 = scalar_lea.sflag [#allocation3], 1
    %5247 = vsyncpa %s5246, 1
    %5248 = vsyncpa [#allocation6], 1
    %5249 = vsyncpa [#allocation4], 1
    %s5250 = scalar_lea.sflag [#allocation4], 1
    %5251 = vsyncpa %s5250, 1

</llo_original>
